<compile_context>
chip_gen: v7x
topology: tpu7x:2x2x1
jax: 0.10.0
libtpu: 0.0.40
codegen_flags: <defaults>
</compile_context>

<pallas_src>
import math

import jax
import jax.numpy as jnp
from jax import lax
from jax.experimental import pallas as pl
from jax.experimental.pallas import tpu as pltpu


# ----------------------------------------------------------------------------- helpers
def _round_up(x, m):
    return ((x + m - 1) // m) * m


def _vmem_capacity_bytes():
    try:
        info = pltpu.get_tpu_info()
        return int(getattr(info, "vmem_capacity_bytes", 128 << 20))
    except Exception:
        return 64 << 20  # v7x per-TC floor


def _pad_gate_cols(w, H, Hp):
    """(rows, 4H) -> (rows, 4*Hp): each gate's H cols land in its own lane-aligned slot."""
    rows = w.shape[0]
    out = jnp.zeros((rows, 4 * Hp), w.dtype)
    for g in range(4):
        out = out.at[:, g * Hp:g * Hp + H].set(w[:, g * H:(g + 1) * H])
    return out


def _lstm_block_bytes(T, Tc, Bblk, InP, Hp):
    """Approximate resident VMEM bytes for one grid step (double-buffered blocks)."""
    bf, f4 = 2, 4
    by = 0
    by += 2 * T * Bblk * InP * bf                                   # x block
    by += 2 * 2 * Bblk * Hp * f4                                    # h0 + c0 blocks
    by += 2 * (InP * 4 * Hp * bf + Hp * 4 * Hp * bf + 4 * Hp * f4)  # one layer's weights
    by += 2 * T * Bblk * Hp * bf                                    # hseq out (layer carry)
    by += 2 * 2 * Bblk * Hp * f4                                    # hn + cn out
    by += Tc * Bblk * 4 * Hp * bf                                   # gates scratch (bf16)
    return by


# ----------------------------------------------------------------------------- LSTM kernel
def make_lstm_kernel(T, Tc, n_full, rem, Hp, InP, unroll):
    """One layer of the LSTM per grid step (grid = (batch_blocks, layers)).

    refs: x, h0, c0, w_ih, w_hh, b  |  hseq, hn, cn  |  gates (scratch).
    hseq's out_spec returns the same block across the layer axis, so it stays
    resident in VMEM and serves as the inter-layer carry.
    """

    def kernel(x_ref, h0_ref, c0_ref, wih_ref, whh_ref, b_ref,
               hseq_ref, hn_ref, cn_ref, gates_ref):
        layer = pl.program_id(1)
        Bblk = x_ref.shape[1]
        w_hh = whh_ref[0]                  # (Hp, 4*Hp) bf16
        bias = b_ref[0]                    # (1, 4*Hp) f32 (= b_ih + b_hh)

        def run_layer(in_ref, in_w):
            w_ih = wih_ref[0][:in_w, :]    # (in_w, 4*Hp) bf16

            def project(t0, tc):
                # Time-chunked whole-sequence input projection: one large-M MXU
                # matmul per chunk into the bf16 gates scratch.
                inp = in_ref[pl.ds(t0, tc)]                               # (tc, Bblk, in_w)
                xg = jnp.dot(inp.reshape(tc * Bblk, in_w), w_ih,
                             preferred_element_type=jnp.float32) + bias
                gates_ref[pl.ds(0, tc)] = xg.reshape(
                    tc, Bblk, 4 * Hp).astype(gates_ref.dtype)

            def recur(t0, tc, carry):
                def step(tt, hc):
                    h, c = hc                                              # f32 (Bblk, Hp)
                    g = gates_ref[tt].astype(jnp.float32) + jnp.dot(
                        h.astype(w_hh.dtype), w_hh,
                        preferred_element_type=jnp.float32)
                    # PyTorch gate order i, f, g, o; each slice is 128-lane aligned.
                    i_g = jax.nn.sigmoid(g[:, 0:Hp])
                    f_g = jax.nn.sigmoid(g[:, Hp:2 * Hp])
                    g_g = jnp.tanh(g[:, 2 * Hp:3 * Hp])
                    o_g = jax.nn.sigmoid(g[:, 3 * Hp:4 * Hp])
                    c_new = f_g * c + i_g * g_g
                    h_new = o_g * jnp.tanh(c_new)
                    hseq_ref[t0 + tt] = h_new.astype(hseq_ref.dtype)
                    return (h_new, c_new)

                return lax.fori_loop(0, tc, step, carry, unroll=unroll)

            def chunk_body(ci, carry):
                t0 = ci * Tc
                if Tc % 8 == 0:
                    t0 = pl.multiple_of(t0, Tc)
                project(t0, Tc)
                return recur(t0, Tc, carry)

            carry = (h0_ref[0], c0_ref[0])
            carry = lax.fori_loop(0, n_full, chunk_body, carry)
            if rem:
                t0r = n_full * Tc
                project(t0r, rem)
                carry = recur(t0r, rem, carry)
            hT, cT = carry
            hn_ref[0] = hT
            cn_ref[0] = cT

        @pl.when(layer == 0)
        def _():
            run_layer(x_ref, InP)          # layer 0 reads the (zero-padded) input

        @pl.when(layer > 0)
        def _():
            run_layer(hseq_ref, Hp)        # deeper layers read the resident hseq carry

    return kernel


# ----------------------------------------------------------------------------- FC kernel
def fc_kernel(a_ref, w_ref, b_ref, o_ref):
    o_ref[...] = (jnp.dot(a_ref[...], w_ref[...],
                          preferred_element_type=jnp.float32)
                  + b_ref[...]).astype(o_ref.dtype)


def _fc_matmul(a2d, w, b, vmem_cap):
    """(M, K) bf16 @ (K, N) bf16 + (1, N) f32 -> (M, N) f32, tiled, lane-dense output."""
    M, K = a2d.shape
    N = w.shape[1]
    tn = next((d for d in (1024, 512, 256, 128) if N % d == 0), N)
    budget = int(vmem_cap * 0.8)
    tm = 8
    for d in (2048, 1024, 512, 256, 128, 64, 32, 16, 8):
        if M % d == 0:
            tile_bytes = 2 * (d * K + K * tn) * 2 + 2 * d * tn * 4
            if tile_bytes <= budget:
                tm = d
                break
    tile_bytes = 2 * (tm * K + K * tn) * 2 + 2 * tm * tn * 4
    vmem_limit = min(int(vmem_cap * 0.9), max(32 << 20, 2 * tile_bytes))
    grid = (M // tm, N // tn)
    return pl.pallas_call(
        fc_kernel,
        out_shape=jax.ShapeDtypeStruct((M, N), jnp.float32),
        grid_spec=pltpu.PrefetchScalarGridSpec(
            num_scalar_prefetch=0, grid=grid,
            in_specs=[pl.BlockSpec((tm, K), lambda i, j: (i, 0)),
                      pl.BlockSpec((K, tn), lambda i, j: (0, j)),
                      pl.BlockSpec((1, tn), lambda i, j: (0, j))],
            out_specs=pl.BlockSpec((tm, tn), lambda i, j: (i, j))),
        compiler_params=pltpu.CompilerParams(
            dimension_semantics=("parallel", "parallel"),
            vmem_limit_bytes=vmem_limit),
    )(a2d, w, b)


# ----------------------------------------------------------------------------- wrapper
def mamba_model_forward(x, hidden, params):
    """Pallas equivalent of MambaModel.forward(x, hidden).

    x: (B, T, V) f32; hidden = (h0, c0), each (L, B, H) f32.
    params: {'lstm': [(w_ih(4H,in), w_hh(4H,H), b_ih(4H,), b_hh(4H,)) ...],
             'fc': (w_fc(V,H), b_fc(V,))}   (PyTorch conventions).
    Returns (out (B, T, V), (hn, cn)).
    """
    h0, c0 = hidden
    B, T, V = x.shape
    L, _, H = h0.shape

    Hp = _round_up(H, 128)        # lane-aligned gate slots
    Vp = _round_up(V, 128)        # lane-dense FC output
    InP = max(Vp, Hp)             # common input-feature width for all layers
    Bp = _round_up(B, 16)         # bf16 packs 16 sublanes/vreg -> unmasked stores

    # Time-chunk plan for the per-layer input projection.
    Tc = min(T, 64)
    n_full, rem = T // Tc, T % Tc
    unroll = max(1, min(8, Tc))   # cap unroll (64 vregs; LLO ILP saturates by ~8)

    cap = _vmem_capacity_bytes()
    budget = int(cap * 0.80)      # 20% headroom for Mosaic internal scratch

    # Batch blocking: keep the full batch resident (nb=1) unless VMEM forces a
    # split; the grid is a serial loop on one TC and splitting shrinks the MXU
    # M-dim of every recurrence matmul.
    cands = [d for d in range(Bp, 15, -16) if Bp % d == 0] or [Bp]
    Bblk = cands[-1]
    for d in cands:
        if _lstm_block_bytes(T, Tc, d, InP, Hp) <= budget:
            Bblk = d
            break
    nb = Bp // Bblk

    # ---- wrapper-side layout plumbing (plain XLA) ----
    # NOTE: padded rows/cols/lanes MUST stay zero (weights, biases, h0/c0, x);
    # correctness of the padded lanes relies on it.
    x_tm = jnp.swapaxes(x, 0, 1)                                       # (T, B, V)
    x_p = jnp.zeros((T, Bp, InP), jnp.bfloat16).at[:, :B, :V].set(
        x_tm.astype(jnp.bfloat16))
    h0_p = jnp.zeros((L, Bp, Hp), jnp.float32).at[:, :B, :H].set(
        h0.astype(jnp.float32))
    c0_p = jnp.zeros((L, Bp, Hp), jnp.float32).at[:, :B, :H].set(
        c0.astype(jnp.float32))

    w_ih_l, w_hh_l, b_l = [], [], []
    for (w_ih, w_hh, b_ih, b_hh) in params['lstm']:
        in_dim = w_ih.shape[1]
        wi = jnp.zeros((InP, 4 * Hp), jnp.float32).at[:in_dim].set(
            _pad_gate_cols(w_ih.T.astype(jnp.float32), H, Hp))
        wh = jnp.zeros((Hp, 4 * Hp), jnp.float32).at[:H].set(
            _pad_gate_cols(w_hh.T.astype(jnp.float32), H, Hp))
        bb = _pad_gate_cols((b_ih + b_hh)[None, :].astype(jnp.float32), H, Hp)
        w_ih_l.append(wi.astype(jnp.bfloat16))
        w_hh_l.append(wh.astype(jnp.bfloat16))
        b_l.append(bb)
    w_ih_all = jnp.stack(w_ih_l)                                       # (L, InP, 4Hp) bf16
    w_hh_all = jnp.stack(w_hh_l)                                       # (L, Hp,  4Hp) bf16
    b_all = jnp.stack(b_l)                                             # (L, 1,   4Hp) f32

    w_fc, b_fc = params['fc']
    w_fc_p = jnp.zeros((Hp, Vp), jnp.float32).at[:H, :V].set(
        w_fc.T.astype(jnp.float32)).astype(jnp.bfloat16)
    b_fc_p = jnp.zeros((1, Vp), jnp.float32).at[0, :V].set(b_fc)

    blk = _lstm_block_bytes(T, Tc, Bblk, InP, Hp)
    vmem_limit = min(int(cap * 0.9), max(32 << 20, int(blk * 1.3) + (4 << 20)))

    # ---- LSTM pallas_call: grid over (batch blocks, layers) ----
    hseq, hn_p, cn_p = pl.pallas_call(
        make_lstm_kernel(T, Tc, n_full, rem, Hp, InP, unroll),
        out_shape=(jax.ShapeDtypeStruct((T, Bp, Hp), jnp.bfloat16),
                   jax.ShapeDtypeStruct((L, Bp, Hp), jnp.float32),
                   jax.ShapeDtypeStruct((L, Bp, Hp), jnp.float32)),
        grid_spec=pltpu.PrefetchScalarGridSpec(
            num_scalar_prefetch=0, grid=(nb, L),
            in_specs=[
                pl.BlockSpec((T, Bblk, InP), lambda b, l: (0, b, 0)),
                pl.BlockSpec((1, Bblk, Hp), lambda b, l: (l, b, 0)),
                pl.BlockSpec((1, Bblk, Hp), lambda b, l: (l, b, 0)),
                pl.BlockSpec((1, InP, 4 * Hp), lambda b, l: (l, 0, 0)),
                pl.BlockSpec((1, Hp, 4 * Hp), lambda b, l: (l, 0, 0)),
                pl.BlockSpec((1, 1, 4 * Hp), lambda b, l: (l, 0, 0)),
            ],
            out_specs=(
                pl.BlockSpec((T, Bblk, Hp), lambda b, l: (0, b, 0)),  # layer carry
                pl.BlockSpec((1, Bblk, Hp), lambda b, l: (l, b, 0)),
                pl.BlockSpec((1, Bblk, Hp), lambda b, l: (l, b, 0)),
            ),
            scratch_shapes=[pltpu.VMEM((Tc, Bblk, 4 * Hp), jnp.bfloat16)]),
        compiler_params=pltpu.CompilerParams(
            dimension_semantics=("parallel", "arbitrary"),
            vmem_limit_bytes=vmem_limit),
    )(x_p, h0_p, c0_p, w_ih_all, w_hh_all, b_all)

    # ---- final Linear as a separate tiled, lane-dense matmul ----
    logits2d = _fc_matmul(hseq.reshape(T * Bp, Hp), w_fc_p, b_fc_p, cap)  # (T*Bp, Vp) f32

    out = jnp.swapaxes(logits2d.reshape(T, Bp, Vp)[:, :B, :V], 0, 1)      # (B, T, V)
    hn = hn_p[:, :B, :H]
    cn = cn_p[:, :B, :H]
    return out, (hn, cn)


# ----------------------------------------------------------------------------- reference
def reference_forward(x, hidden, params):
    """Pure-JAX f32 reference of PyTorch LSTM(batch_first=True) + Linear."""
    h0, c0 = hidden
    L, _, H = h0.shape
    inp = x
    hs, cs = [], []
    for l in range(L):
        w_ih, w_hh, b_ih, b_hh = params['lstm'][l]

        def step(carry, xt, w_ih=w_ih, w_hh=w_hh, b_ih=b_ih, b_hh=b_hh):
            h, c = carry
            gates = xt @ w_ih.T + h @ w_hh.T + b_ih + b_hh
            i = jax.nn.sigmoid(gates[:, 0:H])
            f = jax.nn.sigmoid(gates[:, H:2 * H])
            g = jnp.tanh(gates[:, 2 * H:3 * H])
            o = jax.nn.sigmoid(gates[:, 3 * H:4 * H])
            c = f * c + i * g
            h = o * jnp.tanh(c)
            return (h, c), h

        (hT, cT), seq = lax.scan(step, (h0[l], c0[l]), jnp.swapaxes(inp, 0, 1))
        inp = jnp.swapaxes(seq, 0, 1)
        hs.append(hT)
        cs.append(cT)
    w_fc, b_fc = params['fc']
    out = inp @ w_fc.T + b_fc
    return out, (jnp.stack(hs), jnp.stack(cs))


def init_params(key, vocab_size, hidden_size, num_layers):
    """Deterministic PyTorch-style init, PyTorch weight conventions."""
    k = 1.0 / math.sqrt(hidden_size)
    lstm = []
    for l in range(num_layers):
        in_size = vocab_size if l == 0 else hidden_size
        key, k1, k2, k3, k4 = jax.random.split(key, 5)
        lstm.append((
            jax.random.uniform(k1, (4 * hidden_size, in_size), jnp.float32, -k, k),
            jax.random.uniform(k2, (4 * hidden_size, hidden_size), jnp.float32, -k, k),
            jax.random.uniform(k3, (4 * hidden_size,), jnp.float32, -k, k),
            jax.random.uniform(k4, (4 * hidden_size,), jnp.float32, -k, k),
        ))
    key, k1, k2 = jax.random.split(key, 3)
    fc = (jax.random.uniform(k1, (vocab_size, hidden_size), jnp.float32, -k, k),
          jax.random.uniform(k2, (vocab_size,), jnp.float32, -k, k))
    return key, {'lstm': lstm, 'fc': fc}


if __name__ == "__main__":
    vocab_size, hidden_size, num_layers = 32, 32, 2
    B, T = 2, 8

    key = jax.random.PRNGKey(0)
    key, params = init_params(key, vocab_size, hidden_size, num_layers)

    key, kx, kh, kc = jax.random.split(key, 4)
    x = jax.random.normal(kx, (B, T, vocab_size), jnp.float32)
    h0 = jax.random.normal(kh, (num_layers, B, hidden_size), jnp.float32)
    c0 = jax.random.normal(kc, (num_layers, B, hidden_size), jnp.float32)

    fwd = jax.jit(mamba_model_forward)
    out, (hn, cn) = fwd(x, (h0, c0), params)
    jax.block_until_ready((out, hn, cn))

    ref_out, (ref_hn, ref_cn) = reference_forward(x, (h0, c0), params)
    assert out.shape == (B, T, vocab_size)
    assert hn.shape == (num_layers, B, hidden_size)
    assert cn.shape == (num_layers, B, hidden_size)
    # bf16 weights/activations/gates in the MXU path -> looser tolerance vs f32 ref.
    assert jnp.allclose(out, ref_out, rtol=3e-2, atol=3e-2)
    assert jnp.allclose(hn, ref_hn, rtol=3e-2, atol=3e-2)
    assert jnp.allclose(cn, ref_cn, rtol=3e-2, atol=3e-2)

    print("KERNEL_OK")
</pallas_src>

<mosaic_0001>
module attributes {stable_mosaic.version = 11 : i64} {
  func.func @kernel(%arg0: i32, %arg1: i32, %arg2: memref<8x16x128xbf16, #tpu.memory_space<vmem>>, %arg3: memref<1x16x128xf32, #tpu.memory_space<vmem>>, %arg4: memref<1x16x128xf32, #tpu.memory_space<vmem>>, %arg5: memref<1x128x512xbf16, #tpu.memory_space<vmem>>, %arg6: memref<1x128x512xbf16, #tpu.memory_space<vmem>>, %arg7: memref<1x1x512xf32, #tpu.memory_space<vmem>>, %arg8: memref<8x16x128xbf16, #tpu.memory_space<vmem>>, %arg9: memref<1x16x128xf32, #tpu.memory_space<vmem>>, %arg10: memref<1x16x128xf32, #tpu.memory_space<vmem>>, %arg11: memref<8x16x512xbf16, #tpu.memory_space<vmem>>) attributes {dimension_semantics = [#tpu.dimension_semantics<parallel>, #tpu.dimension_semantics<arbitrary>], iteration_bounds = array<i64: 1, 2>, scalar_prefetch = 0 : i64, scratch_operands = 1 : i64, tpu.core_type = #tpu.core_type<tc>, window_params = [{transform_indices = @transform_0, window_bounds = array<i64: 8, 16, 128>}, {transform_indices = @transform_1, window_bounds = array<i64: 1, 16, 128>}, {transform_indices = @transform_2, window_bounds = array<i64: 1, 16, 128>}, {transform_indices = @transform_3, window_bounds = array<i64: 1, 128, 512>}, {transform_indices = @transform_4, window_bounds = array<i64: 1, 128, 512>}, {transform_indices = @transform_5, window_bounds = array<i64: 1, 1, 512>}, {transform_indices = @transform_6, window_bounds = array<i64: 8, 16, 128>}, {transform_indices = @transform_7, window_bounds = array<i64: 1, 16, 128>}, {transform_indices = @transform_8, window_bounds = array<i64: 1, 16, 128>}]} {
    %c0 = arith.constant 0 : index
    %c0_0 = arith.constant 0 : index
    %c0_1 = arith.constant 0 : index
    %0 = vector.load %arg6[%c0, %c0_0, %c0_1] : memref<1x128x512xbf16, #tpu.memory_space<vmem>>, vector<1x128x512xbf16>
    %1 = vector.shape_cast %0 : vector<1x128x512xbf16> to vector<128x512xbf16>
    %c0_2 = arith.constant 0 : index
    %c0_3 = arith.constant 0 : index
    %c0_4 = arith.constant 0 : index
    %2 = vector.load %arg7[%c0_2, %c0_3, %c0_4] : memref<1x1x512xf32, #tpu.memory_space<vmem>>, vector<1x1x512xf32>
    %3 = vector.shape_cast %2 : vector<1x1x512xf32> to vector<1x512xf32>
    %c0_i32 = arith.constant 0 : i32
    %4 = arith.cmpi eq, %arg1, %c0_i32 : i32
    %5 = arith.extui %4 : i1 to i32
    %c0_i32_5 = arith.constant 0 : i32
    %6 = arith.cmpi ne, %5, %c0_i32_5 : i32
    scf.if %6 {
      %c0_8 = arith.constant 0 : index
      %c0_9 = arith.constant 0 : index
      %c0_10 = arith.constant 0 : index
      %10 = vector.load %arg5[%c0_8, %c0_9, %c0_10] : memref<1x128x512xbf16, #tpu.memory_space<vmem>>, vector<1x128x512xbf16>
      %11 = vector.shape_cast %10 : vector<1x128x512xbf16> to vector<128x512xbf16>
      %c0_11 = arith.constant 0 : index
      %c0_12 = arith.constant 0 : index
      %c0_13 = arith.constant 0 : index
      %12 = vector.load %arg3[%c0_11, %c0_12, %c0_13] : memref<1x16x128xf32, #tpu.memory_space<vmem>>, vector<1x16x128xf32>
      %13 = vector.shape_cast %12 : vector<1x16x128xf32> to vector<16x128xf32>
      %c0_14 = arith.constant 0 : index
      %c0_15 = arith.constant 0 : index
      %c0_16 = arith.constant 0 : index
      %14 = vector.load %arg4[%c0_14, %c0_15, %c0_16] : memref<1x16x128xf32, #tpu.memory_space<vmem>>, vector<1x16x128xf32>
      %15 = vector.shape_cast %14 : vector<1x16x128xf32> to vector<16x128xf32>
      %c0_i32_17 = arith.constant 0 : i32
      %c8_i32 = arith.constant 8 : i32
      %16 = arith.muli %c0_i32_17, %c8_i32 : i32
      %17 = tpu.assume_multiple %16, 8 : i32
      %18 = arith.index_cast %17 : i32 to index
      %c0_18 = arith.constant 0 : index
      %c0_19 = arith.constant 0 : index
      %19 = vector.load %arg2[%18, %c0_18, %c0_19] : memref<8x16x128xbf16, #tpu.memory_space<vmem>>, vector<8x16x128xbf16>
      %20 = vector.shape_cast %19 : vector<8x16x128xbf16> to vector<128x128xbf16>
      %cst = arith.constant dense<0.000000e+00> : vector<128x512xf32>
      %21 = tpu.matmul %20, %11, %cst {dimension_numbers = #tpu.dot_dimension_numbers<[1], [0], [0], [1], [0, 0, 1, 1], [], []>} : vector<128x128xbf16>, vector<128x512xbf16>, vector<128x512xf32> -> vector<128x512xf32>
      %22 = vector.broadcast %3 : vector<1x512xf32> to vector<128x512xf32>
      %23 = arith.addf %21, %22 : vector<128x512xf32>
      %24 = vector.shape_cast %23 : vector<128x512xf32> to vector<8x16x512xf32>
      %25 = arith.truncf %24 : vector<8x16x512xf32> to vector<8x16x512xbf16>
      %c0_20 = arith.constant 0 : index
      %c0_21 = arith.constant 0 : index
      %c0_22 = arith.constant 0 : index
      %26 = vector.load %arg11[%c0_20, %c0_21, %c0_22] : memref<8x16x512xbf16, #tpu.memory_space<vmem>>, vector<8x16x512xbf16>
      tpu.vector_store %arg11[%c0_20, %c0_21, %c0_22], %25 {strides = array<i32>} : memref<8x16x512xbf16, #tpu.memory_space<vmem>>, vector<8x16x512xbf16>,
      %c0_i32_23 = arith.constant 0 : i32
      %27 = arith.index_cast %c0_i32_23 : i32 to index
      %c0_24 = arith.constant 0 : index
      %c0_25 = arith.constant 0 : index
      %28 = vector.load %arg11[%27, %c0_24, %c0_25] : memref<8x16x512xbf16, #tpu.memory_space<vmem>>, vector<1x16x512xbf16>
      %29 = vector.shape_cast %28 : vector<1x16x512xbf16> to vector<16x512xbf16>
      %30 = arith.extf %29 : vector<16x512xbf16> to vector<16x512xf32>
      %31 = arith.truncf %13 : vector<16x128xf32> to vector<16x128xbf16>
      %cst_26 = arith.constant dense<0.000000e+00> : vector<16x512xf32>
      %32 = tpu.matmul %31, %1, %cst_26 {dimension_numbers = #tpu.dot_dimension_numbers<[1], [0], [0], [1], [0, 0, 1, 1], [], []>} : vector<16x128xbf16>, vector<128x512xbf16>, vector<16x512xf32> -> vector<16x512xf32>
      %33 = arith.addf %30, %32 : vector<16x512xf32>
      %34 = vector.extract_strided_slice %33 {offsets = [0, 0], sizes = [16, 128], strides = [1, 1]} : vector<16x512xf32> to vector<16x128xf32>
      %35 = arith.negf %34 : vector<16x128xf32>
      %36 = math.exp %35 : vector<16x128xf32>
      %cst_27 = arith.constant 1.000000e+00 : f32
      %37 = vector.broadcast %cst_27 : f32 to vector<16x128xf32>
      %38 = arith.addf %37, %36 : vector<16x128xf32>
      %39 = arith.divf %37, %38 : vector<16x128xf32>
      %40 = vector.extract_strided_slice %33 {offsets = [0, 128], sizes = [16, 128], strides = [1, 1]} : vector<16x512xf32> to vector<16x128xf32>
      %41 = arith.negf %40 : vector<16x128xf32>
      %42 = math.exp %41 : vector<16x128xf32>
      %cst_28 = arith.constant 1.000000e+00 : f32
      %43 = vector.broadcast %cst_28 : f32 to vector<16x128xf32>
      %44 = arith.addf %43, %42 : vector<16x128xf32>
      %45 = arith.divf %43, %44 : vector<16x128xf32>
      %46 = vector.extract_strided_slice %33 {offsets = [0, 256], sizes = [16, 128], strides = [1, 1]} : vector<16x512xf32> to vector<16x128xf32>
      %47 = math.tanh %46 : vector<16x128xf32>
      %48 = vector.extract_strided_slice %33 {offsets = [0, 384], sizes = [16, 128], strides = [1, 1]} : vector<16x512xf32> to vector<16x128xf32>
      %49 = arith.negf %48 : vector<16x128xf32>
      %50 = math.exp %49 : vector<16x128xf32>
      %cst_29 = arith.constant 1.000000e+00 : f32
      %51 = vector.broadcast %cst_29 : f32 to vector<16x128xf32>
      %52 = arith.addf %51, %50 : vector<16x128xf32>
      %53 = arith.divf %51, %52 : vector<16x128xf32>
      %54 = arith.mulf %45, %15 : vector<16x128xf32>
      %55 = arith.mulf %39, %47 : vector<16x128xf32>
      %56 = arith.addf %54, %55 : vector<16x128xf32>
      %57 = math.tanh %56 : vector<16x128xf32>
      %58 = arith.mulf %53, %57 : vector<16x128xf32>
      %59 = arith.truncf %58 : vector<16x128xf32> to vector<16x128xbf16>
      %60 = arith.addi %17, %c0_i32_23 : i32
      %61 = arith.index_cast %60 : i32 to index
      %c0_30 = arith.constant 0 : index
      %c0_31 = arith.constant 0 : index
      %62 = vector.load %arg8[%61, %c0_30, %c0_31] : memref<8x16x128xbf16, #tpu.memory_space<vmem>>, vector<1x16x128xbf16>
      %63 = vector.shape_cast %62 : vector<1x16x128xbf16> to vector<16x128xbf16>
      %64 = vector.shape_cast %59 : vector<16x128xbf16> to vector<1x16x128xbf16>
      tpu.vector_store %arg8[%61, %c0_30, %c0_31], %64 {strides = array<i32>} : memref<8x16x128xbf16, #tpu.memory_space<vmem>>, vector<1x16x128xbf16>,
      %c1_i32 = arith.constant 1 : i32
      %65 = arith.index_cast %c1_i32 : i32 to index
      %c0_32 = arith.constant 0 : index
      %c0_33 = arith.constant 0 : index
      %66 = vector.load %arg11[%65, %c0_32, %c0_33] : memref<8x16x512xbf16, #tpu.memory_space<vmem>>, vector<1x16x512xbf16>
      %67 = vector.shape_cast %66 : vector<1x16x512xbf16> to vector<16x512xbf16>
      %68 = arith.extf %67 : vector<16x512xbf16> to vector<16x512xf32>
      %69 = arith.truncf %58 : vector<16x128xf32> to vector<16x128xbf16>
      %cst_34 = arith.constant dense<0.000000e+00> : vector<16x512xf32>
      %70 = tpu.matmul %69, %1, %cst_34 {dimension_numbers = #tpu.dot_dimension_numbers<[1], [0], [0], [1], [0, 0, 1, 1], [], []>} : vector<16x128xbf16>, vector<128x512xbf16>, vector<16x512xf32> -> vector<16x512xf32>
      %71 = arith.addf %68, %70 : vector<16x512xf32>
      %72 = vector.extract_strided_slice %71 {offsets = [0, 0], sizes = [16, 128], strides = [1, 1]} : vector<16x512xf32> to vector<16x128xf32>
      %73 = arith.negf %72 : vector<16x128xf32>
      %74 = math.exp %73 : vector<16x128xf32>
      %cst_35 = arith.constant 1.000000e+00 : f32
      %75 = vector.broadcast %cst_35 : f32 to vector<16x128xf32>
      %76 = arith.addf %75, %74 : vector<16x128xf32>
      %77 = arith.divf %75, %76 : vector<16x128xf32>
      %78 = vector.extract_strided_slice %71 {offsets = [0, 128], sizes = [16, 128], strides = [1, 1]} : vector<16x512xf32> to vector<16x128xf32>
      %79 = arith.negf %78 : vector<16x128xf32>
      %80 = math.exp %79 : vector<16x128xf32>
      %cst_36 = arith.constant 1.000000e+00 : f32
      %81 = vector.broadcast %cst_36 : f32 to vector<16x128xf32>
      %82 = arith.addf %81, %80 : vector<16x128xf32>
      %83 = arith.divf %81, %82 : vector<16x128xf32>
      %84 = vector.extract_strided_slice %71 {offsets = [0, 256], sizes = [16, 128], strides = [1, 1]} : vector<16x512xf32> to vector<16x128xf32>
      %85 = math.tanh %84 : vector<16x128xf32>
      %86 = vector.extract_strided_slice %71 {offsets = [0, 384], sizes = [16, 128], strides = [1, 1]} : vector<16x512xf32> to vector<16x128xf32>
      %87 = arith.negf %86 : vector<16x128xf32>
      %88 = math.exp %87 : vector<16x128xf32>
      %cst_37 = arith.constant 1.000000e+00 : f32
      %89 = vector.broadcast %cst_37 : f32 to vector<16x128xf32>
      %90 = arith.addf %89, %88 : vector<16x128xf32>
      %91 = arith.divf %89, %90 : vector<16x128xf32>
      %92 = arith.mulf %83, %56 : vector<16x128xf32>
      %93 = arith.mulf %77, %85 : vector<16x128xf32>
      %94 = arith.addf %92, %93 : vector<16x128xf32>
      %95 = math.tanh %94 : vector<16x128xf32>
      %96 = arith.mulf %91, %95 : vector<16x128xf32>
      %97 = arith.truncf %96 : vector<16x128xf32> to vector<16x128xbf16>
      %98 = arith.addi %17, %c1_i32 : i32
      %99 = arith.index_cast %98 : i32 to index
      %c0_38 = arith.constant 0 : index
      %c0_39 = arith.constant 0 : index
      %100 = vector.load %arg8[%99, %c0_38, %c0_39] : memref<8x16x128xbf16, #tpu.memory_space<vmem>>, vector<1x16x128xbf16>
      %101 = vector.shape_cast %100 : vector<1x16x128xbf16> to vector<16x128xbf16>
      %102 = vector.shape_cast %97 : vector<16x128xbf16> to vector<1x16x128xbf16>
      tpu.vector_store %arg8[%99, %c0_38, %c0_39], %102 {strides = array<i32>} : memref<8x16x128xbf16, #tpu.memory_space<vmem>>, vector<1x16x128xbf16>,
      %c2_i32 = arith.constant 2 : i32
      %103 = arith.index_cast %c2_i32 : i32 to index
      %c0_40 = arith.constant 0 : index
      %c0_41 = arith.constant 0 : index
      %104 = vector.load %arg11[%103, %c0_40, %c0_41] : memref<8x16x512xbf16, #tpu.memory_space<vmem>>, vector<1x16x512xbf16>
      %105 = vector.shape_cast %104 : vector<1x16x512xbf16> to vector<16x512xbf16>
      %106 = arith.extf %105 : vector<16x512xbf16> to vector<16x512xf32>
      %107 = arith.truncf %96 : vector<16x128xf32> to vector<16x128xbf16>
      %cst_42 = arith.constant dense<0.000000e+00> : vector<16x512xf32>
      %108 = tpu.matmul %107, %1, %cst_42 {dimension_numbers = #tpu.dot_dimension_numbers<[1], [0], [0], [1], [0, 0, 1, 1], [], []>} : vector<16x128xbf16>, vector<128x512xbf16>, vector<16x512xf32> -> vector<16x512xf32>
      %109 = arith.addf %106, %108 : vector<16x512xf32>
      %110 = vector.extract_strided_slice %109 {offsets = [0, 0], sizes = [16, 128], strides = [1, 1]} : vector<16x512xf32> to vector<16x128xf32>
      %111 = arith.negf %110 : vector<16x128xf32>
      %112 = math.exp %111 : vector<16x128xf32>
      %cst_43 = arith.constant 1.000000e+00 : f32
      %113 = vector.broadcast %cst_43 : f32 to vector<16x128xf32>
      %114 = arith.addf %113, %112 : vector<16x128xf32>
      %115 = arith.divf %113, %114 : vector<16x128xf32>
      %116 = vector.extract_strided_slice %109 {offsets = [0, 128], sizes = [16, 128], strides = [1, 1]} : vector<16x512xf32> to vector<16x128xf32>
      %117 = arith.negf %116 : vector<16x128xf32>
      %118 = math.exp %117 : vector<16x128xf32>
      %cst_44 = arith.constant 1.000000e+00 : f32
      %119 = vector.broadcast %cst_44 : f32 to vector<16x128xf32>
      %120 = arith.addf %119, %118 : vector<16x128xf32>
      %121 = arith.divf %119, %120 : vector<16x128xf32>
      %122 = vector.extract_strided_slice %109 {offsets = [0, 256], sizes = [16, 128], strides = [1, 1]} : vector<16x512xf32> to vector<16x128xf32>
      %123 = math.tanh %122 : vector<16x128xf32>
      %124 = vector.extract_strided_slice %109 {offsets = [0, 384], sizes = [16, 128], strides = [1, 1]} : vector<16x512xf32> to vector<16x128xf32>
      %125 = arith.negf %124 : vector<16x128xf32>
      %126 = math.exp %125 : vector<16x128xf32>
      %cst_45 = arith.constant 1.000000e+00 : f32
      %127 = vector.broadcast %cst_45 : f32 to vector<16x128xf32>
      %128 = arith.addf %127, %126 : vector<16x128xf32>
      %129 = arith.divf %127, %128 : vector<16x128xf32>
      %130 = arith.mulf %121, %94 : vector<16x128xf32>
      %131 = arith.mulf %115, %123 : vector<16x128xf32>
      %132 = arith.addf %130, %131 : vector<16x128xf32>
      %133 = math.tanh %132 : vector<16x128xf32>
      %134 = arith.mulf %129, %133 : vector<16x128xf32>
      %135 = arith.truncf %134 : vector<16x128xf32> to vector<16x128xbf16>
      %136 = arith.addi %17, %c2_i32 : i32
      %137 = arith.index_cast %136 : i32 to index
      %c0_46 = arith.constant 0 : index
      %c0_47 = arith.constant 0 : index
      %138 = vector.load %arg8[%137, %c0_46, %c0_47] : memref<8x16x128xbf16, #tpu.memory_space<vmem>>, vector<1x16x128xbf16>
      %139 = vector.shape_cast %138 : vector<1x16x128xbf16> to vector<16x128xbf16>
      %140 = vector.shape_cast %135 : vector<16x128xbf16> to vector<1x16x128xbf16>
      tpu.vector_store %arg8[%137, %c0_46, %c0_47], %140 {strides = array<i32>} : memref<8x16x128xbf16, #tpu.memory_space<vmem>>, vector<1x16x128xbf16>,
      %c3_i32 = arith.constant 3 : i32
      %141 = arith.index_cast %c3_i32 : i32 to index
      %c0_48 = arith.constant 0 : index
      %c0_49 = arith.constant 0 : index
      %142 = vector.load %arg11[%141, %c0_48, %c0_49] : memref<8x16x512xbf16, #tpu.memory_space<vmem>>, vector<1x16x512xbf16>
      %143 = vector.shape_cast %142 : vector<1x16x512xbf16> to vector<16x512xbf16>
      %144 = arith.extf %143 : vector<16x512xbf16> to vector<16x512xf32>
      %145 = arith.truncf %134 : vector<16x128xf32> to vector<16x128xbf16>
      %cst_50 = arith.constant dense<0.000000e+00> : vector<16x512xf32>
      %146 = tpu.matmul %145, %1, %cst_50 {dimension_numbers = #tpu.dot_dimension_numbers<[1], [0], [0], [1], [0, 0, 1, 1], [], []>} : vector<16x128xbf16>, vector<128x512xbf16>, vector<16x512xf32> -> vector<16x512xf32>
      %147 = arith.addf %144, %146 : vector<16x512xf32>
      %148 = vector.extract_strided_slice %147 {offsets = [0, 0], sizes = [16, 128], strides = [1, 1]} : vector<16x512xf32> to vector<16x128xf32>
      %149 = arith.negf %148 : vector<16x128xf32>
      %150 = math.exp %149 : vector<16x128xf32>
      %cst_51 = arith.constant 1.000000e+00 : f32
      %151 = vector.broadcast %cst_51 : f32 to vector<16x128xf32>
      %152 = arith.addf %151, %150 : vector<16x128xf32>
      %153 = arith.divf %151, %152 : vector<16x128xf32>
      %154 = vector.extract_strided_slice %147 {offsets = [0, 128], sizes = [16, 128], strides = [1, 1]} : vector<16x512xf32> to vector<16x128xf32>
      %155 = arith.negf %154 : vector<16x128xf32>
      %156 = math.exp %155 : vector<16x128xf32>
      %cst_52 = arith.constant 1.000000e+00 : f32
      %157 = vector.broadcast %cst_52 : f32 to vector<16x128xf32>
      %158 = arith.addf %157, %156 : vector<16x128xf32>
      %159 = arith.divf %157, %158 : vector<16x128xf32>
      %160 = vector.extract_strided_slice %147 {offsets = [0, 256], sizes = [16, 128], strides = [1, 1]} : vector<16x512xf32> to vector<16x128xf32>
      %161 = math.tanh %160 : vector<16x128xf32>
      %162 = vector.extract_strided_slice %147 {offsets = [0, 384], sizes = [16, 128], strides = [1, 1]} : vector<16x512xf32> to vector<16x128xf32>
      %163 = arith.negf %162 : vector<16x128xf32>
      %164 = math.exp %163 : vector<16x128xf32>
      %cst_53 = arith.constant 1.000000e+00 : f32
      %165 = vector.broadcast %cst_53 : f32 to vector<16x128xf32>
      %166 = arith.addf %165, %164 : vector<16x128xf32>
      %167 = arith.divf %165, %166 : vector<16x128xf32>
      %168 = arith.mulf %159, %132 : vector<16x128xf32>
      %169 = arith.mulf %153, %161 : vector<16x128xf32>
      %170 = arith.addf %168, %169 : vector<16x128xf32>
      %171 = math.tanh %170 : vector<16x128xf32>
      %172 = arith.mulf %167, %171 : vector<16x128xf32>
      %173 = arith.truncf %172 : vector<16x128xf32> to vector<16x128xbf16>
      %174 = arith.addi %17, %c3_i32 : i32
      %175 = arith.index_cast %174 : i32 to index
      %c0_54 = arith.constant 0 : index
      %c0_55 = arith.constant 0 : index
      %176 = vector.load %arg8[%175, %c0_54, %c0_55] : memref<8x16x128xbf16, #tpu.memory_space<vmem>>, vector<1x16x128xbf16>
      %177 = vector.shape_cast %176 : vector<1x16x128xbf16> to vector<16x128xbf16>
      %178 = vector.shape_cast %173 : vector<16x128xbf16> to vector<1x16x128xbf16>
      tpu.vector_store %arg8[%175, %c0_54, %c0_55], %178 {strides = array<i32>} : memref<8x16x128xbf16, #tpu.memory_space<vmem>>, vector<1x16x128xbf16>,
      %c4_i32 = arith.constant 4 : i32
      %179 = arith.index_cast %c4_i32 : i32 to index
      %c0_56 = arith.constant 0 : index
      %c0_57 = arith.constant 0 : index
      %180 = vector.load %arg11[%179, %c0_56, %c0_57] : memref<8x16x512xbf16, #tpu.memory_space<vmem>>, vector<1x16x512xbf16>
      %181 = vector.shape_cast %180 : vector<1x16x512xbf16> to vector<16x512xbf16>
      %182 = arith.extf %181 : vector<16x512xbf16> to vector<16x512xf32>
      %183 = arith.truncf %172 : vector<16x128xf32> to vector<16x128xbf16>
      %cst_58 = arith.constant dense<0.000000e+00> : vector<16x512xf32>
      %184 = tpu.matmul %183, %1, %cst_58 {dimension_numbers = #tpu.dot_dimension_numbers<[1], [0], [0], [1], [0, 0, 1, 1], [], []>} : vector<16x128xbf16>, vector<128x512xbf16>, vector<16x512xf32> -> vector<16x512xf32>
      %185 = arith.addf %182, %184 : vector<16x512xf32>
      %186 = vector.extract_strided_slice %185 {offsets = [0, 0], sizes = [16, 128], strides = [1, 1]} : vector<16x512xf32> to vector<16x128xf32>
      %187 = arith.negf %186 : vector<16x128xf32>
      %188 = math.exp %187 : vector<16x128xf32>
      %cst_59 = arith.constant 1.000000e+00 : f32
      %189 = vector.broadcast %cst_59 : f32 to vector<16x128xf32>
      %190 = arith.addf %189, %188 : vector<16x128xf32>
      %191 = arith.divf %189, %190 : vector<16x128xf32>
      %192 = vector.extract_strided_slice %185 {offsets = [0, 128], sizes = [16, 128], strides = [1, 1]} : vector<16x512xf32> to vector<16x128xf32>
      %193 = arith.negf %192 : vector<16x128xf32>
      %194 = math.exp %193 : vector<16x128xf32>
      %cst_60 = arith.constant 1.000000e+00 : f32
      %195 = vector.broadcast %cst_60 : f32 to vector<16x128xf32>
      %196 = arith.addf %195, %194 : vector<16x128xf32>
      %197 = arith.divf %195, %196 : vector<16x128xf32>
      %198 = vector.extract_strided_slice %185 {offsets = [0, 256], sizes = [16, 128], strides = [1, 1]} : vector<16x512xf32> to vector<16x128xf32>
      %199 = math.tanh %198 : vector<16x128xf32>
      %200 = vector.extract_strided_slice %185 {offsets = [0, 384], sizes = [16, 128], strides = [1, 1]} : vector<16x512xf32> to vector<16x128xf32>
      %201 = arith.negf %200 : vector<16x128xf32>
      %202 = math.exp %201 : vector<16x128xf32>
      %cst_61 = arith.constant 1.000000e+00 : f32
      %203 = vector.broadcast %cst_61 : f32 to vector<16x128xf32>
      %204 = arith.addf %203, %202 : vector<16x128xf32>
      %205 = arith.divf %203, %204 : vector<16x128xf32>
      %206 = arith.mulf %197, %170 : vector<16x128xf32>
      %207 = arith.mulf %191, %199 : vector<16x128xf32>
      %208 = arith.addf %206, %207 : vector<16x128xf32>
      %209 = math.tanh %208 : vector<16x128xf32>
      %210 = arith.mulf %205, %209 : vector<16x128xf32>
      %211 = arith.truncf %210 : vector<16x128xf32> to vector<16x128xbf16>
      %212 = arith.addi %17, %c4_i32 : i32
      %213 = arith.index_cast %212 : i32 to index
      %c0_62 = arith.constant 0 : index
      %c0_63 = arith.constant 0 : index
      %214 = vector.load %arg8[%213, %c0_62, %c0_63] : memref<8x16x128xbf16, #tpu.memory_space<vmem>>, vector<1x16x128xbf16>
      %215 = vector.shape_cast %214 : vector<1x16x128xbf16> to vector<16x128xbf16>
      %216 = vector.shape_cast %211 : vector<16x128xbf16> to vector<1x16x128xbf16>
      tpu.vector_store %arg8[%213, %c0_62, %c0_63], %216 {strides = array<i32>} : memref<8x16x128xbf16, #tpu.memory_space<vmem>>, vector<1x16x128xbf16>,
      %c5_i32 = arith.constant 5 : i32
      %217 = arith.index_cast %c5_i32 : i32 to index
      %c0_64 = arith.constant 0 : index
      %c0_65 = arith.constant 0 : index
      %218 = vector.load %arg11[%217, %c0_64, %c0_65] : memref<8x16x512xbf16, #tpu.memory_space<vmem>>, vector<1x16x512xbf16>
      %219 = vector.shape_cast %218 : vector<1x16x512xbf16> to vector<16x512xbf16>
      %220 = arith.extf %219 : vector<16x512xbf16> to vector<16x512xf32>
      %221 = arith.truncf %210 : vector<16x128xf32> to vector<16x128xbf16>
      %cst_66 = arith.constant dense<0.000000e+00> : vector<16x512xf32>
      %222 = tpu.matmul %221, %1, %cst_66 {dimension_numbers = #tpu.dot_dimension_numbers<[1], [0], [0], [1], [0, 0, 1, 1], [], []>} : vector<16x128xbf16>, vector<128x512xbf16>, vector<16x512xf32> -> vector<16x512xf32>
      %223 = arith.addf %220, %222 : vector<16x512xf32>
      %224 = vector.extract_strided_slice %223 {offsets = [0, 0], sizes = [16, 128], strides = [1, 1]} : vector<16x512xf32> to vector<16x128xf32>
      %225 = arith.negf %224 : vector<16x128xf32>
      %226 = math.exp %225 : vector<16x128xf32>
      %cst_67 = arith.constant 1.000000e+00 : f32
      %227 = vector.broadcast %cst_67 : f32 to vector<16x128xf32>
      %228 = arith.addf %227, %226 : vector<16x128xf32>
      %229 = arith.divf %227, %228 : vector<16x128xf32>
      %230 = vector.extract_strided_slice %223 {offsets = [0, 128], sizes = [16, 128], strides = [1, 1]} : vector<16x512xf32> to vector<16x128xf32>
      %231 = arith.negf %230 : vector<16x128xf32>
      %232 = math.exp %231 : vector<16x128xf32>
      %cst_68 = arith.constant 1.000000e+00 : f32
      %233 = vector.broadcast %cst_68 : f32 to vector<16x128xf32>
      %234 = arith.addf %233, %232 : vector<16x128xf32>
      %235 = arith.divf %233, %234 : vector<16x128xf32>
      %236 = vector.extract_strided_slice %223 {offsets = [0, 256], sizes = [16, 128], strides = [1, 1]} : vector<16x512xf32> to vector<16x128xf32>
      %237 = math.tanh %236 : vector<16x128xf32>
      %238 = vector.extract_strided_slice %223 {offsets = [0, 384], sizes = [16, 128], strides = [1, 1]} : vector<16x512xf32> to vector<16x128xf32>
      %239 = arith.negf %238 : vector<16x128xf32>
      %240 = math.exp %239 : vector<16x128xf32>
      %cst_69 = arith.constant 1.000000e+00 : f32
      %241 = vector.broadcast %cst_69 : f32 to vector<16x128xf32>
      %242 = arith.addf %241, %240 : vector<16x128xf32>
      %243 = arith.divf %241, %242 : vector<16x128xf32>
      %244 = arith.mulf %235, %208 : vector<16x128xf32>
      %245 = arith.mulf %229, %237 : vector<16x128xf32>
      %246 = arith.addf %244, %245 : vector<16x128xf32>
      %247 = math.tanh %246 : vector<16x128xf32>
      %248 = arith.mulf %243, %247 : vector<16x128xf32>
      %249 = arith.truncf %248 : vector<16x128xf32> to vector<16x128xbf16>
      %250 = arith.addi %17, %c5_i32 : i32
      %251 = arith.index_cast %250 : i32 to index
      %c0_70 = arith.constant 0 : index
      %c0_71 = arith.constant 0 : index
      %252 = vector.load %arg8[%251, %c0_70, %c0_71] : memref<8x16x128xbf16, #tpu.memory_space<vmem>>, vector<1x16x128xbf16>
      %253 = vector.shape_cast %252 : vector<1x16x128xbf16> to vector<16x128xbf16>
      %254 = vector.shape_cast %249 : vector<16x128xbf16> to vector<1x16x128xbf16>
      tpu.vector_store %arg8[%251, %c0_70, %c0_71], %254 {strides = array<i32>} : memref<8x16x128xbf16, #tpu.memory_space<vmem>>, vector<1x16x128xbf16>,
      %c6_i32 = arith.constant 6 : i32
      %255 = arith.index_cast %c6_i32 : i32 to index
      %c0_72 = arith.constant 0 : index
      %c0_73 = arith.constant 0 : index
      %256 = vector.load %arg11[%255, %c0_72, %c0_73] : memref<8x16x512xbf16, #tpu.memory_space<vmem>>, vector<1x16x512xbf16>
      %257 = vector.shape_cast %256 : vector<1x16x512xbf16> to vector<16x512xbf16>
      %258 = arith.extf %257 : vector<16x512xbf16> to vector<16x512xf32>
      %259 = arith.truncf %248 : vector<16x128xf32> to vector<16x128xbf16>
      %cst_74 = arith.constant dense<0.000000e+00> : vector<16x512xf32>
      %260 = tpu.matmul %259, %1, %cst_74 {dimension_numbers = #tpu.dot_dimension_numbers<[1], [0], [0], [1], [0, 0, 1, 1], [], []>} : vector<16x128xbf16>, vector<128x512xbf16>, vector<16x512xf32> -> vector<16x512xf32>
      %261 = arith.addf %258, %260 : vector<16x512xf32>
      %262 = vector.extract_strided_slice %261 {offsets = [0, 0], sizes = [16, 128], strides = [1, 1]} : vector<16x512xf32> to vector<16x128xf32>
      %263 = arith.negf %262 : vector<16x128xf32>
      %264 = math.exp %263 : vector<16x128xf32>
      %cst_75 = arith.constant 1.000000e+00 : f32
      %265 = vector.broadcast %cst_75 : f32 to vector<16x128xf32>
      %266 = arith.addf %265, %264 : vector<16x128xf32>
      %267 = arith.divf %265, %266 : vector<16x128xf32>
      %268 = vector.extract_strided_slice %261 {offsets = [0, 128], sizes = [16, 128], strides = [1, 1]} : vector<16x512xf32> to vector<16x128xf32>
      %269 = arith.negf %268 : vector<16x128xf32>
      %270 = math.exp %269 : vector<16x128xf32>
      %cst_76 = arith.constant 1.000000e+00 : f32
      %271 = vector.broadcast %cst_76 : f32 to vector<16x128xf32>
      %272 = arith.addf %271, %270 : vector<16x128xf32>
      %273 = arith.divf %271, %272 : vector<16x128xf32>
      %274 = vector.extract_strided_slice %261 {offsets = [0, 256], sizes = [16, 128], strides = [1, 1]} : vector<16x512xf32> to vector<16x128xf32>
      %275 = math.tanh %274 : vector<16x128xf32>
      %276 = vector.extract_strided_slice %261 {offsets = [0, 384], sizes = [16, 128], strides = [1, 1]} : vector<16x512xf32> to vector<16x128xf32>
      %277 = arith.negf %276 : vector<16x128xf32>
      %278 = math.exp %277 : vector<16x128xf32>
      %cst_77 = arith.constant 1.000000e+00 : f32
      %279 = vector.broadcast %cst_77 : f32 to vector<16x128xf32>
      %280 = arith.addf %279, %278 : vector<16x128xf32>
      %281 = arith.divf %279, %280 : vector<16x128xf32>
      %282 = arith.mulf %273, %246 : vector<16x128xf32>
      %283 = arith.mulf %267, %275 : vector<16x128xf32>
      %284 = arith.addf %282, %283 : vector<16x128xf32>
      %285 = math.tanh %284 : vector<16x128xf32>
      %286 = arith.mulf %281, %285 : vector<16x128xf32>
      %287 = arith.truncf %286 : vector<16x128xf32> to vector<16x128xbf16>
      %288 = arith.addi %17, %c6_i32 : i32
      %289 = arith.index_cast %288 : i32 to index
      %c0_78 = arith.constant 0 : index
      %c0_79 = arith.constant 0 : index
      %290 = vector.load %arg8[%289, %c0_78, %c0_79] : memref<8x16x128xbf16, #tpu.memory_space<vmem>>, vector<1x16x128xbf16>
      %291 = vector.shape_cast %290 : vector<1x16x128xbf16> to vector<16x128xbf16>
      %292 = vector.shape_cast %287 : vector<16x128xbf16> to vector<1x16x128xbf16>
      tpu.vector_store %arg8[%289, %c0_78, %c0_79], %292 {strides = array<i32>} : memref<8x16x128xbf16, #tpu.memory_space<vmem>>, vector<1x16x128xbf16>,
      %c7_i32 = arith.constant 7 : i32
      %293 = arith.index_cast %c7_i32 : i32 to index
      %c0_80 = arith.constant 0 : index
      %c0_81 = arith.constant 0 : index
      %294 = vector.load %arg11[%293, %c0_80, %c0_81] : memref<8x16x512xbf16, #tpu.memory_space<vmem>>, vector<1x16x512xbf16>
      %295 = vector.shape_cast %294 : vector<1x16x512xbf16> to vector<16x512xbf16>
      %296 = arith.extf %295 : vector<16x512xbf16> to vector<16x512xf32>
      %297 = arith.truncf %286 : vector<16x128xf32> to vector<16x128xbf16>
      %cst_82 = arith.constant dense<0.000000e+00> : vector<16x512xf32>
      %298 = tpu.matmul %297, %1, %cst_82 {dimension_numbers = #tpu.dot_dimension_numbers<[1], [0], [0], [1], [0, 0, 1, 1], [], []>} : vector<16x128xbf16>, vector<128x512xbf16>, vector<16x512xf32> -> vector<16x512xf32>
      %299 = arith.addf %296, %298 : vector<16x512xf32>
      %300 = vector.extract_strided_slice %299 {offsets = [0, 0], sizes = [16, 128], strides = [1, 1]} : vector<16x512xf32> to vector<16x128xf32>
      %301 = arith.negf %300 : vector<16x128xf32>
      %302 = math.exp %301 : vector<16x128xf32>
      %cst_83 = arith.constant 1.000000e+00 : f32
      %303 = vector.broadcast %cst_83 : f32 to vector<16x128xf32>
      %304 = arith.addf %303, %302 : vector<16x128xf32>
      %305 = arith.divf %303, %304 : vector<16x128xf32>
      %306 = vector.extract_strided_slice %299 {offsets = [0, 128], sizes = [16, 128], strides = [1, 1]} : vector<16x512xf32> to vector<16x128xf32>
      %307 = arith.negf %306 : vector<16x128xf32>
      %308 = math.exp %307 : vector<16x128xf32>
      %cst_84 = arith.constant 1.000000e+00 : f32
      %309 = vector.broadcast %cst_84 : f32 to vector<16x128xf32>
      %310 = arith.addf %309, %308 : vector<16x128xf32>
      %311 = arith.divf %309, %310 : vector<16x128xf32>
      %312 = vector.extract_strided_slice %299 {offsets = [0, 256], sizes = [16, 128], strides = [1, 1]} : vector<16x512xf32> to vector<16x128xf32>
      %313 = math.tanh %312 : vector<16x128xf32>
      %314 = vector.extract_strided_slice %299 {offsets = [0, 384], sizes = [16, 128], strides = [1, 1]} : vector<16x512xf32> to vector<16x128xf32>
      %315 = arith.negf %314 : vector<16x128xf32>
      %316 = math.exp %315 : vector<16x128xf32>
      %cst_85 = arith.constant 1.000000e+00 : f32
      %317 = vector.broadcast %cst_85 : f32 to vector<16x128xf32>
      %318 = arith.addf %317, %316 : vector<16x128xf32>
      %319 = arith.divf %317, %318 : vector<16x128xf32>
      %320 = arith.mulf %311, %284 : vector<16x128xf32>
      %321 = arith.mulf %305, %313 : vector<16x128xf32>
      %322 = arith.addf %320, %321 : vector<16x128xf32>
      %323 = math.tanh %322 : vector<16x128xf32>
      %324 = arith.mulf %319, %323 : vector<16x128xf32>
      %325 = arith.truncf %324 : vector<16x128xf32> to vector<16x128xbf16>
      %326 = arith.addi %17, %c7_i32 : i32
      %327 = arith.index_cast %326 : i32 to index
      %c0_86 = arith.constant 0 : index
      %c0_87 = arith.constant 0 : index
      %328 = vector.load %arg8[%327, %c0_86, %c0_87] : memref<8x16x128xbf16, #tpu.memory_space<vmem>>, vector<1x16x128xbf16>
      %329 = vector.shape_cast %328 : vector<1x16x128xbf16> to vector<16x128xbf16>
      %330 = vector.shape_cast %325 : vector<16x128xbf16> to vector<1x16x128xbf16>
      tpu.vector_store %arg8[%327, %c0_86, %c0_87], %330 {strides = array<i32>} : memref<8x16x128xbf16, #tpu.memory_space<vmem>>, vector<1x16x128xbf16>,
      %c8_i32_88 = arith.constant 8 : i32
      %c1_i32_89 = arith.constant 1 : i32
      %c0_90 = arith.constant 0 : index
      %c0_91 = arith.constant 0 : index
      %c0_92 = arith.constant 0 : index
      %331 = vector.load %arg9[%c0_90, %c0_91, %c0_92] : memref<1x16x128xf32, #tpu.memory_space<vmem>>, vector<1x16x128xf32>
      %332 = vector.shape_cast %331 : vector<1x16x128xf32> to vector<16x128xf32>
      %333 = vector.shape_cast %324 : vector<16x128xf32> to vector<1x16x128xf32>
      tpu.vector_store %arg9[%c0_90, %c0_91, %c0_92], %333 {strides = array<i32>} : memref<1x16x128xf32, #tpu.memory_space<vmem>>, vector<1x16x128xf32>,
      %c0_93 = arith.constant 0 : index
      %c0_94 = arith.constant 0 : index
      %c0_95 = arith.constant 0 : index
      %334 = vector.load %arg10[%c0_93, %c0_94, %c0_95] : memref<1x16x128xf32, #tpu.memory_space<vmem>>, vector<1x16x128xf32>
      %335 = vector.shape_cast %334 : vector<1x16x128xf32> to vector<16x128xf32>
      %336 = vector.shape_cast %322 : vector<16x128xf32> to vector<1x16x128xf32>
      tpu.vector_store %arg10[%c0_93, %c0_94, %c0_95], %336 {strides = array<i32>} : memref<1x16x128xf32, #tpu.memory_space<vmem>>, vector<1x16x128xf32>,
    } else {
    }
    %c0_i32_6 = arith.constant 0 : i32
    %7 = arith.cmpi sgt, %arg1, %c0_i32_6 : i32
    %8 = arith.extui %7 : i1 to i32
    %c0_i32_7 = arith.constant 0 : i32
    %9 = arith.cmpi ne, %8, %c0_i32_7 : i32
    scf.if %9 {
      %c0_8 = arith.constant 0 : index
      %c0_9 = arith.constant 0 : index
      %c0_10 = arith.constant 0 : index
      %10 = vector.load %arg5[%c0_8, %c0_9, %c0_10] : memref<1x128x512xbf16, #tpu.memory_space<vmem>>, vector<1x128x512xbf16>
      %11 = vector.shape_cast %10 : vector<1x128x512xbf16> to vector<128x512xbf16>
      %c0_11 = arith.constant 0 : index
      %c0_12 = arith.constant 0 : index
      %c0_13 = arith.constant 0 : index
      %12 = vector.load %arg3[%c0_11, %c0_12, %c0_13] : memref<1x16x128xf32, #tpu.memory_space<vmem>>, vector<1x16x128xf32>
      %13 = vector.shape_cast %12 : vector<1x16x128xf32> to vector<16x128xf32>
      %c0_14 = arith.constant 0 : index
      %c0_15 = arith.constant 0 : index
      %c0_16 = arith.constant 0 : index
      %14 = vector.load %arg4[%c0_14, %c0_15, %c0_16] : memref<1x16x128xf32, #tpu.memory_space<vmem>>, vector<1x16x128xf32>
      %15 = vector.shape_cast %14 : vector<1x16x128xf32> to vector<16x128xf32>
      %c0_i32_17 = arith.constant 0 : i32
      %c8_i32 = arith.constant 8 : i32
      %16 = arith.muli %c0_i32_17, %c8_i32 : i32
      %17 = tpu.assume_multiple %16, 8 : i32
      %18 = arith.index_cast %17 : i32 to index
      %c0_18 = arith.constant 0 : index
      %c0_19 = arith.constant 0 : index
      %19 = vector.load %arg8[%18, %c0_18, %c0_19] : memref<8x16x128xbf16, #tpu.memory_space<vmem>>, vector<8x16x128xbf16>
      %20 = vector.shape_cast %19 : vector<8x16x128xbf16> to vector<128x128xbf16>
      %cst = arith.constant dense<0.000000e+00> : vector<128x512xf32>
      %21 = tpu.matmul %20, %11, %cst {dimension_numbers = #tpu.dot_dimension_numbers<[1], [0], [0], [1], [0, 0, 1, 1], [], []>} : vector<128x128xbf16>, vector<128x512xbf16>, vector<128x512xf32> -> vector<128x512xf32>
      %22 = vector.broadcast %3 : vector<1x512xf32> to vector<128x512xf32>
      %23 = arith.addf %21, %22 : vector<128x512xf32>
      %24 = vector.shape_cast %23 : vector<128x512xf32> to vector<8x16x512xf32>
      %25 = arith.truncf %24 : vector<8x16x512xf32> to vector<8x16x512xbf16>
      %c0_20 = arith.constant 0 : index
      %c0_21 = arith.constant 0 : index
      %c0_22 = arith.constant 0 : index
      %26 = vector.load %arg11[%c0_20, %c0_21, %c0_22] : memref<8x16x512xbf16, #tpu.memory_space<vmem>>, vector<8x16x512xbf16>
      tpu.vector_store %arg11[%c0_20, %c0_21, %c0_22], %25 {strides = array<i32>} : memref<8x16x512xbf16, #tpu.memory_space<vmem>>, vector<8x16x512xbf16>,
      %c0_i32_23 = arith.constant 0 : i32
      %27 = arith.index_cast %c0_i32_23 : i32 to index
      %c0_24 = arith.constant 0 : index
      %c0_25 = arith.constant 0 : index
      %28 = vector.load %arg11[%27, %c0_24, %c0_25] : memref<8x16x512xbf16, #tpu.memory_space<vmem>>, vector<1x16x512xbf16>
      %29 = vector.shape_cast %28 : vector<1x16x512xbf16> to vector<16x512xbf16>
      %30 = arith.extf %29 : vector<16x512xbf16> to vector<16x512xf32>
      %31 = arith.truncf %13 : vector<16x128xf32> to vector<16x128xbf16>
      %cst_26 = arith.constant dense<0.000000e+00> : vector<16x512xf32>
      %32 = tpu.matmul %31, %1, %cst_26 {dimension_numbers = #tpu.dot_dimension_numbers<[1], [0], [0], [1], [0, 0, 1, 1], [], []>} : vector<16x128xbf16>, vector<128x512xbf16>, vector<16x512xf32> -> vector<16x512xf32>
      %33 = arith.addf %30, %32 : vector<16x512xf32>
      %34 = vector.extract_strided_slice %33 {offsets = [0, 0], sizes = [16, 128], strides = [1, 1]} : vector<16x512xf32> to vector<16x128xf32>
      %35 = arith.negf %34 : vector<16x128xf32>
      %36 = math.exp %35 : vector<16x128xf32>
      %cst_27 = arith.constant 1.000000e+00 : f32
      %37 = vector.broadcast %cst_27 : f32 to vector<16x128xf32>
      %38 = arith.addf %37, %36 : vector<16x128xf32>
      %39 = arith.divf %37, %38 : vector<16x128xf32>
      %40 = vector.extract_strided_slice %33 {offsets = [0, 128], sizes = [16, 128], strides = [1, 1]} : vector<16x512xf32> to vector<16x128xf32>
      %41 = arith.negf %40 : vector<16x128xf32>
      %42 = math.exp %41 : vector<16x128xf32>
      %cst_28 = arith.constant 1.000000e+00 : f32
      %43 = vector.broadcast %cst_28 : f32 to vector<16x128xf32>
      %44 = arith.addf %43, %42 : vector<16x128xf32>
      %45 = arith.divf %43, %44 : vector<16x128xf32>
      %46 = vector.extract_strided_slice %33 {offsets = [0, 256], sizes = [16, 128], strides = [1, 1]} : vector<16x512xf32> to vector<16x128xf32>
      %47 = math.tanh %46 : vector<16x128xf32>
      %48 = vector.extract_strided_slice %33 {offsets = [0, 384], sizes = [16, 128], strides = [1, 1]} : vector<16x512xf32> to vector<16x128xf32>
      %49 = arith.negf %48 : vector<16x128xf32>
      %50 = math.exp %49 : vector<16x128xf32>
      %cst_29 = arith.constant 1.000000e+00 : f32
      %51 = vector.broadcast %cst_29 : f32 to vector<16x128xf32>
      %52 = arith.addf %51, %50 : vector<16x128xf32>
      %53 = arith.divf %51, %52 : vector<16x128xf32>
      %54 = arith.mulf %45, %15 : vector<16x128xf32>
      %55 = arith.mulf %39, %47 : vector<16x128xf32>
      %56 = arith.addf %54, %55 : vector<16x128xf32>
      %57 = math.tanh %56 : vector<16x128xf32>
      %58 = arith.mulf %53, %57 : vector<16x128xf32>
      %59 = arith.truncf %58 : vector<16x128xf32> to vector<16x128xbf16>
      %60 = arith.addi %17, %c0_i32_23 : i32
      %61 = arith.index_cast %60 : i32 to index
      %c0_30 = arith.constant 0 : index
      %c0_31 = arith.constant 0 : index
      %62 = vector.load %arg8[%61, %c0_30, %c0_31] : memref<8x16x128xbf16, #tpu.memory_space<vmem>>, vector<1x16x128xbf16>
      %63 = vector.shape_cast %62 : vector<1x16x128xbf16> to vector<16x128xbf16>
      %64 = vector.shape_cast %59 : vector<16x128xbf16> to vector<1x16x128xbf16>
      tpu.vector_store %arg8[%61, %c0_30, %c0_31], %64 {strides = array<i32>} : memref<8x16x128xbf16, #tpu.memory_space<vmem>>, vector<1x16x128xbf16>,
      %c1_i32 = arith.constant 1 : i32
      %65 = arith.index_cast %c1_i32 : i32 to index
      %c0_32 = arith.constant 0 : index
      %c0_33 = arith.constant 0 : index
      %66 = vector.load %arg11[%65, %c0_32, %c0_33] : memref<8x16x512xbf16, #tpu.memory_space<vmem>>, vector<1x16x512xbf16>
      %67 = vector.shape_cast %66 : vector<1x16x512xbf16> to vector<16x512xbf16>
      %68 = arith.extf %67 : vector<16x512xbf16> to vector<16x512xf32>
      %69 = arith.truncf %58 : vector<16x128xf32> to vector<16x128xbf16>
      %cst_34 = arith.constant dense<0.000000e+00> : vector<16x512xf32>
      %70 = tpu.matmul %69, %1, %cst_34 {dimension_numbers = #tpu.dot_dimension_numbers<[1], [0], [0], [1], [0, 0, 1, 1], [], []>} : vector<16x128xbf16>, vector<128x512xbf16>, vector<16x512xf32> -> vector<16x512xf32>
      %71 = arith.addf %68, %70 : vector<16x512xf32>
      %72 = vector.extract_strided_slice %71 {offsets = [0, 0], sizes = [16, 128], strides = [1, 1]} : vector<16x512xf32> to vector<16x128xf32>
      %73 = arith.negf %72 : vector<16x128xf32>
      %74 = math.exp %73 : vector<16x128xf32>
      %cst_35 = arith.constant 1.000000e+00 : f32
      %75 = vector.broadcast %cst_35 : f32 to vector<16x128xf32>
      %76 = arith.addf %75, %74 : vector<16x128xf32>
      %77 = arith.divf %75, %76 : vector<16x128xf32>
      %78 = vector.extract_strided_slice %71 {offsets = [0, 128], sizes = [16, 128], strides = [1, 1]} : vector<16x512xf32> to vector<16x128xf32>
      %79 = arith.negf %78 : vector<16x128xf32>
      %80 = math.exp %79 : vector<16x128xf32>
      %cst_36 = arith.constant 1.000000e+00 : f32
      %81 = vector.broadcast %cst_36 : f32 to vector<16x128xf32>
      %82 = arith.addf %81, %80 : vector<16x128xf32>
      %83 = arith.divf %81, %82 : vector<16x128xf32>
      %84 = vector.extract_strided_slice %71 {offsets = [0, 256], sizes = [16, 128], strides = [1, 1]} : vector<16x512xf32> to vector<16x128xf32>
      %85 = math.tanh %84 : vector<16x128xf32>
      %86 = vector.extract_strided_slice %71 {offsets = [0, 384], sizes = [16, 128], strides = [1, 1]} : vector<16x512xf32> to vector<16x128xf32>
      %87 = arith.negf %86 : vector<16x128xf32>
      %88 = math.exp %87 : vector<16x128xf32>
      %cst_37 = arith.constant 1.000000e+00 : f32
      %89 = vector.broadcast %cst_37 : f32 to vector<16x128xf32>
      %90 = arith.addf %89, %88 : vector<16x128xf32>
      %91 = arith.divf %89, %90 : vector<16x128xf32>
      %92 = arith.mulf %83, %56 : vector<16x128xf32>
      %93 = arith.mulf %77, %85 : vector<16x128xf32>
      %94 = arith.addf %92, %93 : vector<16x128xf32>
      %95 = math.tanh %94 : vector<16x128xf32>
      %96 = arith.mulf %91, %95 : vector<16x128xf32>
      %97 = arith.truncf %96 : vector<16x128xf32> to vector<16x128xbf16>
      %98 = arith.addi %17, %c1_i32 : i32
      %99 = arith.index_cast %98 : i32 to index
      %c0_38 = arith.constant 0 : index
      %c0_39 = arith.constant 0 : index
      %100 = vector.load %arg8[%99, %c0_38, %c0_39] : memref<8x16x128xbf16, #tpu.memory_space<vmem>>, vector<1x16x128xbf16>
      %101 = vector.shape_cast %100 : vector<1x16x128xbf16> to vector<16x128xbf16>
      %102 = vector.shape_cast %97 : vector<16x128xbf16> to vector<1x16x128xbf16>
      tpu.vector_store %arg8[%99, %c0_38, %c0_39], %102 {strides = array<i32>} : memref<8x16x128xbf16, #tpu.memory_space<vmem>>, vector<1x16x128xbf16>,
      %c2_i32 = arith.constant 2 : i32
      %103 = arith.index_cast %c2_i32 : i32 to index
      %c0_40 = arith.constant 0 : index
      %c0_41 = arith.constant 0 : index
      %104 = vector.load %arg11[%103, %c0_40, %c0_41] : memref<8x16x512xbf16, #tpu.memory_space<vmem>>, vector<1x16x512xbf16>
      %105 = vector.shape_cast %104 : vector<1x16x512xbf16> to vector<16x512xbf16>
      %106 = arith.extf %105 : vector<16x512xbf16> to vector<16x512xf32>
      %107 = arith.truncf %96 : vector<16x128xf32> to vector<16x128xbf16>
      %cst_42 = arith.constant dense<0.000000e+00> : vector<16x512xf32>
      %108 = tpu.matmul %107, %1, %cst_42 {dimension_numbers = #tpu.dot_dimension_numbers<[1], [0], [0], [1], [0, 0, 1, 1], [], []>} : vector<16x128xbf16>, vector<128x512xbf16>, vector<16x512xf32> -> vector<16x512xf32>
      %109 = arith.addf %106, %108 : vector<16x512xf32>
      %110 = vector.extract_strided_slice %109 {offsets = [0, 0], sizes = [16, 128], strides = [1, 1]} : vector<16x512xf32> to vector<16x128xf32>
      %111 = arith.negf %110 : vector<16x128xf32>
      %112 = math.exp %111 : vector<16x128xf32>
      %cst_43 = arith.constant 1.000000e+00 : f32
      %113 = vector.broadcast %cst_43 : f32 to vector<16x128xf32>
      %114 = arith.addf %113, %112 : vector<16x128xf32>
      %115 = arith.divf %113, %114 : vector<16x128xf32>
      %116 = vector.extract_strided_slice %109 {offsets = [0, 128], sizes = [16, 128], strides = [1, 1]} : vector<16x512xf32> to vector<16x128xf32>
      %117 = arith.negf %116 : vector<16x128xf32>
      %118 = math.exp %117 : vector<16x128xf32>
      %cst_44 = arith.constant 1.000000e+00 : f32
      %119 = vector.broadcast %cst_44 : f32 to vector<16x128xf32>
      %120 = arith.addf %119, %118 : vector<16x128xf32>
      %121 = arith.divf %119, %120 : vector<16x128xf32>
      %122 = vector.extract_strided_slice %109 {offsets = [0, 256], sizes = [16, 128], strides = [1, 1]} : vector<16x512xf32> to vector<16x128xf32>
      %123 = math.tanh %122 : vector<16x128xf32>
      %124 = vector.extract_strided_slice %109 {offsets = [0, 384], sizes = [16, 128], strides = [1, 1]} : vector<16x512xf32> to vector<16x128xf32>
      %125 = arith.negf %124 : vector<16x128xf32>
      %126 = math.exp %125 : vector<16x128xf32>
      %cst_45 = arith.constant 1.000000e+00 : f32
      %127 = vector.broadcast %cst_45 : f32 to vector<16x128xf32>
      %128 = arith.addf %127, %126 : vector<16x128xf32>
      %129 = arith.divf %127, %128 : vector<16x128xf32>
      %130 = arith.mulf %121, %94 : vector<16x128xf32>
      %131 = arith.mulf %115, %123 : vector<16x128xf32>
      %132 = arith.addf %130, %131 : vector<16x128xf32>
      %133 = math.tanh %132 : vector<16x128xf32>
      %134 = arith.mulf %129, %133 : vector<16x128xf32>
      %135 = arith.truncf %134 : vector<16x128xf32> to vector<16x128xbf16>
      %136 = arith.addi %17, %c2_i32 : i32
      %137 = arith.index_cast %136 : i32 to index
      %c0_46 = arith.constant 0 : index
      %c0_47 = arith.constant 0 : index
      %138 = vector.load %arg8[%137, %c0_46, %c0_47] : memref<8x16x128xbf16, #tpu.memory_space<vmem>>, vector<1x16x128xbf16>
      %139 = vector.shape_cast %138 : vector<1x16x128xbf16> to vector<16x128xbf16>
      %140 = vector.shape_cast %135 : vector<16x128xbf16> to vector<1x16x128xbf16>
      tpu.vector_store %arg8[%137, %c0_46, %c0_47], %140 {strides = array<i32>} : memref<8x16x128xbf16, #tpu.memory_space<vmem>>, vector<1x16x128xbf16>,
      %c3_i32 = arith.constant 3 : i32
      %141 = arith.index_cast %c3_i32 : i32 to index
      %c0_48 = arith.constant 0 : index
      %c0_49 = arith.constant 0 : index
      %142 = vector.load %arg11[%141, %c0_48, %c0_49] : memref<8x16x512xbf16, #tpu.memory_space<vmem>>, vector<1x16x512xbf16>
      %143 = vector.shape_cast %142 : vector<1x16x512xbf16> to vector<16x512xbf16>
      %144 = arith.extf %143 : vector<16x512xbf16> to vector<16x512xf32>
      %145 = arith.truncf %134 : vector<16x128xf32> to vector<16x128xbf16>
      %cst_50 = arith.constant dense<0.000000e+00> : vector<16x512xf32>
      %146 = tpu.matmul %145, %1, %cst_50 {dimension_numbers = #tpu.dot_dimension_numbers<[1], [0], [0], [1], [0, 0, 1, 1], [], []>} : vector<16x128xbf16>, vector<128x512xbf16>, vector<16x512xf32> -> vector<16x512xf32>
      %147 = arith.addf %144, %146 : vector<16x512xf32>
      %148 = vector.extract_strided_slice %147 {offsets = [0, 0], sizes = [16, 128], strides = [1, 1]} : vector<16x512xf32> to vector<16x128xf32>
      %149 = arith.negf %148 : vector<16x128xf32>
      %150 = math.exp %149 : vector<16x128xf32>
      %cst_51 = arith.constant 1.000000e+00 : f32
      %151 = vector.broadcast %cst_51 : f32 to vector<16x128xf32>
      %152 = arith.addf %151, %150 : vector<16x128xf32>
      %153 = arith.divf %151, %152 : vector<16x128xf32>
      %154 = vector.extract_strided_slice %147 {offsets = [0, 128], sizes = [16, 128], strides = [1, 1]} : vector<16x512xf32> to vector<16x128xf32>
      %155 = arith.negf %154 : vector<16x128xf32>
      %156 = math.exp %155 : vector<16x128xf32>
      %cst_52 = arith.constant 1.000000e+00 : f32
      %157 = vector.broadcast %cst_52 : f32 to vector<16x128xf32>
      %158 = arith.addf %157, %156 : vector<16x128xf32>
      %159 = arith.divf %157, %158 : vector<16x128xf32>
      %160 = vector.extract_strided_slice %147 {offsets = [0, 256], sizes = [16, 128], strides = [1, 1]} : vector<16x512xf32> to vector<16x128xf32>
      %161 = math.tanh %160 : vector<16x128xf32>
      %162 = vector.extract_strided_slice %147 {offsets = [0, 384], sizes = [16, 128], strides = [1, 1]} : vector<16x512xf32> to vector<16x128xf32>
      %163 = arith.negf %162 : vector<16x128xf32>
      %164 = math.exp %163 : vector<16x128xf32>
      %cst_53 = arith.constant 1.000000e+00 : f32
      %165 = vector.broadcast %cst_53 : f32 to vector<16x128xf32>
      %166 = arith.addf %165, %164 : vector<16x128xf32>
      %167 = arith.divf %165, %166 : vector<16x128xf32>
      %168 = arith.mulf %159, %132 : vector<16x128xf32>
      %169 = arith.mulf %153, %161 : vector<16x128xf32>
      %170 = arith.addf %168, %169 : vector<16x128xf32>
      %171 = math.tanh %170 : vector<16x128xf32>
      %172 = arith.mulf %167, %171 : vector<16x128xf32>
      %173 = arith.truncf %172 : vector<16x128xf32> to vector<16x128xbf16>
      %174 = arith.addi %17, %c3_i32 : i32
      %175 = arith.index_cast %174 : i32 to index
      %c0_54 = arith.constant 0 : index
      %c0_55 = arith.constant 0 : index
      %176 = vector.load %arg8[%175, %c0_54, %c0_55] : memref<8x16x128xbf16, #tpu.memory_space<vmem>>, vector<1x16x128xbf16>
      %177 = vector.shape_cast %176 : vector<1x16x128xbf16> to vector<16x128xbf16>
      %178 = vector.shape_cast %173 : vector<16x128xbf16> to vector<1x16x128xbf16>
      tpu.vector_store %arg8[%175, %c0_54, %c0_55], %178 {strides = array<i32>} : memref<8x16x128xbf16, #tpu.memory_space<vmem>>, vector<1x16x128xbf16>,
      %c4_i32 = arith.constant 4 : i32
      %179 = arith.index_cast %c4_i32 : i32 to index
      %c0_56 = arith.constant 0 : index
      %c0_57 = arith.constant 0 : index
      %180 = vector.load %arg11[%179, %c0_56, %c0_57] : memref<8x16x512xbf16, #tpu.memory_space<vmem>>, vector<1x16x512xbf16>
      %181 = vector.shape_cast %180 : vector<1x16x512xbf16> to vector<16x512xbf16>
      %182 = arith.extf %181 : vector<16x512xbf16> to vector<16x512xf32>
      %183 = arith.truncf %172 : vector<16x128xf32> to vector<16x128xbf16>
      %cst_58 = arith.constant dense<0.000000e+00> : vector<16x512xf32>
      %184 = tpu.matmul %183, %1, %cst_58 {dimension_numbers = #tpu.dot_dimension_numbers<[1], [0], [0], [1], [0, 0, 1, 1], [], []>} : vector<16x128xbf16>, vector<128x512xbf16>, vector<16x512xf32> -> vector<16x512xf32>
      %185 = arith.addf %182, %184 : vector<16x512xf32>
      %186 = vector.extract_strided_slice %185 {offsets = [0, 0], sizes = [16, 128], strides = [1, 1]} : vector<16x512xf32> to vector<16x128xf32>
      %187 = arith.negf %186 : vector<16x128xf32>
      %188 = math.exp %187 : vector<16x128xf32>
      %cst_59 = arith.constant 1.000000e+00 : f32
      %189 = vector.broadcast %cst_59 : f32 to vector<16x128xf32>
      %190 = arith.addf %189, %188 : vector<16x128xf32>
      %191 = arith.divf %189, %190 : vector<16x128xf32>
      %192 = vector.extract_strided_slice %185 {offsets = [0, 128], sizes = [16, 128], strides = [1, 1]} : vector<16x512xf32> to vector<16x128xf32>
      %193 = arith.negf %192 : vector<16x128xf32>
      %194 = math.exp %193 : vector<16x128xf32>
      %cst_60 = arith.constant 1.000000e+00 : f32
      %195 = vector.broadcast %cst_60 : f32 to vector<16x128xf32>
      %196 = arith.addf %195, %194 : vector<16x128xf32>
      %197 = arith.divf %195, %196 : vector<16x128xf32>
      %198 = vector.extract_strided_slice %185 {offsets = [0, 256], sizes = [16, 128], strides = [1, 1]} : vector<16x512xf32> to vector<16x128xf32>
      %199 = math.tanh %198 : vector<16x128xf32>
      %200 = vector.extract_strided_slice %185 {offsets = [0, 384], sizes = [16, 128], strides = [1, 1]} : vector<16x512xf32> to vector<16x128xf32>
      %201 = arith.negf %200 : vector<16x128xf32>
      %202 = math.exp %201 : vector<16x128xf32>
      %cst_61 = arith.constant 1.000000e+00 : f32
      %203 = vector.broadcast %cst_61 : f32 to vector<16x128xf32>
      %204 = arith.addf %203, %202 : vector<16x128xf32>
      %205 = arith.divf %203, %204 : vector<16x128xf32>
      %206 = arith.mulf %197, %170 : vector<16x128xf32>
      %207 = arith.mulf %191, %199 : vector<16x128xf32>
      %208 = arith.addf %206, %207 : vector<16x128xf32>
      %209 = math.tanh %208 : vector<16x128xf32>
      %210 = arith.mulf %205, %209 : vector<16x128xf32>
      %211 = arith.truncf %210 : vector<16x128xf32> to vector<16x128xbf16>
      %212 = arith.addi %17, %c4_i32 : i32
      %213 = arith.index_cast %212 : i32 to index
      %c0_62 = arith.constant 0 : index
      %c0_63 = arith.constant 0 : index
      %214 = vector.load %arg8[%213, %c0_62, %c0_63] : memref<8x16x128xbf16, #tpu.memory_space<vmem>>, vector<1x16x128xbf16>
      %215 = vector.shape_cast %214 : vector<1x16x128xbf16> to vector<16x128xbf16>
      %216 = vector.shape_cast %211 : vector<16x128xbf16> to vector<1x16x128xbf16>
      tpu.vector_store %arg8[%213, %c0_62, %c0_63], %216 {strides = array<i32>} : memref<8x16x128xbf16, #tpu.memory_space<vmem>>, vector<1x16x128xbf16>,
      %c5_i32 = arith.constant 5 : i32
      %217 = arith.index_cast %c5_i32 : i32 to index
      %c0_64 = arith.constant 0 : index
      %c0_65 = arith.constant 0 : index
      %218 = vector.load %arg11[%217, %c0_64, %c0_65] : memref<8x16x512xbf16, #tpu.memory_space<vmem>>, vector<1x16x512xbf16>
      %219 = vector.shape_cast %218 : vector<1x16x512xbf16> to vector<16x512xbf16>
      %220 = arith.extf %219 : vector<16x512xbf16> to vector<16x512xf32>
      %221 = arith.truncf %210 : vector<16x128xf32> to vector<16x128xbf16>
      %cst_66 = arith.constant dense<0.000000e+00> : vector<16x512xf32>
      %222 = tpu.matmul %221, %1, %cst_66 {dimension_numbers = #tpu.dot_dimension_numbers<[1], [0], [0], [1], [0, 0, 1, 1], [], []>} : vector<16x128xbf16>, vector<128x512xbf16>, vector<16x512xf32> -> vector<16x512xf32>
      %223 = arith.addf %220, %222 : vector<16x512xf32>
      %224 = vector.extract_strided_slice %223 {offsets = [0, 0], sizes = [16, 128], strides = [1, 1]} : vector<16x512xf32> to vector<16x128xf32>
      %225 = arith.negf %224 : vector<16x128xf32>
      %226 = math.exp %225 : vector<16x128xf32>
      %cst_67 = arith.constant 1.000000e+00 : f32
      %227 = vector.broadcast %cst_67 : f32 to vector<16x128xf32>
      %228 = arith.addf %227, %226 : vector<16x128xf32>
      %229 = arith.divf %227, %228 : vector<16x128xf32>
      %230 = vector.extract_strided_slice %223 {offsets = [0, 128], sizes = [16, 128], strides = [1, 1]} : vector<16x512xf32> to vector<16x128xf32>
      %231 = arith.negf %230 : vector<16x128xf32>
      %232 = math.exp %231 : vector<16x128xf32>
      %cst_68 = arith.constant 1.000000e+00 : f32
      %233 = vector.broadcast %cst_68 : f32 to vector<16x128xf32>
      %234 = arith.addf %233, %232 : vector<16x128xf32>
      %235 = arith.divf %233, %234 : vector<16x128xf32>
      %236 = vector.extract_strided_slice %223 {offsets = [0, 256], sizes = [16, 128], strides = [1, 1]} : vector<16x512xf32> to vector<16x128xf32>
      %237 = math.tanh %236 : vector<16x128xf32>
      %238 = vector.extract_strided_slice %223 {offsets = [0, 384], sizes = [16, 128], strides = [1, 1]} : vector<16x512xf32> to vector<16x128xf32>
      %239 = arith.negf %238 : vector<16x128xf32>
      %240 = math.exp %239 : vector<16x128xf32>
      %cst_69 = arith.constant 1.000000e+00 : f32
      %241 = vector.broadcast %cst_69 : f32 to vector<16x128xf32>
      %242 = arith.addf %241, %240 : vector<16x128xf32>
      %243 = arith.divf %241, %242 : vector<16x128xf32>
      %244 = arith.mulf %235, %208 : vector<16x128xf32>
      %245 = arith.mulf %229, %237 : vector<16x128xf32>
      %246 = arith.addf %244, %245 : vector<16x128xf32>
      %247 = math.tanh %246 : vector<16x128xf32>
      %248 = arith.mulf %243, %247 : vector<16x128xf32>
      %249 = arith.truncf %248 : vector<16x128xf32> to vector<16x128xbf16>
      %250 = arith.addi %17, %c5_i32 : i32
      %251 = arith.index_cast %250 : i32 to index
      %c0_70 = arith.constant 0 : index
      %c0_71 = arith.constant 0 : index
      %252 = vector.load %arg8[%251, %c0_70, %c0_71] : memref<8x16x128xbf16, #tpu.memory_space<vmem>>, vector<1x16x128xbf16>
      %253 = vector.shape_cast %252 : vector<1x16x128xbf16> to vector<16x128xbf16>
      %254 = vector.shape_cast %249 : vector<16x128xbf16> to vector<1x16x128xbf16>
      tpu.vector_store %arg8[%251, %c0_70, %c0_71], %254 {strides = array<i32>} : memref<8x16x128xbf16, #tpu.memory_space<vmem>>, vector<1x16x128xbf16>,
      %c6_i32 = arith.constant 6 : i32
      %255 = arith.index_cast %c6_i32 : i32 to index
      %c0_72 = arith.constant 0 : index
      %c0_73 = arith.constant 0 : index
      %256 = vector.load %arg11[%255, %c0_72, %c0_73] : memref<8x16x512xbf16, #tpu.memory_space<vmem>>, vector<1x16x512xbf16>
      %257 = vector.shape_cast %256 : vector<1x16x512xbf16> to vector<16x512xbf16>
      %258 = arith.extf %257 : vector<16x512xbf16> to vector<16x512xf32>
      %259 = arith.truncf %248 : vector<16x128xf32> to vector<16x128xbf16>
      %cst_74 = arith.constant dense<0.000000e+00> : vector<16x512xf32>
      %260 = tpu.matmul %259, %1, %cst_74 {dimension_numbers = #tpu.dot_dimension_numbers<[1], [0], [0], [1], [0, 0, 1, 1], [], []>} : vector<16x128xbf16>, vector<128x512xbf16>, vector<16x512xf32> -> vector<16x512xf32>
      %261 = arith.addf %258, %260 : vector<16x512xf32>
      %262 = vector.extract_strided_slice %261 {offsets = [0, 0], sizes = [16, 128], strides = [1, 1]} : vector<16x512xf32> to vector<16x128xf32>
      %263 = arith.negf %262 : vector<16x128xf32>
      %264 = math.exp %263 : vector<16x128xf32>
      %cst_75 = arith.constant 1.000000e+00 : f32
      %265 = vector.broadcast %cst_75 : f32 to vector<16x128xf32>
      %266 = arith.addf %265, %264 : vector<16x128xf32>
      %267 = arith.divf %265, %266 : vector<16x128xf32>
      %268 = vector.extract_strided_slice %261 {offsets = [0, 128], sizes = [16, 128], strides = [1, 1]} : vector<16x512xf32> to vector<16x128xf32>
      %269 = arith.negf %268 : vector<16x128xf32>
      %270 = math.exp %269 : vector<16x128xf32>
      %cst_76 = arith.constant 1.000000e+00 : f32
      %271 = vector.broadcast %cst_76 : f32 to vector<16x128xf32>
      %272 = arith.addf %271, %270 : vector<16x128xf32>
      %273 = arith.divf %271, %272 : vector<16x128xf32>
      %274 = vector.extract_strided_slice %261 {offsets = [0, 256], sizes = [16, 128], strides = [1, 1]} : vector<16x512xf32> to vector<16x128xf32>
      %275 = math.tanh %274 : vector<16x128xf32>
      %276 = vector.extract_strided_slice %261 {offsets = [0, 384], sizes = [16, 128], strides = [1, 1]} : vector<16x512xf32> to vector<16x128xf32>
      %277 = arith.negf %276 : vector<16x128xf32>
      %278 = math.exp %277 : vector<16x128xf32>
      %cst_77 = arith.constant 1.000000e+00 : f32
      %279 = vector.broadcast %cst_77 : f32 to vector<16x128xf32>
      %280 = arith.addf %279, %278 : vector<16x128xf32>
      %281 = arith.divf %279, %280 : vector<16x128xf32>
      %282 = arith.mulf %273, %246 : vector<16x128xf32>
      %283 = arith.mulf %267, %275 : vector<16x128xf32>
      %284 = arith.addf %282, %283 : vector<16x128xf32>
      %285 = math.tanh %284 : vector<16x128xf32>
      %286 = arith.mulf %281, %285 : vector<16x128xf32>
      %287 = arith.truncf %286 : vector<16x128xf32> to vector<16x128xbf16>
      %288 = arith.addi %17, %c6_i32 : i32
      %289 = arith.index_cast %288 : i32 to index
      %c0_78 = arith.constant 0 : index
      %c0_79 = arith.constant 0 : index
      %290 = vector.load %arg8[%289, %c0_78, %c0_79] : memref<8x16x128xbf16, #tpu.memory_space<vmem>>, vector<1x16x128xbf16>
      %291 = vector.shape_cast %290 : vector<1x16x128xbf16> to vector<16x128xbf16>
      %292 = vector.shape_cast %287 : vector<16x128xbf16> to vector<1x16x128xbf16>
      tpu.vector_store %arg8[%289, %c0_78, %c0_79], %292 {strides = array<i32>} : memref<8x16x128xbf16, #tpu.memory_space<vmem>>, vector<1x16x128xbf16>,
      %c7_i32 = arith.constant 7 : i32
      %293 = arith.index_cast %c7_i32 : i32 to index
      %c0_80 = arith.constant 0 : index
      %c0_81 = arith.constant 0 : index
      %294 = vector.load %arg11[%293, %c0_80, %c0_81] : memref<8x16x512xbf16, #tpu.memory_space<vmem>>, vector<1x16x512xbf16>
      %295 = vector.shape_cast %294 : vector<1x16x512xbf16> to vector<16x512xbf16>
      %296 = arith.extf %295 : vector<16x512xbf16> to vector<16x512xf32>
      %297 = arith.truncf %286 : vector<16x128xf32> to vector<16x128xbf16>
      %cst_82 = arith.constant dense<0.000000e+00> : vector<16x512xf32>
      %298 = tpu.matmul %297, %1, %cst_82 {dimension_numbers = #tpu.dot_dimension_numbers<[1], [0], [0], [1], [0, 0, 1, 1], [], []>} : vector<16x128xbf16>, vector<128x512xbf16>, vector<16x512xf32> -> vector<16x512xf32>
      %299 = arith.addf %296, %298 : vector<16x512xf32>
      %300 = vector.extract_strided_slice %299 {offsets = [0, 0], sizes = [16, 128], strides = [1, 1]} : vector<16x512xf32> to vector<16x128xf32>
      %301 = arith.negf %300 : vector<16x128xf32>
      %302 = math.exp %301 : vector<16x128xf32>
      %cst_83 = arith.constant 1.000000e+00 : f32
      %303 = vector.broadcast %cst_83 : f32 to vector<16x128xf32>
      %304 = arith.addf %303, %302 : vector<16x128xf32>
      %305 = arith.divf %303, %304 : vector<16x128xf32>
      %306 = vector.extract_strided_slice %299 {offsets = [0, 128], sizes = [16, 128], strides = [1, 1]} : vector<16x512xf32> to vector<16x128xf32>
      %307 = arith.negf %306 : vector<16x128xf32>
      %308 = math.exp %307 : vector<16x128xf32>
      %cst_84 = arith.constant 1.000000e+00 : f32
      %309 = vector.broadcast %cst_84 : f32 to vector<16x128xf32>
      %310 = arith.addf %309, %308 : vector<16x128xf32>
      %311 = arith.divf %309, %310 : vector<16x128xf32>
      %312 = vector.extract_strided_slice %299 {offsets = [0, 256], sizes = [16, 128], strides = [1, 1]} : vector<16x512xf32> to vector<16x128xf32>
      %313 = math.tanh %312 : vector<16x128xf32>
      %314 = vector.extract_strided_slice %299 {offsets = [0, 384], sizes = [16, 128], strides = [1, 1]} : vector<16x512xf32> to vector<16x128xf32>
      %315 = arith.negf %314 : vector<16x128xf32>
      %316 = math.exp %315 : vector<16x128xf32>
      %cst_85 = arith.constant 1.000000e+00 : f32
      %317 = vector.broadcast %cst_85 : f32 to vector<16x128xf32>
      %318 = arith.addf %317, %316 : vector<16x128xf32>
      %319 = arith.divf %317, %318 : vector<16x128xf32>
      %320 = arith.mulf %311, %284 : vector<16x128xf32>
      %321 = arith.mulf %305, %313 : vector<16x128xf32>
      %322 = arith.addf %320, %321 : vector<16x128xf32>
      %323 = math.tanh %322 : vector<16x128xf32>
      %324 = arith.mulf %319, %323 : vector<16x128xf32>
      %325 = arith.truncf %324 : vector<16x128xf32> to vector<16x128xbf16>
      %326 = arith.addi %17, %c7_i32 : i32
      %327 = arith.index_cast %326 : i32 to index
      %c0_86 = arith.constant 0 : index
      %c0_87 = arith.constant 0 : index
      %328 = vector.load %arg8[%327, %c0_86, %c0_87] : memref<8x16x128xbf16, #tpu.memory_space<vmem>>, vector<1x16x128xbf16>
      %329 = vector.shape_cast %328 : vector<1x16x128xbf16> to vector<16x128xbf16>
      %330 = vector.shape_cast %325 : vector<16x128xbf16> to vector<1x16x128xbf16>
      tpu.vector_store %arg8[%327, %c0_86, %c0_87], %330 {strides = array<i32>} : memref<8x16x128xbf16, #tpu.memory_space<vmem>>, vector<1x16x128xbf16>,
      %c8_i32_88 = arith.constant 8 : i32
      %c1_i32_89 = arith.constant 1 : i32
      %c0_90 = arith.constant 0 : index
      %c0_91 = arith.constant 0 : index
      %c0_92 = arith.constant 0 : index
      %331 = vector.load %arg9[%c0_90, %c0_91, %c0_92] : memref<1x16x128xf32, #tpu.memory_space<vmem>>, vector<1x16x128xf32>
      %332 = vector.shape_cast %331 : vector<1x16x128xf32> to vector<16x128xf32>
      %333 = vector.shape_cast %324 : vector<16x128xf32> to vector<1x16x128xf32>
      tpu.vector_store %arg9[%c0_90, %c0_91, %c0_92], %333 {strides = array<i32>} : memref<1x16x128xf32, #tpu.memory_space<vmem>>, vector<1x16x128xf32>,
      %c0_93 = arith.constant 0 : index
      %c0_94 = arith.constant 0 : index
      %c0_95 = arith.constant 0 : index
      %334 = vector.load %arg10[%c0_93, %c0_94, %c0_95] : memref<1x16x128xf32, #tpu.memory_space<vmem>>, vector<1x16x128xf32>
      %335 = vector.shape_cast %334 : vector<1x16x128xf32> to vector<16x128xf32>
      %336 = vector.shape_cast %322 : vector<16x128xf32> to vector<1x16x128xf32>
      tpu.vector_store %arg10[%c0_93, %c0_94, %c0_95], %336 {strides = array<i32>} : memref<1x16x128xf32, #tpu.memory_space<vmem>>, vector<1x16x128xf32>,
    } else {
    }
    return
  }
  func.func @transform_0(%arg0: i32, %arg1: i32) -> (i32, i32, i32) {
    %c0_i32 = arith.constant 0 : i32
    %c0_i32_0 = arith.constant 0 : i32
    %c0_i32_1 = arith.constant 0 : i32
    return %c0_i32, %arg0, %c0_i32_0 : i32, i32, i32
  }
  func.func @transform_1(%arg0: i32, %arg1: i32) -> (i32, i32, i32) {
    %c0_i32 = arith.constant 0 : i32
    %c0_i32_0 = arith.constant 0 : i32
    return %arg1, %arg0, %c0_i32 : i32, i32, i32
  }
  func.func @transform_2(%arg0: i32, %arg1: i32) -> (i32, i32, i32) {
    %c0_i32 = arith.constant 0 : i32
    %c0_i32_0 = arith.constant 0 : i32
    return %arg1, %arg0, %c0_i32 : i32, i32, i32
  }
  func.func @transform_3(%arg0: i32, %arg1: i32) -> (i32, i32, i32) {
    %c0_i32 = arith.constant 0 : i32
    %c0_i32_0 = arith.constant 0 : i32
    %c0_i32_1 = arith.constant 0 : i32
    return %arg1, %c0_i32, %c0_i32_0 : i32, i32, i32
  }
  func.func @transform_4(%arg0: i32, %arg1: i32) -> (i32, i32, i32) {
    %c0_i32 = arith.constant 0 : i32
    %c0_i32_0 = arith.constant 0 : i32
    %c0_i32_1 = arith.constant 0 : i32
    return %arg1, %c0_i32, %c0_i32_0 : i32, i32, i32
  }
  func.func @transform_5(%arg0: i32, %arg1: i32) -> (i32, i32, i32) {
    %c0_i32 = arith.constant 0 : i32
    %c0_i32_0 = arith.constant 0 : i32
    %c0_i32_1 = arith.constant 0 : i32
    return %arg1, %c0_i32, %c0_i32_0 : i32, i32, i32
  }
  func.func @transform_6(%arg0: i32, %arg1: i32) -> (i32, i32, i32) {
    %c0_i32 = arith.constant 0 : i32
    %c0_i32_0 = arith.constant 0 : i32
    %c0_i32_1 = arith.constant 0 : i32
    return %c0_i32, %arg0, %c0_i32_0 : i32, i32, i32
  }
  func.func @transform_7(%arg0: i32, %arg1: i32) -> (i32, i32, i32) {
    %c0_i32 = arith.constant 0 : i32
    %c0_i32_0 = arith.constant 0 : i32
    return %arg1, %arg0, %c0_i32 : i32, i32, i32
  }
  func.func @transform_8(%arg0: i32, %arg1: i32) -> (i32, i32, i32) {
    %c0_i32 = arith.constant 0 : i32
    %c0_i32_0 = arith.constant 0 : i32
    return %arg1, %arg0, %c0_i32 : i32, i32, i32
  }
}

module attributes {stable_mosaic.version = 11 : i64} {
  func.func @fc_kernel(%arg0: i32, %arg1: i32, %arg2: memref<128x128xbf16, #tpu.memory_space<vmem>>, %arg3: memref<128x128xbf16, #tpu.memory_space<vmem>>, %arg4: memref<1x128xf32, #tpu.memory_space<vmem>>, %arg5: memref<128x128xf32, #tpu.memory_space<vmem>>) attributes {dimension_semantics = [#tpu.dimension_semantics<parallel>, #tpu.dimension_semantics<parallel>], iteration_bounds = array<i64: 1, 1>, scalar_prefetch = 0 : i64, scratch_operands = 0 : i64, tpu.core_type = #tpu.core_type<tc>, window_params = [{transform_indices = @transform_0, window_bounds = array<i64: 128, 128>}, {transform_indices = @transform_1, window_bounds = array<i64: 128, 128>}, {transform_indices = @transform_2, window_bounds = array<i64: 1, 128>}, {transform_indices = @transform_3, window_bounds = array<i64: 128, 128>}]} {
    %c0 = arith.constant 0 : index
    %c0_0 = arith.constant 0 : index
    %0 = vector.load %arg2[%c0, %c0_0] : memref<128x128xbf16, #tpu.memory_space<vmem>>, vector<128x128xbf16>
    %c0_1 = arith.constant 0 : index
    %c0_2 = arith.constant 0 : index
    %1 = vector.load %arg3[%c0_1, %c0_2] : memref<128x128xbf16, #tpu.memory_space<vmem>>, vector<128x128xbf16>
    %cst = arith.constant dense<0.000000e+00> : vector<128x128xf32>
    %2 = tpu.matmul %0, %1, %cst {dimension_numbers = #tpu.dot_dimension_numbers<[1], [0], [0], [1], [0, 0, 1, 1], [], []>} : vector<128x128xbf16>, vector<128x128xbf16>, vector<128x128xf32> -> vector<128x128xf32>
    %c0_3 = arith.constant 0 : index
    %c0_4 = arith.constant 0 : index
    %3 = vector.load %arg4[%c0_3, %c0_4] : memref<1x128xf32, #tpu.memory_space<vmem>>, vector<1x128xf32>
    %4 = vector.broadcast %3 : vector<1x128xf32> to vector<128x128xf32>
    %5 = arith.addf %2, %4 : vector<128x128xf32>
    %c0_5 = arith.constant 0 : index
    %c0_6 = arith.constant 0 : index
    %6 = vector.load %arg5[%c0_5, %c0_6] : memref<128x128xf32, #tpu.memory_space<vmem>>, vector<128x128xf32>
    tpu.vector_store %arg5[%c0_5, %c0_6], %5 {strides = array<i32>} : memref<128x128xf32, #tpu.memory_space<vmem>>, vector<128x128xf32>,
    return
  }
  func.func @transform_0(%arg0: i32, %arg1: i32) -> (i32, i32) {
    %c0_i32 = arith.constant 0 : i32
    %c0_i32_0 = arith.constant 0 : i32
    return %arg0, %c0_i32 : i32, i32
  }
  func.func @transform_1(%arg0: i32, %arg1: i32) -> (i32, i32) {
    %c0_i32 = arith.constant 0 : i32
    %c0_i32_0 = arith.constant 0 : i32
    return %c0_i32, %arg1 : i32, i32
  }
  func.func @transform_2(%arg0: i32, %arg1: i32) -> (i32, i32) {
    %c0_i32 = arith.constant 0 : i32
    %c0_i32_0 = arith.constant 0 : i32
    return %c0_i32, %arg1 : i32, i32
  }
  func.func @transform_3(%arg0: i32, %arg1: i32) -> (i32, i32) {
    %c0_i32 = arith.constant 0 : i32
    return %arg0, %arg1 : i32, i32
  }
}

</mosaic_0001>

<llo_original>
// kernel: mamba_model_forward.3
$region0: #{mamba_model_forward.3}
  #allocation0 [shape = 'u32[]', space=smem, size = 0x4, offset = 0x4, fixed_abs, tag = 'smem constant byte address 0x4 - core index']
  #allocation1 [shape = 'u32[144,128]{1,0:T(1,128)}', space=vmem, size = 0x12000, scoped, tag = 'internal scratch']
  %s0 = inlined_call_operand.vmem [shape: bf16[128,128], index: 0, kind: input, shape index: {}]
  %s1 = inlined_call_operand.vmem [shape: bf16[128,128], index: 1, kind: input, shape index: {}]
  %s2 = inlined_call_operand.vmem [shape: f32[1,128], index: 2, kind: input, shape index: {}]
  %s3 = inlined_call_operand.vmem [shape: f32[128,128], index: 3, kind: output, shape index: {}]
  %s4 = sld [smem:[#allocation0]]
  $region22: #{mamba_model_forward.3} parent=0
    _
  %s6 = ssub.s32 1, %s4
  %s7 = scalar_select 0, %s6, %s4
  // Predicated region
  $region2: #{mamba_model_forward.3} parent=0 // pred_check
    _
  $region3: #{mamba_model_forward.3} parent=0 // pred_check_branch
    %9 = sbr.rel (0) target = $region5
  $region4: #{mamba_model_forward.3} parent=0 // pred_region
    _
  $region5: #{mamba_model_forward.3} parent=0 // pred_fallthru
    _
  // Predicated region
  $region6: #{mamba_model_forward.3} parent=0 // pred_check
    _
  $region7: #{mamba_model_forward.3} parent=0 // pred_check_branch
    %11 = sbr.rel (0) target = $region9
  $region8: #{mamba_model_forward.3} parent=0 // pred_region
    _
  $region9: #{mamba_model_forward.3} parent=0 // pred_fallthru
    _
  // Predicated region
  $region10: #{mamba_model_forward.3} parent=0 // pred_check
    _
  $region11: #{mamba_model_forward.3} parent=0 // pred_check_branch
    %13 = sbr.rel (0) target = $region13
  $region12: #{mamba_model_forward.3} parent=0 // pred_region
    _
  $region13: #{mamba_model_forward.3} parent=0 // pred_fallthru
    _
  %v15 = vld [vmem:[%s0] sm:$0xf]
  %v16 = vld [vmem:[%s0 + $0x4] sm:$0xf]
  %v17 = vld [vmem:[%s0 + $0x8] sm:$0xf]
  %v18 = vld [vmem:[%s0 + $0xc] sm:$0xf]
  %v19 = vld [vmem:[%s0 + $0x10] sm:$0xf]
  %v20 = vld [vmem:[%s0 + $0x14] sm:$0xf]
  %v21 = vld [vmem:[%s0 + $0x18] sm:$0xf]
  %v22 = vld [vmem:[%s0 + $0x1c] sm:$0xf]
  %v23 = vld [vmem:[%s0 + $0x20] sm:$0xf]
  %v24 = vld [vmem:[%s0 + $0x24] sm:$0xf]
  %v25 = vld [vmem:[%s0 + $0x28] sm:$0xf]
  %v26 = vld [vmem:[%s0 + $0x2c] sm:$0xf]
  %v27 = vld [vmem:[%s0 + $0x30] sm:$0xf]
  %v28 = vld [vmem:[%s0 + $0x34] sm:$0xf]
  %v29 = vld [vmem:[%s0 + $0x38] sm:$0xf]
  %v30 = vld [vmem:[%s0 + $0x3c] sm:$0xf]
  %v31 = vld [vmem:[%s1] sm:$0xf]
  %v32 = vld [vmem:[%s1 + $0x4] sm:$0xf]
  %v33 = vld [vmem:[%s1 + $0x8] sm:$0xf]
  %v34 = vld [vmem:[%s1 + $0xc] sm:$0xf]
  %v35 = vld [vmem:[%s1 + $0x10] sm:$0xf]
  %v36 = vld [vmem:[%s1 + $0x14] sm:$0xf]
  %v37 = vld [vmem:[%s1 + $0x18] sm:$0xf]
  %v38 = vld [vmem:[%s1 + $0x1c] sm:$0xf]
  %v39 = vld [vmem:[%s1 + $0x20] sm:$0xf]
  %v40 = vld [vmem:[%s1 + $0x24] sm:$0xf]
  %v41 = vld [vmem:[%s1 + $0x28] sm:$0xf]
  %v42 = vld [vmem:[%s1 + $0x2c] sm:$0xf]
  %v43 = vld [vmem:[%s1 + $0x30] sm:$0xf]
  %v44 = vld [vmem:[%s1 + $0x34] sm:$0xf]
  %v45 = vld [vmem:[%s1 + $0x38] sm:$0xf]
  %v46 = vld [vmem:[%s1 + $0x3c] sm:$0xf]
  %v47 = vld [vmem:[%s2] sm:$0x1]
  %v49 = vlaneseq
  %v50 = vshrl.u32 %v49, 7
  %v51 = vsub.s32 0, %v50
  %v52 = vrot.slane %v47, %v51
  %v70 = vunpack.c.l.b16 %v15
  %v71 = vunpack.c.l.b16 %v16
  %v72 = vunpack.c.l.b16 %v17
  %v73 = vunpack.c.l.b16 %v18
  %v74 = vunpack.c.l.b16 %v19
  %v75 = vunpack.c.l.b16 %v20
  %v76 = vunpack.c.l.b16 %v21
  %v77 = vunpack.c.l.b16 %v22
  %v78 = vunpack.c.l.b16 %v23
  %v79 = vunpack.c.l.b16 %v24
  %v80 = vunpack.c.l.b16 %v25
  %v81 = vunpack.c.l.b16 %v26
  %v82 = vunpack.c.l.b16 %v27
  %v83 = vunpack.c.l.b16 %v28
  %v84 = vunpack.c.l.b16 %v29
  %v85 = vunpack.c.l.b16 %v30
  %v86 = vpack.c.b16 %v71, %v70
  %v87 = vpack.c.b16 %v73, %v72
  %v88 = vpack.c.b16 %v75, %v74
  %v89 = vpack.c.b16 %v77, %v76
  %v90 = vpack.c.b16 %v79, %v78
  %v91 = vpack.c.b16 %v81, %v80
  %v92 = vpack.c.b16 %v83, %v82
  %v93 = vpack.c.b16 %v85, %v84
  %v118 = vunpack.c.l.b16 %v31
  %v119 = vunpack.c.l.b16 %v32
  %v120 = vunpack.c.l.b16 %v33
  %v121 = vunpack.c.l.b16 %v34
  %v122 = vunpack.c.l.b16 %v35
  %v123 = vunpack.c.l.b16 %v36
  %v124 = vunpack.c.l.b16 %v37
  %v125 = vunpack.c.l.b16 %v38
  %v126 = vunpack.c.l.b16 %v39
  %v127 = vunpack.c.l.b16 %v40
  %v128 = vunpack.c.l.b16 %v41
  %v129 = vunpack.c.l.b16 %v42
  %v130 = vunpack.c.l.b16 %v43
  %v131 = vunpack.c.l.b16 %v44
  %v132 = vunpack.c.l.b16 %v45
  %v133 = vunpack.c.l.b16 %v46
  %v134 = vpack.c.b16 %v119, %v118
  %v135 = vpack.c.b16 %v121, %v120
  %v136 = vpack.c.b16 %v123, %v122
  %v137 = vpack.c.b16 %v125, %v124
  %v138 = vpack.c.b16 %v127, %v126
  %v139 = vpack.c.b16 %v129, %v128
  %v140 = vpack.c.b16 %v131, %v130
  %v141 = vpack.c.b16 %v133, %v132
  %150 = vmatprep.subr.bf16.mxu0 0
  %151 = vmatpush1.bf16.msra.mxu0 %v134
  %152 = vmatprep.subr.bf16.mxu0 0
  %153 = vmatpush1.bf16.msra.mxu0 %v135
  %154 = vmatprep.subr.bf16.mxu0 0
  %155 = vmatpush1.bf16.msra.mxu0 %v136
  %156 = vmatprep.subr.bf16.mxu0 0
  %157 = vmatpush1.bf16.msra.mxu0 %v137
  %158 = vmatprep.subr.bf16.mxu0 0
  %159 = vmatpush1.bf16.msra.mxu0 %v138
  %160 = vmatprep.subr.bf16.mxu0 0
  %161 = vmatpush1.bf16.msra.mxu0 %v139
  %162 = vmatprep.subr.bf16.mxu0 0
  %163 = vmatpush1.bf16.msra.mxu0 %v140
  %164 = vmatprep.subr.bf16.mxu0 0
  %165 = vmatpush1.bf16.msra.mxu0 %v141
  %166 = vmatprep.subr.bf16.mxu0 0
  %167 = vmatpush1.bf16.msra.mxu0 0
  %168 = vmatprep.subr.bf16.mxu0 0
  %169 = vmatpush1.bf16.msra.mxu0 0
  %170 = vmatprep.subr.bf16.mxu0 0
  %171 = vmatpush1.bf16.msra.mxu0 0
  %172 = vmatprep.subr.bf16.mxu0 0
  %173 = vmatpush1.bf16.msra.mxu0 0
  %174 = vmatprep.subr.bf16.mxu0 0
  %175 = vmatpush1.bf16.msra.mxu0 0
  %176 = vmatprep.subr.bf16.mxu0 0
  %177 = vmatpush1.bf16.msra.mxu0 0
  %178 = vmatprep.subr.bf16.mxu0 0
  %179 = vmatpush1.bf16.msra.mxu0 0
  %180 = vmatprep.subr.bf16.mxu0 0
  %181 = vmatpush1.bf16.msra.mxu0 0
  %182 = vmatprep.mubr.bf16.mxu0 0
  %183 = vmatmul.mubr.bf16.gmra.mrb[0].mxu0 %v86
  %v184 = vpop.f32.mrb[0].mxu0
  %v185 = vadd.f32 %v52, %v184
  %v186 = vpop.f32.mrb[0].mxu0
  %v187 = vpop.f32.mrb[0].mxu0
  %v188 = vadd.f32 %v52, %v187
  %v189 = vpop.f32.mrb[0].mxu0
  %190 = vmatprep.mubr.bf16.mxu0 0
  %191 = vmatmul.mubr.bf16.gmra.mrb[0].mxu0 %v87
  %v192 = vpop.f32.mrb[0].mxu0
  %v193 = vadd.f32 %v52, %v192
  %v194 = vpop.f32.mrb[0].mxu0
  %v195 = vpop.f32.mrb[0].mxu0
  %v196 = vadd.f32 %v52, %v195
  %v197 = vpop.f32.mrb[0].mxu0
  %198 = vmatprep.mubr.bf16.mxu0 0
  %199 = vmatmul.mubr.bf16.gmra.mrb[0].mxu0 %v88
  %v200 = vpop.f32.mrb[0].mxu0
  %v201 = vadd.f32 %v52, %v200
  %v202 = vpop.f32.mrb[0].mxu0
  %v203 = vpop.f32.mrb[0].mxu0
  %v204 = vadd.f32 %v52, %v203
  %v205 = vpop.f32.mrb[0].mxu0
  %206 = vmatprep.mubr.bf16.mxu0 0
  %207 = vmatmul.mubr.bf16.gmra.mrb[0].mxu0 %v89
  %v208 = vpop.f32.mrb[0].mxu0
  %v209 = vadd.f32 %v52, %v208
  %v210 = vpop.f32.mrb[0].mxu0
  %v211 = vpop.f32.mrb[0].mxu0
  %v212 = vadd.f32 %v52, %v211
  %v213 = vpop.f32.mrb[0].mxu0
  %214 = vmatprep.mubr.bf16.mxu0 0
  %215 = vmatmul.mubr.bf16.gmra.mrb[0].mxu0 %v90
  %v216 = vpop.f32.mrb[0].mxu0
  %v217 = vadd.f32 %v52, %v216
  %v218 = vpop.f32.mrb[0].mxu0
  %v219 = vpop.f32.mrb[0].mxu0
  %v220 = vadd.f32 %v52, %v219
  %v221 = vpop.f32.mrb[0].mxu0
  %222 = vmatprep.mubr.bf16.mxu0 0
  %223 = vmatmul.mubr.bf16.gmra.mrb[0].mxu0 %v91
  %v224 = vpop.f32.mrb[0].mxu0
  %v225 = vadd.f32 %v52, %v224
  %v226 = vpop.f32.mrb[0].mxu0
  %v227 = vpop.f32.mrb[0].mxu0
  %v228 = vadd.f32 %v52, %v227
  %v229 = vpop.f32.mrb[0].mxu0
  %230 = vmatprep.mubr.bf16.mxu0 0
  %231 = vmatmul.mubr.bf16.gmra.mrb[0].mxu0 %v92
  %v232 = vpop.f32.mrb[0].mxu0
  %v233 = vadd.f32 %v52, %v232
  %v234 = vpop.f32.mrb[0].mxu0
  %v235 = vpop.f32.mrb[0].mxu0
  %v236 = vadd.f32 %v52, %v235
  %v237 = vpop.f32.mrb[0].mxu0
  %238 = vmatprep.mubr.bf16.mxu0 0
  %239 = vmatmul.mubr.bf16.gmra.mrb[0].mxu0 %v93
  %v240 = vpop.f32.mrb[0].mxu0
  %v241 = vadd.f32 %v52, %v240
  %v242 = vpop.f32.mrb[0].mxu0
  %v243 = vpop.f32.mrb[0].mxu0
  %v244 = vadd.f32 %v52, %v243
  %v245 = vpop.f32.mrb[0].mxu0
  %246 = vdwg.mxu0
  %247 = vst [vmem:[%s3] sm:$0xff] %v185
  %248 = vst [vmem:[%s3 + $0x8] sm:$0xff] %v188
  %249 = vst [vmem:[%s3 + $0x10] sm:$0xff] %v193
  %250 = vst [vmem:[%s3 + $0x18] sm:$0xff] %v196
  %251 = vst [vmem:[%s3 + $0x20] sm:$0xff] %v201
  %252 = vst [vmem:[%s3 + $0x28] sm:$0xff] %v204
  %253 = vst [vmem:[%s3 + $0x30] sm:$0xff] %v209
  %254 = vst [vmem:[%s3 + $0x38] sm:$0xff] %v212
  %255 = vst [vmem:[%s3 + $0x40] sm:$0xff] %v217
  %256 = vst [vmem:[%s3 + $0x48] sm:$0xff] %v220
  %257 = vst [vmem:[%s3 + $0x50] sm:$0xff] %v225
  %258 = vst [vmem:[%s3 + $0x58] sm:$0xff] %v228
  %259 = vst [vmem:[%s3 + $0x60] sm:$0xff] %v233
  %260 = vst [vmem:[%s3 + $0x68] sm:$0xff] %v236
  %261 = vst [vmem:[%s3 + $0x70] sm:$0xff] %v241
  %262 = vst [vmem:[%s3 + $0x78] sm:$0xff] %v244
  // Predicated region
  $region14: #{mamba_model_forward.3} parent=0 // pred_check
    _
  $region15: #{mamba_model_forward.3} parent=0 // pred_check_branch
    %264 = sbr.rel (0) target = $region17
  $region16: #{mamba_model_forward.3} parent=0 // pred_region
    _
  $region17: #{mamba_model_forward.3} parent=0 // pred_fallthru
    _
  // Predicated region
  $region18: #{mamba_model_forward.3} parent=0 // pred_check
    _
  $region19: #{mamba_model_forward.3} parent=0 // pred_check_branch
    %266 = sbr.rel (0) target = $region21
  $region20: #{mamba_model_forward.3} parent=0 // pred_region
    _
  $region21: #{mamba_model_forward.3} parent=0 // pred_fallthru
    _

// kernel: mamba_model_forward.2
$region0: #{mamba_model_forward.2}
  #allocation0 [shape = 'u32[]', space=smem, size = 0x4, offset = 0x4, fixed_abs, tag = 'smem constant byte address 0x4 - core index']
  #allocation1 [shape = 'u32[144,128]{1,0:T(1,128)}', space=vmem, size = 0x12000, scoped, tag = 'internal scratch']
  #allocation2 [shape = 'bf16[8,16,512]{2,1,0:T(16,128)(2,1)}', space=vmem, size = 0x20000, scoped, tag = 'scratch operand']
  %s0 = inlined_call_operand.vmem [shape: bf16[8,16,128], index: 0, kind: input, shape index: {}]
  %s1 = inlined_call_operand.vmem [shape: f32[2,16,128], index: 1, kind: input, shape index: {}]
  %s2 = inlined_call_operand.vmem [shape: f32[2,16,128], index: 2, kind: input, shape index: {}]
  %s3 = inlined_call_operand.vmem [shape: bf16[2,128,512], index: 3, kind: input, shape index: {}]
  %s4 = inlined_call_operand.vmem [shape: bf16[2,128,512], index: 4, kind: input, shape index: {}]
  %s5 = inlined_call_operand.vmem [shape: f32[2,1,512], index: 5, kind: input, shape index: {}]
  %s6 = inlined_call_operand.vmem [shape: bf16[8,16,128], index: 6, kind: output, shape index: {0}]
  %s7 = inlined_call_operand.vmem [shape: f32[2,16,128], index: 7, kind: output, shape index: {1}]
  %s8 = inlined_call_operand.vmem [shape: f32[2,16,128], index: 8, kind: output, shape index: {2}]
  %9 = xla_tuple %s6, %s7, %s8
  %s10 = sld [smem:[#allocation0]]
  $region81: #{mamba_model_forward.2} parent=0
    _
  %s12 = ssub.s32 1, %s10
  %s13 = scalar_select 0, %s12, %s10
  loop: start=0, step=1, limit=4
  $region2: #{mamba_model_forward.2} parent=0 // loop_pre_header
    _
  $region3: #{mamba_model_forward.2} parent=0 // loop_header
    %s15 = sphi 0, %s19
    %p16 = scmp.ge.s32.totalorder %s15, 4
    %s22 = sphi 0, %s34
    %s23 = sphi 0, %s30
    %s24 = sphi 0, %s22
    %s25 = sphi 0, %s23
    %s26 = sphi 0, %s24
    %s27 = sphi 0, %s25
    %s37 = sphi 0, %s39
    %s40 = sphi 0, %s37
    %s41 = sphi 0, %s40
    %s57 = sphi 0, %s41
    %s65 = sphi 0, %s67
    %s68 = sphi 0, %s65
    %s69 = sphi 0, %s68
    %s85 = sphi 0, %s69
    %s93 = sphi 0, %s95
    %s96 = sphi 0, %s93
    %s97 = sphi 0, %s96
    %s113 = sphi 0, %s97
    %s119 = sphi 0, %s121
    %s122 = sphi 0, %s119
    %s123 = sphi 0, %s122
    %s139 = sphi 0, %s123
    %s145 = sphi 0, %s147
    %s148 = sphi 0, %s145
    %s149 = sphi 0, %s148
    %s165 = sphi 0, %s149
    %s171 = sphi 0, %s173
    %s174 = sphi 0, %s171
    %s175 = sphi 0, %s174
    %s191 = sphi 0, %s175
    %s197 = sphi 0, %s199
    %s200 = sphi 0, %s197
    %s201 = sphi 0, %s200
    %s217 = sphi 0, %s201
    %s225 = sphi 0, %s227
    %s228 = sphi 0, %s225
    %s229 = sphi 0, %s228
    %s245 = sphi 0, %s229
    %s253 = sphi 0, %s255
    %s256 = sphi 0, %s253
    %s257 = sphi 0, %s256
    %s273 = sphi 0, %s257
  $region4: #{mamba_model_forward.2} parent=0 // loop_header_branch
    %18 = sbr.rel (%p16) target = $region8
  $region5: #{mamba_model_forward.2} parent=0 // loop_body
    %s20 = ssub.s32 %s15, 1
    %s21 = ssub.s32 %s15, 2
    %s28 = sadd.s32 1, %s23
    %p29 = scmp.ge.s32.totalorder %s28, 2
    %s30 = scalar_select %p29, 0, %s28
    %s31 = sadd.s32 1, %s22
    %s32 = scalar_select %p29, %s31, %s22
    %p33 = scmp.ge.s32.totalorder %s32, 1
    %s34 = scalar_select %p33, 0, %s32
    %s35 = ssub.s32 %s22, %s34
    %p36 = scmp.eq.s32.totalorder %s35, 0
    %s38 = sadd.s32 %s37, 1
    %s39 = scalar_select %p36, %s37, %s38
    %p42 = pneg %p36
    %p43 = scmp.eq.s32.totalorder %s15, 1
    %p44 = por %p42, %p43
    %p45 = scmp.ne.s32.totalorder %s37, %s40
    %p46 = scmp.eq.s32.totalorder %s15, 0
    %p47 = por %p45, %p46
    %p48 = scmp.ne.s32.totalorder %s37, %s40
    %p49 = scmp.eq.s32.totalorder %s20, 1
    %p50 = por %p48, %p49
    %p51 = scmp.ne.s32.totalorder %s40, %s41
    %p52 = scmp.eq.s32.totalorder %s20, 0
    %p53 = por %p51, %p52
    %p54 = scmp.ne.s32.totalorder %s40, %s41
    %p55 = scmp.eq.s32.totalorder %s21, 1
    %p56 = por %p54, %p55
    %p58 = scmp.ne.s32.totalorder %s41, %s57
    %p59 = scmp.eq.s32.totalorder %s21, 0
    %p60 = por %p58, %p59
    %s61 = ssub.s32 %s23, %s30
    %s62 = ssub.s32 %s22, %s34
    %s63 = sor.u32 %s61, %s62
    %p64 = scmp.eq.s32.totalorder %s63, 0
    %s66 = sadd.s32 %s65, 1
    %s67 = scalar_select %p64, %s65, %s66
    %p70 = pneg %p64
    %p71 = scmp.eq.s32.totalorder %s15, 1
    %p72 = por %p70, %p71
    %p73 = scmp.ne.s32.totalorder %s65, %s68
    %p74 = scmp.eq.s32.totalorder %s15, 0
    %p75 = por %p73, %p74
    %p76 = scmp.ne.s32.totalorder %s65, %s68
    %p77 = scmp.eq.s32.totalorder %s20, 1
    %p78 = por %p76, %p77
    %p79 = scmp.ne.s32.totalorder %s68, %s69
    %p80 = scmp.eq.s32.totalorder %s20, 0
    %p81 = por %p79, %p80
    %p82 = scmp.ne.s32.totalorder %s68, %s69
    %p83 = scmp.eq.s32.totalorder %s21, 1
    %p84 = por %p82, %p83
    %p86 = scmp.ne.s32.totalorder %s69, %s85
    %p87 = scmp.eq.s32.totalorder %s21, 0
    %p88 = por %p86, %p87
    %s89 = ssub.s32 %s23, %s30
    %s90 = ssub.s32 %s22, %s34
    %s91 = sor.u32 %s89, %s90
    %p92 = scmp.eq.s32.totalorder %s91, 0
    %s94 = sadd.s32 %s93, 1
    %s95 = scalar_select %p92, %s93, %s94
    %p98 = pneg %p92
    %p99 = scmp.eq.s32.totalorder %s15, 1
    %p100 = por %p98, %p99
    %p101 = scmp.ne.s32.totalorder %s93, %s96
    %p102 = scmp.eq.s32.totalorder %s15, 0
    %p103 = por %p101, %p102
    %p104 = scmp.ne.s32.totalorder %s93, %s96
    %p105 = scmp.eq.s32.totalorder %s20, 1
    %p106 = por %p104, %p105
    %p107 = scmp.ne.s32.totalorder %s96, %s97
    %p108 = scmp.eq.s32.totalorder %s20, 0
    %p109 = por %p107, %p108
    %p110 = scmp.ne.s32.totalorder %s96, %s97
    %p111 = scmp.eq.s32.totalorder %s21, 1
    %p112 = por %p110, %p111
    %p114 = scmp.ne.s32.totalorder %s97, %s113
    %p115 = scmp.eq.s32.totalorder %s21, 0
    %p116 = por %p114, %p115
    %s117 = ssub.s32 %s23, %s30
    %p118 = scmp.eq.s32.totalorder %s117, 0
    %s120 = sadd.s32 %s119, 1
    %s121 = scalar_select %p118, %s119, %s120
    %p124 = pneg %p118
    %p125 = scmp.eq.s32.totalorder %s15, 1
    %p126 = por %p124, %p125
    %p127 = scmp.ne.s32.totalorder %s119, %s122
    %p128 = scmp.eq.s32.totalorder %s15, 0
    %p129 = por %p127, %p128
    %p130 = scmp.ne.s32.totalorder %s119, %s122
    %p131 = scmp.eq.s32.totalorder %s20, 1
    %p132 = por %p130, %p131
    %p133 = scmp.ne.s32.totalorder %s122, %s123
    %p134 = scmp.eq.s32.totalorder %s20, 0
    %p135 = por %p133, %p134
    %p136 = scmp.ne.s32.totalorder %s122, %s123
    %p137 = scmp.eq.s32.totalorder %s21, 1
    %p138 = por %p136, %p137
    %p140 = scmp.ne.s32.totalorder %s123, %s139
    %p141 = scmp.eq.s32.totalorder %s21, 0
    %p142 = por %p140, %p141
    %s143 = ssub.s32 %s23, %s30
    %p144 = scmp.eq.s32.totalorder %s143, 0
    %s146 = sadd.s32 %s145, 1
    %s147 = scalar_select %p144, %s145, %s146
    %p150 = pneg %p144
    %p151 = scmp.eq.s32.totalorder %s15, 1
    %p152 = por %p150, %p151
    %p153 = scmp.ne.s32.totalorder %s145, %s148
    %p154 = scmp.eq.s32.totalorder %s15, 0
    %p155 = por %p153, %p154
    %p156 = scmp.ne.s32.totalorder %s145, %s148
    %p157 = scmp.eq.s32.totalorder %s20, 1
    %p158 = por %p156, %p157
    %p159 = scmp.ne.s32.totalorder %s148, %s149
    %p160 = scmp.eq.s32.totalorder %s20, 0
    %p161 = por %p159, %p160
    %p162 = scmp.ne.s32.totalorder %s148, %s149
    %p163 = scmp.eq.s32.totalorder %s21, 1
    %p164 = por %p162, %p163
    %p166 = scmp.ne.s32.totalorder %s149, %s165
    %p167 = scmp.eq.s32.totalorder %s21, 0
    %p168 = por %p166, %p167
    %s169 = ssub.s32 %s23, %s30
    %p170 = scmp.eq.s32.totalorder %s169, 0
    %s172 = sadd.s32 %s171, 1
    %s173 = scalar_select %p170, %s171, %s172
    %p176 = pneg %p170
    %p177 = scmp.eq.s32.totalorder %s15, 1
    %p178 = por %p176, %p177
    %p179 = scmp.ne.s32.totalorder %s171, %s174
    %p180 = scmp.eq.s32.totalorder %s15, 0
    %p181 = por %p179, %p180
    %p182 = scmp.ne.s32.totalorder %s171, %s174
    %p183 = scmp.eq.s32.totalorder %s20, 1
    %p184 = por %p182, %p183
    %p185 = scmp.ne.s32.totalorder %s174, %s175
    %p186 = scmp.eq.s32.totalorder %s20, 0
    %p187 = por %p185, %p186
    %p188 = scmp.ne.s32.totalorder %s174, %s175
    %p189 = scmp.eq.s32.totalorder %s21, 1
    %p190 = por %p188, %p189
    %p192 = scmp.ne.s32.totalorder %s175, %s191
    %p193 = scmp.eq.s32.totalorder %s21, 0
    %p194 = por %p192, %p193
    %s195 = ssub.s32 %s22, %s34
    %p196 = scmp.eq.s32.totalorder %s195, 0
    %s198 = sadd.s32 %s197, 1
    %s199 = scalar_select %p196, %s197, %s198
    %p202 = pneg %p196
    %p203 = scmp.eq.s32.totalorder %s15, 1
    %p204 = por %p202, %p203
    %p205 = scmp.ne.s32.totalorder %s197, %s200
    %p206 = scmp.eq.s32.totalorder %s15, 0
    %p207 = por %p205, %p206
    %p208 = scmp.ne.s32.totalorder %s197, %s200
    %p209 = scmp.eq.s32.totalorder %s20, 1
    %p210 = por %p208, %p209
    %p211 = scmp.ne.s32.totalorder %s200, %s201
    %p212 = scmp.eq.s32.totalorder %s20, 0
    %p213 = por %p211, %p212
    %p214 = scmp.ne.s32.totalorder %s200, %s201
    %p215 = scmp.eq.s32.totalorder %s21, 1
    %p216 = por %p214, %p215
    %p218 = scmp.ne.s32.totalorder %s201, %s217
    %p219 = scmp.eq.s32.totalorder %s21, 0
    %p220 = por %p218, %p219
    %s221 = ssub.s32 %s23, %s30
    %s222 = ssub.s32 %s22, %s34
    %s223 = sor.u32 %s221, %s222
    %p224 = scmp.eq.s32.totalorder %s223, 0
    %s226 = sadd.s32 %s225, 1
    %s227 = scalar_select %p224, %s225, %s226
    %p230 = pneg %p224
    %p231 = scmp.eq.s32.totalorder %s15, 1
    %p232 = por %p230, %p231
    %p233 = scmp.ne.s32.totalorder %s225, %s228
    %p234 = scmp.eq.s32.totalorder %s15, 0
    %p235 = por %p233, %p234
    %p236 = scmp.ne.s32.totalorder %s225, %s228
    %p237 = scmp.eq.s32.totalorder %s20, 1
    %p238 = por %p236, %p237
    %p239 = scmp.ne.s32.totalorder %s228, %s229
    %p240 = scmp.eq.s32.totalorder %s20, 0
    %p241 = por %p239, %p240
    %p242 = scmp.ne.s32.totalorder %s228, %s229
    %p243 = scmp.eq.s32.totalorder %s21, 1
    %p244 = por %p242, %p243
    %p246 = scmp.ne.s32.totalorder %s229, %s245
    %p247 = scmp.eq.s32.totalorder %s21, 0
    %p248 = por %p246, %p247
    %s249 = ssub.s32 %s23, %s30
    %s250 = ssub.s32 %s22, %s34
    %s251 = sor.u32 %s249, %s250
    %p252 = scmp.eq.s32.totalorder %s251, 0
    %s254 = sadd.s32 %s253, 1
    %s255 = scalar_select %p252, %s253, %s254
    %p258 = pneg %p252
    %p259 = scmp.eq.s32.totalorder %s15, 1
    %p260 = por %p258, %p259
    %p261 = scmp.ne.s32.totalorder %s253, %s256
    %p262 = scmp.eq.s32.totalorder %s15, 0
    %p263 = por %p261, %p262
    %p264 = scmp.ne.s32.totalorder %s253, %s256
    %p265 = scmp.eq.s32.totalorder %s20, 1
    %p266 = por %p264, %p265
    %p267 = scmp.ne.s32.totalorder %s256, %s257
    %p268 = scmp.eq.s32.totalorder %s20, 0
    %p269 = por %p267, %p268
    %p270 = scmp.ne.s32.totalorder %s256, %s257
    %p271 = scmp.eq.s32.totalorder %s21, 1
    %p272 = por %p270, %p271
    %p274 = scmp.ne.s32.totalorder %s257, %s273
    %p275 = scmp.eq.s32.totalorder %s21, 0
    %p276 = por %p274, %p275
    %p277 = scmp.le.s32.totalorder 1, %s15
    %p278 = scmp.lt.s32.totalorder %s15, 3
    %p279 = pnand %p277, %p278
    %p280 = pneg %p279
    // Predicated region
    $region9: #{mamba_model_forward.2} parent=5 // pred_check
      _
    $region10: #{mamba_model_forward.2} parent=5 // pred_check_branch
      %282 = sbr.rel (%p279) target = $region12
    $region11: #{mamba_model_forward.2} parent=5 // pred_region
      %s283 = ssub.s32 %s15, 1
      // Predicated region
      $region13: #{mamba_model_forward.2} parent=11 // pred_check
        %p284 = pneg %p53
      $region14: #{mamba_model_forward.2} parent=11 // pred_check_branch
        %286 = sbr.rel (%p284) target = $region16
      $region15: #{mamba_model_forward.2} parent=11 // pred_region
        %s287 = smul.u32 2, %s24
        %p288 = scmp.lt.s32.totalorder %s287, 1
        %s289 = scalar_select %p288, %s287, 1
        %s290 = smul.addr %s289, 4
        %s291 = scalar_lea.vmem %s0, %s290
        %s292 = smul.u32 2, %s24
      $region16: #{mamba_model_forward.2} parent=11 // pred_fallthru
        _
    $region12: #{mamba_model_forward.2} parent=5 // pred_fallthru
      _
    %p293 = scmp.lt.s32.totalorder %s15, 2
    // Predicated region
    $region17: #{mamba_model_forward.2} parent=5 // pred_check
      %p294 = pneg %p293
    $region18: #{mamba_model_forward.2} parent=5 // pred_check_branch
      %296 = sbr.rel (%p294) target = $region20
    $region19: #{mamba_model_forward.2} parent=5 // pred_region
      // Predicated region
      $region21: #{mamba_model_forward.2} parent=19 // pred_check
        %p297 = pneg %p75
      $region22: #{mamba_model_forward.2} parent=19 // pred_check_branch
        %299 = sbr.rel (%p297) target = $region24
      $region23: #{mamba_model_forward.2} parent=19 // pred_region
        %s300 = smul.u32 2, %s22
        %p301 = scmp.lt.s32.totalorder %s23, 1
        %s302 = scalar_select %p301, %s23, 1
        %p303 = scmp.lt.s32.totalorder %s300, 1
        %s304 = scalar_select %p303, %s300, 1
        %s305 = smul.addr %s302, 2
        %s306 = sadd.s32 %s304, %s305
        %s307 = smul.addr %s306, 8
        %s308 = scalar_lea.vmem %s1, %s307
        %s309 = smul.u32 2, %s22
      $region24: #{mamba_model_forward.2} parent=19 // pred_fallthru
        _
      // Predicated region
      $region25: #{mamba_model_forward.2} parent=19 // pred_check
        %p310 = pneg %p103
      $region26: #{mamba_model_forward.2} parent=19 // pred_check_branch
        %312 = sbr.rel (%p310) target = $region28
      $region27: #{mamba_model_forward.2} parent=19 // pred_region
        %s313 = smul.u32 2, %s22
        %p314 = scmp.lt.s32.totalorder %s23, 1
        %s315 = scalar_select %p314, %s23, 1
        %p316 = scmp.lt.s32.totalorder %s313, 1
        %s317 = scalar_select %p316, %s313, 1
        %s318 = smul.addr %s315, 2
        %s319 = sadd.s32 %s317, %s318
        %s320 = smul.addr %s319, 8
        %s321 = scalar_lea.vmem %s2, %s320
        %s322 = smul.u32 2, %s22
      $region28: #{mamba_model_forward.2} parent=19 // pred_fallthru
        _
      // Predicated region
      $region29: #{mamba_model_forward.2} parent=19 // pred_check
        %p323 = pneg %p129
      $region30: #{mamba_model_forward.2} parent=19 // pred_check_branch
        %325 = sbr.rel (%p323) target = $region32
      $region31: #{mamba_model_forward.2} parent=19 // pred_region
        %p326 = scmp.lt.s32.totalorder %s23, 1
        %s327 = scalar_select %p326, %s23, 1
        %s328 = smul.addr %s327, 64
        %s329 = smul.addr %s328, 4
        %s330 = scalar_lea.vmem %s3, %s329
      $region32: #{mamba_model_forward.2} parent=19 // pred_fallthru
        _
      // Predicated region
      $region33: #{mamba_model_forward.2} parent=19 // pred_check
        %p331 = pneg %p155
      $region34: #{mamba_model_forward.2} parent=19 // pred_check_branch
        %333 = sbr.rel (%p331) target = $region36
      $region35: #{mamba_model_forward.2} parent=19 // pred_region
        %p334 = scmp.lt.s32.totalorder %s23, 1
        %s335 = scalar_select %p334, %s23, 1
        %s336 = smul.addr %s335, 64
        %s337 = smul.addr %s336, 4
        %s338 = scalar_lea.vmem %s4, %s337
      $region36: #{mamba_model_forward.2} parent=19 // pred_fallthru
        _
      // Predicated region
      $region37: #{mamba_model_forward.2} parent=19 // pred_check
        %p339 = pneg %p181
      $region38: #{mamba_model_forward.2} parent=19 // pred_check_branch
        %341 = sbr.rel (%p339) target = $region40
      $region39: #{mamba_model_forward.2} parent=19 // pred_region
        %p342 = scmp.lt.s32.totalorder %s23, 1
        %s343 = scalar_select %p342, %s23, 1
        %s344 = smul.addr %s343, 4
        %s345 = scalar_lea.vmem %s5, %s344
      $region40: #{mamba_model_forward.2} parent=19 // pred_fallthru
        _
    $region20: #{mamba_model_forward.2} parent=5 // pred_fallthru
      _
    %p346 = scmp.le.s32.totalorder 1, %s15
    %p347 = scmp.lt.s32.totalorder %s15, 3
    %p348 = pnand %p346, %p347
    %p349 = pneg %p348
    // Predicated region
    $region41: #{mamba_model_forward.2} parent=5 // pred_check
      _
    $region42: #{mamba_model_forward.2} parent=5 // pred_check_branch
      %351 = sbr.rel (%p348) target = $region44
    $region43: #{mamba_model_forward.2} parent=5 // pred_region
      %s352 = ssub.s32 %s15, 1
      %s353 = smul.u32 2, %s24
      %p354 = scmp.lt.s32.totalorder %s353, 1
      %s355 = scalar_select %p354, %s353, 1
      %s356 = smul.addr %s355, 4
      %s357 = scalar_lea.vmem %s0, %s356
      %p358 = pneg %p53
      %p359 = pneg %p50
      %s360 = smul.u32 2, %s24
      %p361 = scmp.lt.s32.totalorder %s25, 1
      %s362 = scalar_select %p361, %s25, 1
      %p363 = scmp.lt.s32.totalorder %s360, 1
      %s364 = scalar_select %p363, %s360, 1
      %s365 = smul.addr %s362, 2
      %s366 = sadd.s32 %s364, %s365
      %s367 = smul.addr %s366, 8
      %s368 = scalar_lea.vmem %s1, %s367
      %p369 = pneg %p81
      %p370 = pneg %p78
      %s371 = smul.u32 2, %s24
      %p372 = scmp.lt.s32.totalorder %s25, 1
      %s373 = scalar_select %p372, %s25, 1
      %p374 = scmp.lt.s32.totalorder %s371, 1
      %s375 = scalar_select %p374, %s371, 1
      %s376 = smul.addr %s373, 2
      %s377 = sadd.s32 %s375, %s376
      %s378 = smul.addr %s377, 8
      %s379 = scalar_lea.vmem %s2, %s378
      %p380 = pneg %p109
      %p381 = pneg %p106
      %p382 = scmp.lt.s32.totalorder %s25, 1
      %s383 = scalar_select %p382, %s25, 1
      %s384 = smul.addr %s383, 64
      %s385 = smul.addr %s384, 4
      %s386 = scalar_lea.vmem %s3, %s385
      %p387 = pneg %p135
      %p388 = pneg %p132
      %p389 = scmp.lt.s32.totalorder %s25, 1
      %s390 = scalar_select %p389, %s25, 1
      %s391 = smul.addr %s390, 64
      %s392 = smul.addr %s391, 4
      %s393 = scalar_lea.vmem %s4, %s392
      %p394 = pneg %p161
      %p395 = pneg %p158
      %p396 = scmp.lt.s32.totalorder %s25, 1
      %s397 = scalar_select %p396, %s25, 1
      %s398 = smul.addr %s397, 4
      %s399 = scalar_lea.vmem %s5, %s398
      %p400 = pneg %p187
      %p401 = pneg %p184
      %p402 = pneg %p213
      %p403 = pneg %p210
      %s404 = smul.u32 2, %s24
      %p405 = scmp.lt.s32.totalorder %s404, 1
      %s406 = scalar_select %p405, %s404, 1
      %s407 = smul.addr %s406, 4
      %s408 = scalar_lea.vmem %s6, %s407
      %p409 = pneg %p241
      %p410 = pneg %p238
      %s411 = smul.u32 2, %s24
      %p412 = scmp.lt.s32.totalorder %s25, 1
      %s413 = scalar_select %p412, %s25, 1
      %p414 = scmp.lt.s32.totalorder %s411, 1
      %s415 = scalar_select %p414, %s411, 1
      %s416 = smul.addr %s413, 2
      %s417 = sadd.s32 %s415, %s416
      %s418 = smul.addr %s417, 8
      %s419 = scalar_lea.vmem %s7, %s418
      %p420 = pneg %p269
      %p421 = pneg %p266
      %s422 = smul.u32 2, %s24
      %p423 = scmp.lt.s32.totalorder %s25, 1
      %s424 = scalar_select %p423, %s25, 1
      %p425 = scmp.lt.s32.totalorder %s422, 1
      %s426 = scalar_select %p425, %s422, 1
      %s427 = smul.addr %s424, 2
      %s428 = sadd.s32 %s426, %s427
      %s429 = smul.addr %s428, 8
      %s430 = scalar_lea.vmem %s8, %s429
      %s431 = smul.u32 2, %s24
      %p432 = scmp.lt.s32.totalorder %s431, 1
      %s433 = scalar_select %p432, %s431, 1
      %s434 = smul.addr %s433, 4
      %s435 = scalar_lea.vmem %s0, %s434
      %s436 = smul.u32 2, %s24
      %s437 = smul.u32 2, %s24
      %p438 = scmp.lt.s32.totalorder %s25, 1
      %s439 = scalar_select %p438, %s25, 1
      %p440 = scmp.lt.s32.totalorder %s437, 1
      %s441 = scalar_select %p440, %s437, 1
      %s442 = smul.addr %s439, 2
      %s443 = sadd.s32 %s441, %s442
      %s444 = smul.addr %s443, 8
      %s445 = scalar_lea.vmem %s1, %s444
      %s446 = smul.u32 2, %s24
      %s447 = smul.u32 2, %s24
      %p448 = scmp.lt.s32.totalorder %s25, 1
      %s449 = scalar_select %p448, %s25, 1
      %p450 = scmp.lt.s32.totalorder %s447, 1
      %s451 = scalar_select %p450, %s447, 1
      %s452 = smul.addr %s449, 2
      %s453 = sadd.s32 %s451, %s452
      %s454 = smul.addr %s453, 8
      %s455 = scalar_lea.vmem %s2, %s454
      %s456 = smul.u32 2, %s24
      %p457 = scmp.lt.s32.totalorder %s25, 1
      %s458 = scalar_select %p457, %s25, 1
      %s459 = smul.addr %s458, 64
      %s460 = smul.addr %s459, 4
      %s461 = scalar_lea.vmem %s3, %s460
      %p462 = scmp.lt.s32.totalorder %s25, 1
      %s463 = scalar_select %p462, %s25, 1
      %s464 = smul.addr %s463, 64
      %s465 = smul.addr %s464, 4
      %s466 = scalar_lea.vmem %s4, %s465
      %p467 = scmp.lt.s32.totalorder %s25, 1
      %s468 = scalar_select %p467, %s25, 1
      %s469 = smul.addr %s468, 4
      %s470 = scalar_lea.vmem %s5, %s469
      %s471 = smul.u32 2, %s24
      %p472 = scmp.lt.s32.totalorder %s471, 1
      %s473 = scalar_select %p472, %s471, 1
      %s474 = smul.addr %s473, 4
      %s475 = scalar_lea.vmem %s6, %s474
      %s476 = smul.u32 2, %s24
      %s477 = smul.u32 2, %s24
      %p478 = scmp.lt.s32.totalorder %s25, 1
      %s479 = scalar_select %p478, %s25, 1
      %p480 = scmp.lt.s32.totalorder %s477, 1
      %s481 = scalar_select %p480, %s477, 1
      %s482 = smul.addr %s479, 2
      %s483 = sadd.s32 %s481, %s482
      %s484 = smul.addr %s483, 8
      %s485 = scalar_lea.vmem %s7, %s484
      %s486 = smul.u32 2, %s24
      %s487 = smul.u32 2, %s24
      %p488 = scmp.lt.s32.totalorder %s25, 1
      %s489 = scalar_select %p488, %s25, 1
      %p490 = scmp.lt.s32.totalorder %s487, 1
      %s491 = scalar_select %p490, %s487, 1
      %s492 = smul.addr %s489, 2
      %s493 = sadd.s32 %s491, %s492
      %s494 = smul.addr %s493, 8
      %s495 = scalar_lea.vmem %s8, %s494
      %s496 = smul.u32 2, %s24
      %v498 = vld [vmem:[%s466] sm:$0xff]
      %v499 = vld [vmem:[%s466 + $0x8] sm:$0xff]
      %v500 = vld [vmem:[%s466 + $0x10] sm:$0xff]
      %v501 = vld [vmem:[%s466 + $0x18] sm:$0xff]
      %v502 = vld [vmem:[%s466 + $0x20] sm:$0xff]
      %v503 = vld [vmem:[%s466 + $0x28] sm:$0xff]
      %v504 = vld [vmem:[%s466 + $0x30] sm:$0xff]
      %v505 = vld [vmem:[%s466 + $0x38] sm:$0xff]
      %v506 = vld [vmem:[%s466 + $0x40] sm:$0xff]
      %v507 = vld [vmem:[%s466 + $0x48] sm:$0xff]
      %v508 = vld [vmem:[%s466 + $0x50] sm:$0xff]
      %v509 = vld [vmem:[%s466 + $0x58] sm:$0xff]
      %v510 = vld [vmem:[%s466 + $0x60] sm:$0xff]
      %v511 = vld [vmem:[%s466 + $0x68] sm:$0xff]
      %v512 = vld [vmem:[%s466 + $0x70] sm:$0xff]
      %v513 = vld [vmem:[%s466 + $0x78] sm:$0xff]
      %v514 = vld [vmem:[%s466 + $0x80] sm:$0xff]
      %v515 = vld [vmem:[%s466 + $0x88] sm:$0xff]
      %v516 = vld [vmem:[%s466 + $0x90] sm:$0xff]
      %v517 = vld [vmem:[%s466 + $0x98] sm:$0xff]
      %v518 = vld [vmem:[%s466 + $0xa0] sm:$0xff]
      %v519 = vld [vmem:[%s466 + $0xa8] sm:$0xff]
      %v520 = vld [vmem:[%s466 + $0xb0] sm:$0xff]
      %v521 = vld [vmem:[%s466 + $0xb8] sm:$0xff]
      %v522 = vld [vmem:[%s466 + $0xc0] sm:$0xff]
      %v523 = vld [vmem:[%s466 + $0xc8] sm:$0xff]
      %v524 = vld [vmem:[%s466 + $0xd0] sm:$0xff]
      %v525 = vld [vmem:[%s466 + $0xd8] sm:$0xff]
      %v526 = vld [vmem:[%s466 + $0xe0] sm:$0xff]
      %v527 = vld [vmem:[%s466 + $0xe8] sm:$0xff]
      %v528 = vld [vmem:[%s466 + $0xf0] sm:$0xff]
      %v529 = vld [vmem:[%s466 + $0xf8] sm:$0xff]
      %v530 = vld [vmem:[%s470] sm:$0xf]
      %p531 = scmp.eq.s32.totalorder %s25, 0
      // Predicated region
      $region45: #{mamba_model_forward.2} parent=43 // pred_check
        %p532 = pneg %p531
      $region46: #{mamba_model_forward.2} parent=43 // pred_check_branch
        %534 = sbr.rel (%p532) target = $region48
      $region47: #{mamba_model_forward.2} parent=43 // pred_region
        %v535 = vld [vmem:[%s461] sm:$0xff]
        %v536 = vld [vmem:[%s461 + $0x8] sm:$0xff]
        %v537 = vld [vmem:[%s461 + $0x10] sm:$0xff]
        %v538 = vld [vmem:[%s461 + $0x18] sm:$0xff]
        %v539 = vld [vmem:[%s461 + $0x20] sm:$0xff]
        %v540 = vld [vmem:[%s461 + $0x28] sm:$0xff]
        %v541 = vld [vmem:[%s461 + $0x30] sm:$0xff]
        %v542 = vld [vmem:[%s461 + $0x38] sm:$0xff]
        %v543 = vld [vmem:[%s461 + $0x40] sm:$0xff]
        %v544 = vld [vmem:[%s461 + $0x48] sm:$0xff]
        %v545 = vld [vmem:[%s461 + $0x50] sm:$0xff]
        %v546 = vld [vmem:[%s461 + $0x58] sm:$0xff]
        %v547 = vld [vmem:[%s461 + $0x60] sm:$0xff]
        %v548 = vld [vmem:[%s461 + $0x68] sm:$0xff]
        %v549 = vld [vmem:[%s461 + $0x70] sm:$0xff]
        %v550 = vld [vmem:[%s461 + $0x78] sm:$0xff]
        %v551 = vld [vmem:[%s461 + $0x80] sm:$0xff]
        %v552 = vld [vmem:[%s461 + $0x88] sm:$0xff]
        %v553 = vld [vmem:[%s461 + $0x90] sm:$0xff]
        %v554 = vld [vmem:[%s461 + $0x98] sm:$0xff]
        %v555 = vld [vmem:[%s461 + $0xa0] sm:$0xff]
        %v556 = vld [vmem:[%s461 + $0xa8] sm:$0xff]
        %v557 = vld [vmem:[%s461 + $0xb0] sm:$0xff]
        %v558 = vld [vmem:[%s461 + $0xb8] sm:$0xff]
        %v559 = vld [vmem:[%s461 + $0xc0] sm:$0xff]
        %v560 = vld [vmem:[%s461 + $0xc8] sm:$0xff]
        %v561 = vld [vmem:[%s461 + $0xd0] sm:$0xff]
        %v562 = vld [vmem:[%s461 + $0xd8] sm:$0xff]
        %v563 = vld [vmem:[%s461 + $0xe0] sm:$0xff]
        %v564 = vld [vmem:[%s461 + $0xe8] sm:$0xff]
        %v565 = vld [vmem:[%s461 + $0xf0] sm:$0xff]
        %v566 = vld [vmem:[%s461 + $0xf8] sm:$0xff]
        %v567 = vld [vmem:[%s445] sm:$0xff]
        %v568 = vld [vmem:[%s445 + $0x8] sm:$0xff]
        %v569 = vld [vmem:[%s455] sm:$0xff]
        %v570 = vld [vmem:[%s455 + $0x8] sm:$0xff]
        %s571 = smul.u32 0, 2
        %s572 = smul.addr %s571, 4
        %s573 = scalar_lea.vmem %s435, %s572
        %v574 = vld [vmem:[%s573] sm:$0xf]
        %v575 = vld [vmem:[%s573 + $0x4] sm:$0xf]
        %v576 = vld [vmem:[%s573 + $0x8] sm:$0xf]
        %v577 = vld [vmem:[%s573 + $0xc] sm:$0xf]
        %v578 = vld [vmem:[%s573 + $0x10] sm:$0xf]
        %v579 = vld [vmem:[%s573 + $0x14] sm:$0xf]
        %v580 = vld [vmem:[%s573 + $0x18] sm:$0xf]
        %v581 = vld [vmem:[%s573 + $0x1c] sm:$0xf]
        %v582 = vld [vmem:[%s573 + $0x20] sm:$0xf]
        %v583 = vld [vmem:[%s573 + $0x24] sm:$0xf]
        %v584 = vld [vmem:[%s573 + $0x28] sm:$0xf]
        %v585 = vld [vmem:[%s573 + $0x2c] sm:$0xf]
        %v586 = vld [vmem:[%s573 + $0x30] sm:$0xf]
        %v587 = vld [vmem:[%s573 + $0x34] sm:$0xf]
        %v588 = vld [vmem:[%s573 + $0x38] sm:$0xf]
        %v589 = vld [vmem:[%s573 + $0x3c] sm:$0xf]
        %v591 = vlaneseq
        %v592 = vshrl.u32 %v591, 7
        %v593 = vsub.s32 0, %v592
        %v594 = vrot.slane %v530, %v593
        %v595 = vlaneseq
        %v596 = vshrl.u32 %v595, 7
        %v597 = vsub.s32 1, %v596
        %v598 = vrot.slane %v530, %v597
        %v599 = vlaneseq
        %v600 = vshrl.u32 %v599, 7
        %v601 = vsub.s32 2, %v600
        %v602 = vrot.slane %v530, %v601
        %v603 = vlaneseq
        %v604 = vshrl.u32 %v603, 7
        %v605 = vsub.s32 3, %v604
        %v606 = vrot.slane %v530, %v605
        %v627 = vunpack.c.l.b16 %v574
        %v628 = vunpack.c.l.b16 %v575
        %v629 = vunpack.c.l.b16 %v576
        %v630 = vunpack.c.l.b16 %v577
        %v631 = vunpack.c.l.b16 %v578
        %v632 = vunpack.c.l.b16 %v579
        %v633 = vunpack.c.l.b16 %v580
        %v634 = vunpack.c.l.b16 %v581
        %v635 = vunpack.c.l.b16 %v582
        %v636 = vunpack.c.l.b16 %v583
        %v637 = vunpack.c.l.b16 %v584
        %v638 = vunpack.c.l.b16 %v585
        %v639 = vunpack.c.l.b16 %v586
        %v640 = vunpack.c.l.b16 %v587
        %v641 = vunpack.c.l.b16 %v588
        %v642 = vunpack.c.l.b16 %v589
        %v643 = vpack.c.b16 %v628, %v627
        %v644 = vpack.c.b16 %v630, %v629
        %v645 = vpack.c.b16 %v632, %v631
        %v646 = vpack.c.b16 %v634, %v633
        %v647 = vpack.c.b16 %v636, %v635
        %v648 = vpack.c.b16 %v638, %v637
        %v649 = vpack.c.b16 %v640, %v639
        %v650 = vpack.c.b16 %v642, %v641
        %v691 = vunpack.c.l.b16 %v535
        %v692 = vunpack.c.h.b16 %v535
        %v693 = vunpack.c.l.b16 %v536
        %v694 = vunpack.c.h.b16 %v536
        %v695 = vunpack.c.l.b16 %v537
        %v696 = vunpack.c.h.b16 %v537
        %v697 = vunpack.c.l.b16 %v538
        %v698 = vunpack.c.h.b16 %v538
        %v699 = vunpack.c.l.b16 %v539
        %v700 = vunpack.c.h.b16 %v539
        %v701 = vunpack.c.l.b16 %v540
        %v702 = vunpack.c.h.b16 %v540
        %v703 = vunpack.c.l.b16 %v541
        %v704 = vunpack.c.h.b16 %v541
        %v705 = vunpack.c.l.b16 %v542
        %v706 = vunpack.c.h.b16 %v542
        %v707 = vunpack.c.l.b16 %v543
        %v708 = vunpack.c.h.b16 %v543
        %v709 = vunpack.c.l.b16 %v544
        %v710 = vunpack.c.h.b16 %v544
        %v711 = vunpack.c.l.b16 %v545
        %v712 = vunpack.c.h.b16 %v545
        %v713 = vunpack.c.l.b16 %v546
        %v714 = vunpack.c.h.b16 %v546
        %v715 = vunpack.c.l.b16 %v547
        %v716 = vunpack.c.h.b16 %v547
        %v717 = vunpack.c.l.b16 %v548
        %v718 = vunpack.c.h.b16 %v548
        %v719 = vunpack.c.l.b16 %v549
        %v720 = vunpack.c.h.b16 %v549
        %v721 = vunpack.c.l.b16 %v550
        %v722 = vunpack.c.h.b16 %v550
        %v723 = vunpack.c.l.b16 %v551
        %v724 = vunpack.c.h.b16 %v551
        %v725 = vunpack.c.l.b16 %v552
        %v726 = vunpack.c.h.b16 %v552
        %v727 = vunpack.c.l.b16 %v553
        %v728 = vunpack.c.h.b16 %v553
        %v729 = vunpack.c.l.b16 %v554
        %v730 = vunpack.c.h.b16 %v554
        %v731 = vunpack.c.l.b16 %v555
        %v732 = vunpack.c.h.b16 %v555
        %v733 = vunpack.c.l.b16 %v556
        %v734 = vunpack.c.h.b16 %v556
        %v735 = vunpack.c.l.b16 %v557
        %v736 = vunpack.c.h.b16 %v557
        %v737 = vunpack.c.l.b16 %v558
        %v738 = vunpack.c.h.b16 %v558
        %v739 = vunpack.c.l.b16 %v559
        %v740 = vunpack.c.h.b16 %v559
        %v741 = vunpack.c.l.b16 %v560
        %v742 = vunpack.c.h.b16 %v560
        %v743 = vunpack.c.l.b16 %v561
        %v744 = vunpack.c.h.b16 %v561
        %v745 = vunpack.c.l.b16 %v562
        %v746 = vunpack.c.h.b16 %v562
        %v747 = vunpack.c.l.b16 %v563
        %v748 = vunpack.c.h.b16 %v563
        %v749 = vunpack.c.l.b16 %v564
        %v750 = vunpack.c.h.b16 %v564
        %v751 = vunpack.c.l.b16 %v565
        %v752 = vunpack.c.h.b16 %v565
        %v753 = vunpack.c.l.b16 %v566
        %v754 = vunpack.c.h.b16 %v566
        %v755 = vpack.c.b16 %v695, %v691
        %v756 = vpack.c.b16 %v696, %v692
        %v757 = vpack.c.b16 %v697, %v693
        %v758 = vpack.c.b16 %v698, %v694
        %v759 = vpack.c.b16 %v703, %v699
        %v760 = vpack.c.b16 %v704, %v700
        %v761 = vpack.c.b16 %v705, %v701
        %v762 = vpack.c.b16 %v706, %v702
        %v763 = vpack.c.b16 %v711, %v707
        %v764 = vpack.c.b16 %v712, %v708
        %v765 = vpack.c.b16 %v713, %v709
        %v766 = vpack.c.b16 %v714, %v710
        %v767 = vpack.c.b16 %v719, %v715
        %v768 = vpack.c.b16 %v720, %v716
        %v769 = vpack.c.b16 %v721, %v717
        %v770 = vpack.c.b16 %v722, %v718
        %v771 = vpack.c.b16 %v727, %v723
        %v772 = vpack.c.b16 %v728, %v724
        %v773 = vpack.c.b16 %v729, %v725
        %v774 = vpack.c.b16 %v730, %v726
        %v775 = vpack.c.b16 %v735, %v731
        %v776 = vpack.c.b16 %v736, %v732
        %v777 = vpack.c.b16 %v737, %v733
        %v778 = vpack.c.b16 %v738, %v734
        %v779 = vpack.c.b16 %v743, %v739
        %v780 = vpack.c.b16 %v744, %v740
        %v781 = vpack.c.b16 %v745, %v741
        %v782 = vpack.c.b16 %v746, %v742
        %v783 = vpack.c.b16 %v751, %v747
        %v784 = vpack.c.b16 %v752, %v748
        %v785 = vpack.c.b16 %v753, %v749
        %v786 = vpack.c.b16 %v754, %v750
        %819 = vmatprep.subr.bf16.mxu0 %v756
        %820 = vmatpush1.bf16.msra.mxu0 %v755
        %821 = vmatprep.subr.bf16.mxu0 %v760
        %822 = vmatpush1.bf16.msra.mxu0 %v759
        %823 = vmatprep.subr.bf16.mxu0 %v764
        %824 = vmatpush1.bf16.msra.mxu0 %v763
        %825 = vmatprep.subr.bf16.mxu0 %v768
        %826 = vmatpush1.bf16.msra.mxu0 %v767
        %827 = vmatprep.subr.bf16.mxu0 %v772
        %828 = vmatpush1.bf16.msra.mxu0 %v771
        %829 = vmatprep.subr.bf16.mxu0 %v776
        %830 = vmatpush1.bf16.msra.mxu0 %v775
        %831 = vmatprep.subr.bf16.mxu0 %v780
        %832 = vmatpush1.bf16.msra.mxu0 %v779
        %833 = vmatprep.subr.bf16.mxu0 %v784
        %834 = vmatpush1.bf16.msra.mxu0 %v783
        %835 = vmatprep.subr.bf16.mxu0 0
        %836 = vmatpush1.bf16.msra.mxu0 0
        %837 = vmatprep.subr.bf16.mxu0 0
        %838 = vmatpush1.bf16.msra.mxu0 0
        %839 = vmatprep.subr.bf16.mxu0 0
        %840 = vmatpush1.bf16.msra.mxu0 0
        %841 = vmatprep.subr.bf16.mxu0 0
        %842 = vmatpush1.bf16.msra.mxu0 0
        %843 = vmatprep.subr.bf16.mxu0 0
        %844 = vmatpush1.bf16.msra.mxu0 0
        %845 = vmatprep.subr.bf16.mxu0 0
        %846 = vmatpush1.bf16.msra.mxu0 0
        %847 = vmatprep.subr.bf16.mxu0 0
        %848 = vmatpush1.bf16.msra.mxu0 0
        %849 = vmatprep.subr.bf16.mxu0 0
        %850 = vmatpush1.bf16.msra.mxu0 0
        %851 = vmatprep.mubr.bf16.mxu0 0
        %852 = vmatmul.mubr.bf16.gmra.mrb[0].mxu0 %v643
        %v853 = vpop.f32.mrb[0].mxu0
        %v854 = vadd.f32 %v594, %v853
        %v855 = vpop.f32.mrb[0].mxu0
        %v856 = vadd.f32 %v598, %v855
        %v857 = vpop.f32.mrb[0].mxu0
        %v858 = vadd.f32 %v594, %v857
        %v859 = vpop.f32.mrb[0].mxu0
        %v860 = vadd.f32 %v598, %v859
        %861 = vmatprep.mubr.bf16.mxu0 0
        %862 = vmatmul.mubr.bf16.gmra.mrb[0].mxu0 %v644
        %v863 = vpop.f32.mrb[0].mxu0
        %v864 = vadd.f32 %v594, %v863
        %v865 = vpop.f32.mrb[0].mxu0
        %v866 = vadd.f32 %v598, %v865
        %v867 = vpop.f32.mrb[0].mxu0
        %v868 = vadd.f32 %v594, %v867
        %v869 = vpop.f32.mrb[0].mxu0
        %v870 = vadd.f32 %v598, %v869
        %871 = vmatprep.mubr.bf16.mxu0 0
        %872 = vmatmul.mubr.bf16.gmra.mrb[0].mxu0 %v645
        %v873 = vpop.f32.mrb[0].mxu0
        %v874 = vadd.f32 %v594, %v873
        %v875 = vpop.f32.mrb[0].mxu0
        %v876 = vadd.f32 %v598, %v875
        %v877 = vpop.f32.mrb[0].mxu0
        %v878 = vadd.f32 %v594, %v877
        %v879 = vpop.f32.mrb[0].mxu0
        %v880 = vadd.f32 %v598, %v879
        %881 = vmatprep.mubr.bf16.mxu0 0
        %882 = vmatmul.mubr.bf16.gmra.mrb[0].mxu0 %v646
        %v883 = vpop.f32.mrb[0].mxu0
        %v884 = vadd.f32 %v594, %v883
        %v885 = vpop.f32.mrb[0].mxu0
        %v886 = vadd.f32 %v598, %v885
        %v887 = vpop.f32.mrb[0].mxu0
        %v888 = vadd.f32 %v594, %v887
        %v889 = vpop.f32.mrb[0].mxu0
        %v890 = vadd.f32 %v598, %v889
        %891 = vmatprep.mubr.bf16.mxu0 0
        %892 = vmatmul.mubr.bf16.gmra.mrb[0].mxu0 %v647
        %v893 = vpop.f32.mrb[0].mxu0
        %v894 = vadd.f32 %v594, %v893
        %v895 = vpop.f32.mrb[0].mxu0
        %v896 = vadd.f32 %v598, %v895
        %v897 = vpop.f32.mrb[0].mxu0
        %v898 = vadd.f32 %v594, %v897
        %v899 = vpop.f32.mrb[0].mxu0
        %v900 = vadd.f32 %v598, %v899
        %901 = vmatprep.mubr.bf16.mxu0 0
        %902 = vmatmul.mubr.bf16.gmra.mrb[0].mxu0 %v648
        %v903 = vpop.f32.mrb[0].mxu0
        %v904 = vadd.f32 %v594, %v903
        %v905 = vpop.f32.mrb[0].mxu0
        %v906 = vadd.f32 %v598, %v905
        %v907 = vpop.f32.mrb[0].mxu0
        %v908 = vadd.f32 %v594, %v907
        %v909 = vpop.f32.mrb[0].mxu0
        %v910 = vadd.f32 %v598, %v909
        %911 = vmatprep.mubr.bf16.mxu0 0
        %912 = vmatmul.mubr.bf16.gmra.mrb[0].mxu0 %v649
        %v913 = vpop.f32.mrb[0].mxu0
        %v914 = vadd.f32 %v594, %v913
        %v915 = vpop.f32.mrb[0].mxu0
        %v916 = vadd.f32 %v598, %v915
        %v917 = vpop.f32.mrb[0].mxu0
        %v918 = vadd.f32 %v594, %v917
        %v919 = vpop.f32.mrb[0].mxu0
        %v920 = vadd.f32 %v598, %v919
        %921 = vmatprep.mubr.bf16.mxu0 0
        %922 = vmatmul.mubr.bf16.gmra.mrb[0].mxu0 %v650
        %v923 = vpop.f32.mrb[0].mxu0
        %v924 = vadd.f32 %v594, %v923
        %v925 = vpop.f32.mrb[0].mxu0
        %v926 = vadd.f32 %v598, %v925
        %v927 = vpop.f32.mrb[0].mxu0
        %v928 = vadd.f32 %v594, %v927
        %v929 = vpop.f32.mrb[0].mxu0
        %v930 = vadd.f32 %v598, %v929
        %931 = vdwg.mxu0
        %932 = vmatprep.subr.bf16.mxu0 %v758
        %933 = vmatpush1.bf16.msra.mxu0 %v757
        %934 = vmatprep.subr.bf16.mxu0 %v762
        %935 = vmatpush1.bf16.msra.mxu0 %v761
        %936 = vmatprep.subr.bf16.mxu0 %v766
        %937 = vmatpush1.bf16.msra.mxu0 %v765
        %938 = vmatprep.subr.bf16.mxu0 %v770
        %939 = vmatpush1.bf16.msra.mxu0 %v769
        %940 = vmatprep.subr.bf16.mxu0 %v774
        %941 = vmatpush1.bf16.msra.mxu0 %v773
        %942 = vmatprep.subr.bf16.mxu0 %v778
        %943 = vmatpush1.bf16.msra.mxu0 %v777
        %944 = vmatprep.subr.bf16.mxu0 %v782
        %945 = vmatpush1.bf16.msra.mxu0 %v781
        %946 = vmatprep.subr.bf16.mxu0 %v786
        %947 = vmatpush1.bf16.msra.mxu0 %v785
        %948 = vmatprep.subr.bf16.mxu0 0
        %949 = vmatpush1.bf16.msra.mxu0 0
        %950 = vmatprep.subr.bf16.mxu0 0
        %951 = vmatpush1.bf16.msra.mxu0 0
        %952 = vmatprep.subr.bf16.mxu0 0
        %953 = vmatpush1.bf16.msra.mxu0 0
        %954 = vmatprep.subr.bf16.mxu0 0
        %955 = vmatpush1.bf16.msra.mxu0 0
        %956 = vmatprep.subr.bf16.mxu0 0
        %957 = vmatpush1.bf16.msra.mxu0 0
        %958 = vmatprep.subr.bf16.mxu0 0
        %959 = vmatpush1.bf16.msra.mxu0 0
        %960 = vmatprep.subr.bf16.mxu0 0
        %961 = vmatpush1.bf16.msra.mxu0 0
        %962 = vmatprep.subr.bf16.mxu0 0
        %963 = vmatpush1.bf16.msra.mxu0 0
        %964 = vmatprep.mubr.bf16.mxu0 0
        %965 = vmatmul.mubr.bf16.gmra.mrb[0].mxu0 %v643
        %v966 = vpop.f32.mrb[0].mxu0
        %v967 = vadd.f32 %v602, %v966
        %v968 = vpop.f32.mrb[0].mxu0
        %v969 = vadd.f32 %v606, %v968
        %v970 = vpop.f32.mrb[0].mxu0
        %v971 = vadd.f32 %v602, %v970
        %v972 = vpop.f32.mrb[0].mxu0
        %v973 = vadd.f32 %v606, %v972
        %974 = vmatprep.mubr.bf16.mxu0 0
        %975 = vmatmul.mubr.bf16.gmra.mrb[0].mxu0 %v644
        %v976 = vpop.f32.mrb[0].mxu0
        %v977 = vadd.f32 %v602, %v976
        %v978 = vpop.f32.mrb[0].mxu0
        %v979 = vadd.f32 %v606, %v978
        %v980 = vpop.f32.mrb[0].mxu0
        %v981 = vadd.f32 %v602, %v980
        %v982 = vpop.f32.mrb[0].mxu0
        %v983 = vadd.f32 %v606, %v982
        %984 = vmatprep.mubr.bf16.mxu0 0
        %985 = vmatmul.mubr.bf16.gmra.mrb[0].mxu0 %v645
        %v986 = vpop.f32.mrb[0].mxu0
        %v987 = vadd.f32 %v602, %v986
        %v988 = vpop.f32.mrb[0].mxu0
        %v989 = vadd.f32 %v606, %v988
        %v990 = vpop.f32.mrb[0].mxu0
        %v991 = vadd.f32 %v602, %v990
        %v992 = vpop.f32.mrb[0].mxu0
        %v993 = vadd.f32 %v606, %v992
        %994 = vmatprep.mubr.bf16.mxu0 0
        %995 = vmatmul.mubr.bf16.gmra.mrb[0].mxu0 %v646
        %v996 = vpop.f32.mrb[0].mxu0
        %v997 = vadd.f32 %v602, %v996
        %v998 = vpop.f32.mrb[0].mxu0
        %v999 = vadd.f32 %v606, %v998
        %v1000 = vpop.f32.mrb[0].mxu0
        %v1001 = vadd.f32 %v602, %v1000
        %v1002 = vpop.f32.mrb[0].mxu0
        %v1003 = vadd.f32 %v606, %v1002
        %1004 = vmatprep.mubr.bf16.mxu0 0
        %1005 = vmatmul.mubr.bf16.gmra.mrb[0].mxu0 %v647
        %v1006 = vpop.f32.mrb[0].mxu0
        %v1007 = vadd.f32 %v602, %v1006
        %v1008 = vpop.f32.mrb[0].mxu0
        %v1009 = vadd.f32 %v606, %v1008
        %v1010 = vpop.f32.mrb[0].mxu0
        %v1011 = vadd.f32 %v602, %v1010
        %v1012 = vpop.f32.mrb[0].mxu0
        %v1013 = vadd.f32 %v606, %v1012
        %1014 = vmatprep.mubr.bf16.mxu0 0
        %1015 = vmatmul.mubr.bf16.gmra.mrb[0].mxu0 %v648
        %v1016 = vpop.f32.mrb[0].mxu0
        %v1017 = vadd.f32 %v602, %v1016
        %v1018 = vpop.f32.mrb[0].mxu0
        %v1019 = vadd.f32 %v606, %v1018
        %v1020 = vpop.f32.mrb[0].mxu0
        %v1021 = vadd.f32 %v602, %v1020
        %v1022 = vpop.f32.mrb[0].mxu0
        %v1023 = vadd.f32 %v606, %v1022
        %1024 = vmatprep.mubr.bf16.mxu0 0
        %1025 = vmatmul.mubr.bf16.gmra.mrb[0].mxu0 %v649
        %v1026 = vpop.f32.mrb[0].mxu0
        %v1027 = vadd.f32 %v602, %v1026
        %v1028 = vpop.f32.mrb[0].mxu0
        %v1029 = vadd.f32 %v606, %v1028
        %v1030 = vpop.f32.mrb[0].mxu0
        %v1031 = vadd.f32 %v602, %v1030
        %v1032 = vpop.f32.mrb[0].mxu0
        %v1033 = vadd.f32 %v606, %v1032
        %1034 = vmatprep.mubr.bf16.mxu0 0
        %1035 = vmatmul.mubr.bf16.gmra.mrb[0].mxu0 %v650
        %v1036 = vpop.f32.mrb[0].mxu0
        %v1037 = vadd.f32 %v602, %v1036
        %v1038 = vpop.f32.mrb[0].mxu0
        %v1039 = vadd.f32 %v606, %v1038
        %v1040 = vpop.f32.mrb[0].mxu0
        %v1041 = vadd.f32 %v602, %v1040
        %v1042 = vpop.f32.mrb[0].mxu0
        %v1043 = vadd.f32 %v606, %v1042
        %1044 = vdwg.mxu0
        %v1045 = vpack.c.bf16 %v858, %v854
        %v1046 = vpack.c.bf16 %v860, %v856
        %v1047 = vpack.c.bf16 %v971, %v967
        %v1048 = vpack.c.bf16 %v973, %v969
        %v1049 = vpack.c.bf16 %v868, %v864
        %v1050 = vpack.c.bf16 %v870, %v866
        %v1051 = vpack.c.bf16 %v981, %v977
        %v1052 = vpack.c.bf16 %v983, %v979
        %v1053 = vpack.c.bf16 %v878, %v874
        %v1054 = vpack.c.bf16 %v880, %v876
        %v1055 = vpack.c.bf16 %v991, %v987
        %v1056 = vpack.c.bf16 %v993, %v989
        %v1057 = vpack.c.bf16 %v888, %v884
        %v1058 = vpack.c.bf16 %v890, %v886
        %v1059 = vpack.c.bf16 %v1001, %v997
        %v1060 = vpack.c.bf16 %v1003, %v999
        %v1061 = vpack.c.bf16 %v898, %v894
        %v1062 = vpack.c.bf16 %v900, %v896
        %v1063 = vpack.c.bf16 %v1011, %v1007
        %v1064 = vpack.c.bf16 %v1013, %v1009
        %v1065 = vpack.c.bf16 %v908, %v904
        %v1066 = vpack.c.bf16 %v910, %v906
        %v1067 = vpack.c.bf16 %v1021, %v1017
        %v1068 = vpack.c.bf16 %v1023, %v1019
        %v1069 = vpack.c.bf16 %v918, %v914
        %v1070 = vpack.c.bf16 %v920, %v916
        %v1071 = vpack.c.bf16 %v1031, %v1027
        %v1072 = vpack.c.bf16 %v1033, %v1029
        %v1073 = vpack.c.bf16 %v928, %v924
        %v1074 = vpack.c.bf16 %v930, %v926
        %v1075 = vpack.c.bf16 %v1041, %v1037
        %v1076 = vpack.c.bf16 %v1043, %v1039
        %1077 = vst [vmem:[#allocation2] sm:$0xff] %v1045
        %1078 = vst [vmem:[#allocation2 + $0x8] sm:$0xff] %v1046
        %1079 = vst [vmem:[#allocation2 + $0x10] sm:$0xff] %v1047
        %1080 = vst [vmem:[#allocation2 + $0x18] sm:$0xff] %v1048
        %1081 = vst [vmem:[#allocation2 + $0x20] sm:$0xff] %v1049
        %1082 = vst [vmem:[#allocation2 + $0x28] sm:$0xff] %v1050
        %1083 = vst [vmem:[#allocation2 + $0x30] sm:$0xff] %v1051
        %1084 = vst [vmem:[#allocation2 + $0x38] sm:$0xff] %v1052
        %1085 = vst [vmem:[#allocation2 + $0x40] sm:$0xff] %v1053
        %1086 = vst [vmem:[#allocation2 + $0x48] sm:$0xff] %v1054
        %1087 = vst [vmem:[#allocation2 + $0x50] sm:$0xff] %v1055
        %1088 = vst [vmem:[#allocation2 + $0x58] sm:$0xff] %v1056
        %1089 = vst [vmem:[#allocation2 + $0x60] sm:$0xff] %v1057
        %1090 = vst [vmem:[#allocation2 + $0x68] sm:$0xff] %v1058
        %1091 = vst [vmem:[#allocation2 + $0x70] sm:$0xff] %v1059
        %1092 = vst [vmem:[#allocation2 + $0x78] sm:$0xff] %v1060
        %1093 = vst [vmem:[#allocation2 + $0x80] sm:$0xff] %v1061
        %1094 = vst [vmem:[#allocation2 + $0x88] sm:$0xff] %v1062
        %1095 = vst [vmem:[#allocation2 + $0x90] sm:$0xff] %v1063
        %1096 = vst [vmem:[#allocation2 + $0x98] sm:$0xff] %v1064
        %1097 = vst [vmem:[#allocation2 + $0xa0] sm:$0xff] %v1065
        %1098 = vst [vmem:[#allocation2 + $0xa8] sm:$0xff] %v1066
        %1099 = vst [vmem:[#allocation2 + $0xb0] sm:$0xff] %v1067
        %1100 = vst [vmem:[#allocation2 + $0xb8] sm:$0xff] %v1068
        %1101 = vst [vmem:[#allocation2 + $0xc0] sm:$0xff] %v1069
        %1102 = vst [vmem:[#allocation2 + $0xc8] sm:$0xff] %v1070
        %1103 = vst [vmem:[#allocation2 + $0xd0] sm:$0xff] %v1071
        %1104 = vst [vmem:[#allocation2 + $0xd8] sm:$0xff] %v1072
        %1105 = vst [vmem:[#allocation2 + $0xe0] sm:$0xff] %v1073
        %1106 = vst [vmem:[#allocation2 + $0xe8] sm:$0xff] %v1074
        %1107 = vst [vmem:[#allocation2 + $0xf0] sm:$0xff] %v1075
        %1108 = vst [vmem:[#allocation2 + $0xf8] sm:$0xff] %v1076
        %v1109 = vld [vmem:[#allocation2] sm:$0xff]
        %v1110 = vld [vmem:[#allocation2 + $0x8] sm:$0xff]
        %v1111 = vld [vmem:[#allocation2 + $0x10] sm:$0xff]
        %v1112 = vld [vmem:[#allocation2 + $0x18] sm:$0xff]
        %v1113 = vunpack.c.l.bf16 %v1109
        %v1114 = vunpack.c.l.bf16 %v1110
        %v1115 = vunpack.c.l.bf16 %v1111
        %v1116 = vunpack.c.l.bf16 %v1112
        %v1117 = vunpack.c.h.bf16 %v1109
        %v1118 = vunpack.c.h.bf16 %v1110
        %v1119 = vunpack.c.h.bf16 %v1111
        %v1120 = vunpack.c.h.bf16 %v1112
        %v1121 = vpack.c.bf16 %v568, %v567
        %v1154 = vunpack.c.l.b16 %v498
        %v1155 = vunpack.c.h.b16 %v498
        %v1156 = vunpack.c.l.b16 %v499
        %v1157 = vunpack.c.h.b16 %v499
        %v1158 = vunpack.c.l.b16 %v500
        %v1159 = vunpack.c.h.b16 %v500
        %v1160 = vunpack.c.l.b16 %v501
        %v1161 = vunpack.c.h.b16 %v501
        %v1162 = vunpack.c.l.b16 %v502
        %v1163 = vunpack.c.h.b16 %v502
        %v1164 = vunpack.c.l.b16 %v503
        %v1165 = vunpack.c.h.b16 %v503
        %v1166 = vunpack.c.l.b16 %v504
        %v1167 = vunpack.c.h.b16 %v504
        %v1168 = vunpack.c.l.b16 %v505
        %v1169 = vunpack.c.h.b16 %v505
        %v1170 = vunpack.c.l.b16 %v506
        %v1171 = vunpack.c.h.b16 %v506
        %v1172 = vunpack.c.l.b16 %v507
        %v1173 = vunpack.c.h.b16 %v507
        %v1174 = vunpack.c.l.b16 %v508
        %v1175 = vunpack.c.h.b16 %v508
        %v1176 = vunpack.c.l.b16 %v509
        %v1177 = vunpack.c.h.b16 %v509
        %v1178 = vunpack.c.l.b16 %v510
        %v1179 = vunpack.c.h.b16 %v510
        %v1180 = vunpack.c.l.b16 %v511
        %v1181 = vunpack.c.h.b16 %v511
        %v1182 = vunpack.c.l.b16 %v512
        %v1183 = vunpack.c.h.b16 %v512
        %v1184 = vunpack.c.l.b16 %v513
        %v1185 = vunpack.c.h.b16 %v513
        %v1186 = vunpack.c.l.b16 %v514
        %v1187 = vunpack.c.h.b16 %v514
        %v1188 = vunpack.c.l.b16 %v515
        %v1189 = vunpack.c.h.b16 %v515
        %v1190 = vunpack.c.l.b16 %v516
        %v1191 = vunpack.c.h.b16 %v516
        %v1192 = vunpack.c.l.b16 %v517
        %v1193 = vunpack.c.h.b16 %v517
        %v1194 = vunpack.c.l.b16 %v518
        %v1195 = vunpack.c.h.b16 %v518
        %v1196 = vunpack.c.l.b16 %v519
        %v1197 = vunpack.c.h.b16 %v519
        %v1198 = vunpack.c.l.b16 %v520
        %v1199 = vunpack.c.h.b16 %v520
        %v1200 = vunpack.c.l.b16 %v521
        %v1201 = vunpack.c.h.b16 %v521
        %v1202 = vunpack.c.l.b16 %v522
        %v1203 = vunpack.c.h.b16 %v522
        %v1204 = vunpack.c.l.b16 %v523
        %v1205 = vunpack.c.h.b16 %v523
        %v1206 = vunpack.c.l.b16 %v524
        %v1207 = vunpack.c.h.b16 %v524
        %v1208 = vunpack.c.l.b16 %v525
        %v1209 = vunpack.c.h.b16 %v525
        %v1210 = vunpack.c.l.b16 %v526
        %v1211 = vunpack.c.h.b16 %v526
        %v1212 = vunpack.c.l.b16 %v527
        %v1213 = vunpack.c.h.b16 %v527
        %v1214 = vunpack.c.l.b16 %v528
        %v1215 = vunpack.c.h.b16 %v528
        %v1216 = vunpack.c.l.b16 %v529
        %v1217 = vunpack.c.h.b16 %v529
        %v1218 = vpack.c.b16 %v1158, %v1154
        %v1219 = vpack.c.b16 %v1159, %v1155
        %v1220 = vpack.c.b16 %v1160, %v1156
        %v1221 = vpack.c.b16 %v1161, %v1157
        %v1222 = vpack.c.b16 %v1166, %v1162
        %v1223 = vpack.c.b16 %v1167, %v1163
        %v1224 = vpack.c.b16 %v1168, %v1164
        %v1225 = vpack.c.b16 %v1169, %v1165
        %v1226 = vpack.c.b16 %v1174, %v1170
        %v1227 = vpack.c.b16 %v1175, %v1171
        %v1228 = vpack.c.b16 %v1176, %v1172
        %v1229 = vpack.c.b16 %v1177, %v1173
        %v1230 = vpack.c.b16 %v1182, %v1178
        %v1231 = vpack.c.b16 %v1183, %v1179
        %v1232 = vpack.c.b16 %v1184, %v1180
        %v1233 = vpack.c.b16 %v1185, %v1181
        %v1234 = vpack.c.b16 %v1190, %v1186
        %v1235 = vpack.c.b16 %v1191, %v1187
        %v1236 = vpack.c.b16 %v1192, %v1188
        %v1237 = vpack.c.b16 %v1193, %v1189
        %v1238 = vpack.c.b16 %v1198, %v1194
        %v1239 = vpack.c.b16 %v1199, %v1195
        %v1240 = vpack.c.b16 %v1200, %v1196
        %v1241 = vpack.c.b16 %v1201, %v1197
        %v1242 = vpack.c.b16 %v1206, %v1202
        %v1243 = vpack.c.b16 %v1207, %v1203
        %v1244 = vpack.c.b16 %v1208, %v1204
        %v1245 = vpack.c.b16 %v1209, %v1205
        %v1246 = vpack.c.b16 %v1214, %v1210
        %v1247 = vpack.c.b16 %v1215, %v1211
        %v1248 = vpack.c.b16 %v1216, %v1212
        %v1249 = vpack.c.b16 %v1217, %v1213
        %1282 = vmatprep.subr.bf16.mxu0 %v1219
        %1283 = vmatpush1.bf16.msra.mxu0 %v1218
        %1284 = vmatprep.subr.bf16.mxu0 %v1223
        %1285 = vmatpush1.bf16.msra.mxu0 %v1222
        %1286 = vmatprep.subr.bf16.mxu0 %v1227
        %1287 = vmatpush1.bf16.msra.mxu0 %v1226
        %1288 = vmatprep.subr.bf16.mxu0 %v1231
        %1289 = vmatpush1.bf16.msra.mxu0 %v1230
        %1290 = vmatprep.subr.bf16.mxu0 %v1235
        %1291 = vmatpush1.bf16.msra.mxu0 %v1234
        %1292 = vmatprep.subr.bf16.mxu0 %v1239
        %1293 = vmatpush1.bf16.msra.mxu0 %v1238
        %1294 = vmatprep.subr.bf16.mxu0 %v1243
        %1295 = vmatpush1.bf16.msra.mxu0 %v1242
        %1296 = vmatprep.subr.bf16.mxu0 %v1247
        %1297 = vmatpush1.bf16.msra.mxu0 %v1246
        %1298 = vmatprep.subr.bf16.mxu0 0
        %1299 = vmatpush1.bf16.msra.mxu0 0
        %1300 = vmatprep.subr.bf16.mxu0 0
        %1301 = vmatpush1.bf16.msra.mxu0 0
        %1302 = vmatprep.subr.bf16.mxu0 0
        %1303 = vmatpush1.bf16.msra.mxu0 0
        %1304 = vmatprep.subr.bf16.mxu0 0
        %1305 = vmatpush1.bf16.msra.mxu0 0
        %1306 = vmatprep.subr.bf16.mxu0 0
        %1307 = vmatpush1.bf16.msra.mxu0 0
        %1308 = vmatprep.subr.bf16.mxu0 0
        %1309 = vmatpush1.bf16.msra.mxu0 0
        %1310 = vmatprep.subr.bf16.mxu0 0
        %1311 = vmatpush1.bf16.msra.mxu0 0
        %1312 = vmatprep.subr.bf16.mxu0 0
        %1313 = vmatpush1.bf16.msra.mxu0 0
        %1314 = vmatprep.mubr.bf16.mxu0 0
        %1315 = vmatmul.mubr.bf16.gmra.mrb[0].mxu0 %v1121
        %v1316 = vpop.f32.mrb[0].mxu0
        %v1317 = vadd.f32 0.0, %v1316
        %v1318 = vpop.f32.mrb[0].mxu0
        %v1319 = vadd.f32 0.0, %v1318
        %v1320 = vpop.f32.mrb[0].mxu0
        %v1321 = vadd.f32 0.0, %v1320
        %v1322 = vpop.f32.mrb[0].mxu0
        %v1323 = vadd.f32 0.0, %v1322
        %1324 = vdwg.mxu0
        %1325 = vmatprep.subr.bf16.mxu0 %v1221
        %1326 = vmatpush1.bf16.msra.mxu0 %v1220
        %1327 = vmatprep.subr.bf16.mxu0 %v1225
        %1328 = vmatpush1.bf16.msra.mxu0 %v1224
        %1329 = vmatprep.subr.bf16.mxu0 %v1229
        %1330 = vmatpush1.bf16.msra.mxu0 %v1228
        %1331 = vmatprep.subr.bf16.mxu0 %v1233
        %1332 = vmatpush1.bf16.msra.mxu0 %v1232
        %1333 = vmatprep.subr.bf16.mxu0 %v1237
        %1334 = vmatpush1.bf16.msra.mxu0 %v1236
        %1335 = vmatprep.subr.bf16.mxu0 %v1241
        %1336 = vmatpush1.bf16.msra.mxu0 %v1240
        %1337 = vmatprep.subr.bf16.mxu0 %v1245
        %1338 = vmatpush1.bf16.msra.mxu0 %v1244
        %1339 = vmatprep.subr.bf16.mxu0 %v1249
        %1340 = vmatpush1.bf16.msra.mxu0 %v1248
        %1341 = vmatprep.subr.bf16.mxu0 0
        %1342 = vmatpush1.bf16.msra.mxu0 0
        %1343 = vmatprep.subr.bf16.mxu0 0
        %1344 = vmatpush1.bf16.msra.mxu0 0
        %1345 = vmatprep.subr.bf16.mxu0 0
        %1346 = vmatpush1.bf16.msra.mxu0 0
        %1347 = vmatprep.subr.bf16.mxu0 0
        %1348 = vmatpush1.bf16.msra.mxu0 0
        %1349 = vmatprep.subr.bf16.mxu0 0
        %1350 = vmatpush1.bf16.msra.mxu0 0
        %1351 = vmatprep.subr.bf16.mxu0 0
        %1352 = vmatpush1.bf16.msra.mxu0 0
        %1353 = vmatprep.subr.bf16.mxu0 0
        %1354 = vmatpush1.bf16.msra.mxu0 0
        %1355 = vmatprep.subr.bf16.mxu0 0
        %1356 = vmatpush1.bf16.msra.mxu0 0
        %1357 = vmatprep.mubr.bf16.mxu0 0
        %1358 = vmatmul.mubr.bf16.gmra.mrb[0].mxu0 %v1121
        %v1359 = vpop.f32.mrb[0].mxu0
        %v1360 = vadd.f32 0.0, %v1359
        %v1361 = vpop.f32.mrb[0].mxu0
        %v1362 = vadd.f32 0.0, %v1361
        %v1363 = vpop.f32.mrb[0].mxu0
        %v1364 = vadd.f32 0.0, %v1363
        %v1365 = vpop.f32.mrb[0].mxu0
        %v1366 = vadd.f32 0.0, %v1365
        %1367 = vdwg.mxu0
        %v1368 = vadd.f32 %v1113, %v1317
        %v1369 = vadd.f32 %v1114, %v1319
        %v1370 = vadd.f32 %v1115, %v1360
        %v1371 = vadd.f32 %v1116, %v1362
        %v1372 = vadd.f32 %v1117, %v1321
        %v1373 = vadd.f32 %v1118, %v1323
        %v1374 = vadd.f32 %v1119, %v1364
        %v1375 = vadd.f32 %v1120, %v1366
        %v1376 = vxor.u32 %v1368, 2147483648
        %v1377 = vxor.u32 %v1372, 2147483648
        %v1378 = vmul.f32 %v1376, 1.442695
        %v1379 = vpow.pop %v1378
        %v1380 = vmul.f32 %v1377, 1.442695
        %v1381 = vpow.pop %v1380
        %v1382 = vadd.f32 %v1379, 1.0
        %v1383 = vadd.f32 %v1381, 1.0
        %v1384 = vrcp.pop %v1382
        %v1385 = vmul.f32 1.0, %v1384
        %v1386 = vrcp.pop %v1383
        %v1387 = vmul.f32 1.0, %v1386
        %v1388 = vxor.u32 %v1369, 2147483648
        %v1389 = vxor.u32 %v1373, 2147483648
        %v1390 = vmul.f32 %v1388, 1.442695
        %v1391 = vpow.pop %v1390
        %v1392 = vmul.f32 %v1389, 1.442695
        %v1393 = vpow.pop %v1392
        %v1394 = vadd.f32 %v1391, 1.0
        %v1395 = vadd.f32 %v1393, 1.0
        %v1396 = vrcp.pop %v1394
        %v1397 = vmul.f32 1.0, %v1396
        %v1398 = vrcp.pop %v1395
        %v1399 = vmul.f32 1.0, %v1398
        %v1400 = vtanh.pop %v1370
        %v1401 = vtanh.pop %v1374
        %v1402 = vxor.u32 %v1371, 2147483648
        %v1403 = vxor.u32 %v1375, 2147483648
        %v1404 = vmul.f32 %v1402, 1.442695
        %v1405 = vpow.pop %v1404
        %v1406 = vmul.f32 %v1403, 1.442695
        %v1407 = vpow.pop %v1406
        %v1408 = vadd.f32 %v1405, 1.0
        %v1409 = vadd.f32 %v1407, 1.0
        %v1410 = vrcp.pop %v1408
        %v1411 = vmul.f32 1.0, %v1410
        %v1412 = vrcp.pop %v1409
        %v1413 = vmul.f32 1.0, %v1412
        %v1414 = vmul.f32 %v1397, %v569
        %v1415 = vmul.f32 %v1399, %v570
        %v1416 = vmul.f32 %v1385, %v1400
        %v1417 = vmul.f32 %v1387, %v1401
        %v1418 = vadd.f32 %v1414, %v1416
        %v1419 = vadd.f32 %v1415, %v1417
        %v1420 = vtanh.pop %v1418
        %v1421 = vtanh.pop %v1419
        %v1422 = vmul.f32 %v1411, %v1420
        %v1423 = vmul.f32 %v1413, %v1421
        %v1424 = vpack.c.bf16 %v1423, %v1422
        %v1426 = vunpack.c.l.b16 %v1424
        %v1427 = vunpack.c.h.b16 %v1424
        %v1428 = vpack.c.b16 %v1426, %v1426
        %v1429 = vpack.c.b16 %v1427, %v1427
        %s1432 = smul.addr %s571, 4
        %s1433 = scalar_lea.vmem %s475, %s1432
        %1434 = vst [vmem:[%s1433] sm:$0xf] %v1428
        %1435 = vst [vmem:[%s1433 + $0x4] sm:$0xf] %v1429
        %s1436 = scalar_lea.vmem [#allocation2], 32
        %v1437 = vld [vmem:[%s1436] sm:$0xff]
        %v1438 = vld [vmem:[%s1436 + $0x8] sm:$0xff]
        %v1439 = vld [vmem:[%s1436 + $0x10] sm:$0xff]
        %v1440 = vld [vmem:[%s1436 + $0x18] sm:$0xff]
        %v1441 = vunpack.c.l.bf16 %v1437
        %v1442 = vunpack.c.l.bf16 %v1438
        %v1443 = vunpack.c.l.bf16 %v1439
        %v1444 = vunpack.c.l.bf16 %v1440
        %v1445 = vunpack.c.h.bf16 %v1437
        %v1446 = vunpack.c.h.bf16 %v1438
        %v1447 = vunpack.c.h.bf16 %v1439
        %v1448 = vunpack.c.h.bf16 %v1440
        %1449 = vmatprep.subr.bf16.mxu0 %v1219
        %1450 = vmatpush1.bf16.msra.mxu0 %v1218
        %1451 = vmatprep.subr.bf16.mxu0 %v1223
        %1452 = vmatpush1.bf16.msra.mxu0 %v1222
        %1453 = vmatprep.subr.bf16.mxu0 %v1227
        %1454 = vmatpush1.bf16.msra.mxu0 %v1226
        %1455 = vmatprep.subr.bf16.mxu0 %v1231
        %1456 = vmatpush1.bf16.msra.mxu0 %v1230
        %1457 = vmatprep.subr.bf16.mxu0 %v1235
        %1458 = vmatpush1.bf16.msra.mxu0 %v1234
        %1459 = vmatprep.subr.bf16.mxu0 %v1239
        %1460 = vmatpush1.bf16.msra.mxu0 %v1238
        %1461 = vmatprep.subr.bf16.mxu0 %v1243
        %1462 = vmatpush1.bf16.msra.mxu0 %v1242
        %1463 = vmatprep.subr.bf16.mxu0 %v1247
        %1464 = vmatpush1.bf16.msra.mxu0 %v1246
        %1465 = vmatprep.subr.bf16.mxu0 0
        %1466 = vmatpush1.bf16.msra.mxu0 0
        %1467 = vmatprep.subr.bf16.mxu0 0
        %1468 = vmatpush1.bf16.msra.mxu0 0
        %1469 = vmatprep.subr.bf16.mxu0 0
        %1470 = vmatpush1.bf16.msra.mxu0 0
        %1471 = vmatprep.subr.bf16.mxu0 0
        %1472 = vmatpush1.bf16.msra.mxu0 0
        %1473 = vmatprep.subr.bf16.mxu0 0
        %1474 = vmatpush1.bf16.msra.mxu0 0
        %1475 = vmatprep.subr.bf16.mxu0 0
        %1476 = vmatpush1.bf16.msra.mxu0 0
        %1477 = vmatprep.subr.bf16.mxu0 0
        %1478 = vmatpush1.bf16.msra.mxu0 0
        %1479 = vmatprep.subr.bf16.mxu0 0
        %1480 = vmatpush1.bf16.msra.mxu0 0
        %1481 = vmatprep.mubr.bf16.mxu0 0
        %1482 = vmatmul.mubr.bf16.gmra.mrb[0].mxu0 %v1424
        %v1483 = vpop.f32.mrb[0].mxu0
        %v1484 = vadd.f32 0.0, %v1483
        %v1485 = vpop.f32.mrb[0].mxu0
        %v1486 = vadd.f32 0.0, %v1485
        %v1487 = vpop.f32.mrb[0].mxu0
        %v1488 = vadd.f32 0.0, %v1487
        %v1489 = vpop.f32.mrb[0].mxu0
        %v1490 = vadd.f32 0.0, %v1489
        %1491 = vdwg.mxu0
        %1492 = vmatprep.subr.bf16.mxu0 %v1221
        %1493 = vmatpush1.bf16.msra.mxu0 %v1220
        %1494 = vmatprep.subr.bf16.mxu0 %v1225
        %1495 = vmatpush1.bf16.msra.mxu0 %v1224
        %1496 = vmatprep.subr.bf16.mxu0 %v1229
        %1497 = vmatpush1.bf16.msra.mxu0 %v1228
        %1498 = vmatprep.subr.bf16.mxu0 %v1233
        %1499 = vmatpush1.bf16.msra.mxu0 %v1232
        %1500 = vmatprep.subr.bf16.mxu0 %v1237
        %1501 = vmatpush1.bf16.msra.mxu0 %v1236
        %1502 = vmatprep.subr.bf16.mxu0 %v1241
        %1503 = vmatpush1.bf16.msra.mxu0 %v1240
        %1504 = vmatprep.subr.bf16.mxu0 %v1245
        %1505 = vmatpush1.bf16.msra.mxu0 %v1244
        %1506 = vmatprep.subr.bf16.mxu0 %v1249
        %1507 = vmatpush1.bf16.msra.mxu0 %v1248
        %1508 = vmatprep.subr.bf16.mxu0 0
        %1509 = vmatpush1.bf16.msra.mxu0 0
        %1510 = vmatprep.subr.bf16.mxu0 0
        %1511 = vmatpush1.bf16.msra.mxu0 0
        %1512 = vmatprep.subr.bf16.mxu0 0
        %1513 = vmatpush1.bf16.msra.mxu0 0
        %1514 = vmatprep.subr.bf16.mxu0 0
        %1515 = vmatpush1.bf16.msra.mxu0 0
        %1516 = vmatprep.subr.bf16.mxu0 0
        %1517 = vmatpush1.bf16.msra.mxu0 0
        %1518 = vmatprep.subr.bf16.mxu0 0
        %1519 = vmatpush1.bf16.msra.mxu0 0
        %1520 = vmatprep.subr.bf16.mxu0 0
        %1521 = vmatpush1.bf16.msra.mxu0 0
        %1522 = vmatprep.subr.bf16.mxu0 0
        %1523 = vmatpush1.bf16.msra.mxu0 0
        %1524 = vmatprep.mubr.bf16.mxu0 0
        %1525 = vmatmul.mubr.bf16.gmra.mrb[0].mxu0 %v1424
        %v1526 = vpop.f32.mrb[0].mxu0
        %v1527 = vadd.f32 0.0, %v1526
        %v1528 = vpop.f32.mrb[0].mxu0
        %v1529 = vadd.f32 0.0, %v1528
        %v1530 = vpop.f32.mrb[0].mxu0
        %v1531 = vadd.f32 0.0, %v1530
        %v1532 = vpop.f32.mrb[0].mxu0
        %v1533 = vadd.f32 0.0, %v1532
        %1534 = vdwg.mxu0
        %v1535 = vadd.f32 %v1441, %v1484
        %v1536 = vadd.f32 %v1442, %v1486
        %v1537 = vadd.f32 %v1443, %v1527
        %v1538 = vadd.f32 %v1444, %v1529
        %v1539 = vadd.f32 %v1445, %v1488
        %v1540 = vadd.f32 %v1446, %v1490
        %v1541 = vadd.f32 %v1447, %v1531
        %v1542 = vadd.f32 %v1448, %v1533
        %v1543 = vxor.u32 %v1535, 2147483648
        %v1544 = vxor.u32 %v1539, 2147483648
        %v1545 = vmul.f32 %v1543, 1.442695
        %v1546 = vpow.pop %v1545
        %v1547 = vmul.f32 %v1544, 1.442695
        %v1548 = vpow.pop %v1547
        %v1549 = vadd.f32 %v1546, 1.0
        %v1550 = vadd.f32 %v1548, 1.0
        %v1551 = vrcp.pop %v1549
        %v1552 = vmul.f32 1.0, %v1551
        %v1553 = vrcp.pop %v1550
        %v1554 = vmul.f32 1.0, %v1553
        %v1555 = vxor.u32 %v1536, 2147483648
        %v1556 = vxor.u32 %v1540, 2147483648
        %v1557 = vmul.f32 %v1555, 1.442695
        %v1558 = vpow.pop %v1557
        %v1559 = vmul.f32 %v1556, 1.442695
        %v1560 = vpow.pop %v1559
        %v1561 = vadd.f32 %v1558, 1.0
        %v1562 = vadd.f32 %v1560, 1.0
        %v1563 = vrcp.pop %v1561
        %v1564 = vmul.f32 1.0, %v1563
        %v1565 = vrcp.pop %v1562
        %v1566 = vmul.f32 1.0, %v1565
        %v1567 = vtanh.pop %v1537
        %v1568 = vtanh.pop %v1541
        %v1569 = vxor.u32 %v1538, 2147483648
        %v1570 = vxor.u32 %v1542, 2147483648
        %v1571 = vmul.f32 %v1569, 1.442695
        %v1572 = vpow.pop %v1571
        %v1573 = vmul.f32 %v1570, 1.442695
        %v1574 = vpow.pop %v1573
        %v1575 = vadd.f32 %v1572, 1.0
        %v1576 = vadd.f32 %v1574, 1.0
        %v1577 = vrcp.pop %v1575
        %v1578 = vmul.f32 1.0, %v1577
        %v1579 = vrcp.pop %v1576
        %v1580 = vmul.f32 1.0, %v1579
        %v1581 = vmul.f32 %v1564, %v1418
        %v1582 = vmul.f32 %v1566, %v1419
        %v1583 = vmul.f32 %v1552, %v1567
        %v1584 = vmul.f32 %v1554, %v1568
        %v1585 = vadd.f32 %v1581, %v1583
        %v1586 = vadd.f32 %v1582, %v1584
        %v1587 = vtanh.pop %v1585
        %v1588 = vtanh.pop %v1586
        %v1589 = vmul.f32 %v1578, %v1587
        %v1590 = vmul.f32 %v1580, %v1588
        %v1591 = vpack.c.bf16 %v1590, %v1589
        %s1592 = sadd.s32 0, 1
        %v1594 = vunpack.c.l.b16 %v1591
        %v1595 = vunpack.c.h.b16 %v1591
        %v1596 = vpack.c.b16 %v1594, %v1594
        %v1597 = vpack.c.b16 %v1595, %v1595
        %s1600 = smul.u32 %s1592, 2
        %s1601 = smul.addr %s1600, 4
        %s1602 = scalar_lea.vmem %s475, %s1601
        %1603 = vst [vmem:[%s1602] sm:$0xf] %v1596
        %1604 = vst [vmem:[%s1602 + $0x4] sm:$0xf] %v1597
        %s1605 = scalar_lea.vmem [#allocation2], 64
        %v1606 = vld [vmem:[%s1605] sm:$0xff]
        %v1607 = vld [vmem:[%s1605 + $0x8] sm:$0xff]
        %v1608 = vld [vmem:[%s1605 + $0x10] sm:$0xff]
        %v1609 = vld [vmem:[%s1605 + $0x18] sm:$0xff]
        %v1610 = vunpack.c.l.bf16 %v1606
        %v1611 = vunpack.c.l.bf16 %v1607
        %v1612 = vunpack.c.l.bf16 %v1608
        %v1613 = vunpack.c.l.bf16 %v1609
        %v1614 = vunpack.c.h.bf16 %v1606
        %v1615 = vunpack.c.h.bf16 %v1607
        %v1616 = vunpack.c.h.bf16 %v1608
        %v1617 = vunpack.c.h.bf16 %v1609
        %1618 = vmatprep.subr.bf16.mxu0 %v1219
        %1619 = vmatpush1.bf16.msra.mxu0 %v1218
        %1620 = vmatprep.subr.bf16.mxu0 %v1223
        %1621 = vmatpush1.bf16.msra.mxu0 %v1222
        %1622 = vmatprep.subr.bf16.mxu0 %v1227
        %1623 = vmatpush1.bf16.msra.mxu0 %v1226
        %1624 = vmatprep.subr.bf16.mxu0 %v1231
        %1625 = vmatpush1.bf16.msra.mxu0 %v1230
        %1626 = vmatprep.subr.bf16.mxu0 %v1235
        %1627 = vmatpush1.bf16.msra.mxu0 %v1234
        %1628 = vmatprep.subr.bf16.mxu0 %v1239
        %1629 = vmatpush1.bf16.msra.mxu0 %v1238
        %1630 = vmatprep.subr.bf16.mxu0 %v1243
        %1631 = vmatpush1.bf16.msra.mxu0 %v1242
        %1632 = vmatprep.subr.bf16.mxu0 %v1247
        %1633 = vmatpush1.bf16.msra.mxu0 %v1246
        %1634 = vmatprep.subr.bf16.mxu0 0
        %1635 = vmatpush1.bf16.msra.mxu0 0
        %1636 = vmatprep.subr.bf16.mxu0 0
        %1637 = vmatpush1.bf16.msra.mxu0 0
        %1638 = vmatprep.subr.bf16.mxu0 0
        %1639 = vmatpush1.bf16.msra.mxu0 0
        %1640 = vmatprep.subr.bf16.mxu0 0
        %1641 = vmatpush1.bf16.msra.mxu0 0
        %1642 = vmatprep.subr.bf16.mxu0 0
        %1643 = vmatpush1.bf16.msra.mxu0 0
        %1644 = vmatprep.subr.bf16.mxu0 0
        %1645 = vmatpush1.bf16.msra.mxu0 0
        %1646 = vmatprep.subr.bf16.mxu0 0
        %1647 = vmatpush1.bf16.msra.mxu0 0
        %1648 = vmatprep.subr.bf16.mxu0 0
        %1649 = vmatpush1.bf16.msra.mxu0 0
        %1650 = vmatprep.mubr.bf16.mxu0 0
        %1651 = vmatmul.mubr.bf16.gmra.mrb[0].mxu0 %v1591
        %v1652 = vpop.f32.mrb[0].mxu0
        %v1653 = vadd.f32 0.0, %v1652
        %v1654 = vpop.f32.mrb[0].mxu0
        %v1655 = vadd.f32 0.0, %v1654
        %v1656 = vpop.f32.mrb[0].mxu0
        %v1657 = vadd.f32 0.0, %v1656
        %v1658 = vpop.f32.mrb[0].mxu0
        %v1659 = vadd.f32 0.0, %v1658
        %1660 = vdwg.mxu0
        %1661 = vmatprep.subr.bf16.mxu0 %v1221
        %1662 = vmatpush1.bf16.msra.mxu0 %v1220
        %1663 = vmatprep.subr.bf16.mxu0 %v1225
        %1664 = vmatpush1.bf16.msra.mxu0 %v1224
        %1665 = vmatprep.subr.bf16.mxu0 %v1229
        %1666 = vmatpush1.bf16.msra.mxu0 %v1228
        %1667 = vmatprep.subr.bf16.mxu0 %v1233
        %1668 = vmatpush1.bf16.msra.mxu0 %v1232
        %1669 = vmatprep.subr.bf16.mxu0 %v1237
        %1670 = vmatpush1.bf16.msra.mxu0 %v1236
        %1671 = vmatprep.subr.bf16.mxu0 %v1241
        %1672 = vmatpush1.bf16.msra.mxu0 %v1240
        %1673 = vmatprep.subr.bf16.mxu0 %v1245
        %1674 = vmatpush1.bf16.msra.mxu0 %v1244
        %1675 = vmatprep.subr.bf16.mxu0 %v1249
        %1676 = vmatpush1.bf16.msra.mxu0 %v1248
        %1677 = vmatprep.subr.bf16.mxu0 0
        %1678 = vmatpush1.bf16.msra.mxu0 0
        %1679 = vmatprep.subr.bf16.mxu0 0
        %1680 = vmatpush1.bf16.msra.mxu0 0
        %1681 = vmatprep.subr.bf16.mxu0 0
        %1682 = vmatpush1.bf16.msra.mxu0 0
        %1683 = vmatprep.subr.bf16.mxu0 0
        %1684 = vmatpush1.bf16.msra.mxu0 0
        %1685 = vmatprep.subr.bf16.mxu0 0
        %1686 = vmatpush1.bf16.msra.mxu0 0
        %1687 = vmatprep.subr.bf16.mxu0 0
        %1688 = vmatpush1.bf16.msra.mxu0 0
        %1689 = vmatprep.subr.bf16.mxu0 0
        %1690 = vmatpush1.bf16.msra.mxu0 0
        %1691 = vmatprep.subr.bf16.mxu0 0
        %1692 = vmatpush1.bf16.msra.mxu0 0
        %1693 = vmatprep.mubr.bf16.mxu0 0
        %1694 = vmatmul.mubr.bf16.gmra.mrb[0].mxu0 %v1591
        %v1695 = vpop.f32.mrb[0].mxu0
        %v1696 = vadd.f32 0.0, %v1695
        %v1697 = vpop.f32.mrb[0].mxu0
        %v1698 = vadd.f32 0.0, %v1697
        %v1699 = vpop.f32.mrb[0].mxu0
        %v1700 = vadd.f32 0.0, %v1699
        %v1701 = vpop.f32.mrb[0].mxu0
        %v1702 = vadd.f32 0.0, %v1701
        %1703 = vdwg.mxu0
        %v1704 = vadd.f32 %v1610, %v1653
        %v1705 = vadd.f32 %v1611, %v1655
        %v1706 = vadd.f32 %v1612, %v1696
        %v1707 = vadd.f32 %v1613, %v1698
        %v1708 = vadd.f32 %v1614, %v1657
        %v1709 = vadd.f32 %v1615, %v1659
        %v1710 = vadd.f32 %v1616, %v1700
        %v1711 = vadd.f32 %v1617, %v1702
        %v1712 = vxor.u32 %v1704, 2147483648
        %v1713 = vxor.u32 %v1708, 2147483648
        %v1714 = vmul.f32 %v1712, 1.442695
        %v1715 = vpow.pop %v1714
        %v1716 = vmul.f32 %v1713, 1.442695
        %v1717 = vpow.pop %v1716
        %v1718 = vadd.f32 %v1715, 1.0
        %v1719 = vadd.f32 %v1717, 1.0
        %v1720 = vrcp.pop %v1718
        %v1721 = vmul.f32 1.0, %v1720
        %v1722 = vrcp.pop %v1719
        %v1723 = vmul.f32 1.0, %v1722
        %v1724 = vxor.u32 %v1705, 2147483648
        %v1725 = vxor.u32 %v1709, 2147483648
        %v1726 = vmul.f32 %v1724, 1.442695
        %v1727 = vpow.pop %v1726
        %v1728 = vmul.f32 %v1725, 1.442695
        %v1729 = vpow.pop %v1728
        %v1730 = vadd.f32 %v1727, 1.0
        %v1731 = vadd.f32 %v1729, 1.0
        %v1732 = vrcp.pop %v1730
        %v1733 = vmul.f32 1.0, %v1732
        %v1734 = vrcp.pop %v1731
        %v1735 = vmul.f32 1.0, %v1734
        %v1736 = vtanh.pop %v1706
        %v1737 = vtanh.pop %v1710
        %v1738 = vxor.u32 %v1707, 2147483648
        %v1739 = vxor.u32 %v1711, 2147483648
        %v1740 = vmul.f32 %v1738, 1.442695
        %v1741 = vpow.pop %v1740
        %v1742 = vmul.f32 %v1739, 1.442695
        %v1743 = vpow.pop %v1742
        %v1744 = vadd.f32 %v1741, 1.0
        %v1745 = vadd.f32 %v1743, 1.0
        %v1746 = vrcp.pop %v1744
        %v1747 = vmul.f32 1.0, %v1746
        %v1748 = vrcp.pop %v1745
        %v1749 = vmul.f32 1.0, %v1748
        %v1750 = vmul.f32 %v1733, %v1585
        %v1751 = vmul.f32 %v1735, %v1586
        %v1752 = vmul.f32 %v1721, %v1736
        %v1753 = vmul.f32 %v1723, %v1737
        %v1754 = vadd.f32 %v1750, %v1752
        %v1755 = vadd.f32 %v1751, %v1753
        %v1756 = vtanh.pop %v1754
        %v1757 = vtanh.pop %v1755
        %v1758 = vmul.f32 %v1747, %v1756
        %v1759 = vmul.f32 %v1749, %v1757
        %v1760 = vpack.c.bf16 %v1759, %v1758
        %s1761 = sadd.s32 0, 2
        %v1763 = vunpack.c.l.b16 %v1760
        %v1764 = vunpack.c.h.b16 %v1760
        %v1765 = vpack.c.b16 %v1763, %v1763
        %v1766 = vpack.c.b16 %v1764, %v1764
        %s1769 = smul.u32 %s1761, 2
        %s1770 = smul.addr %s1769, 4
        %s1771 = scalar_lea.vmem %s475, %s1770
        %1772 = vst [vmem:[%s1771] sm:$0xf] %v1765
        %1773 = vst [vmem:[%s1771 + $0x4] sm:$0xf] %v1766
        %s1774 = scalar_lea.vmem [#allocation2], 96
        %v1775 = vld [vmem:[%s1774] sm:$0xff]
        %v1776 = vld [vmem:[%s1774 + $0x8] sm:$0xff]
        %v1777 = vld [vmem:[%s1774 + $0x10] sm:$0xff]
        %v1778 = vld [vmem:[%s1774 + $0x18] sm:$0xff]
        %v1779 = vunpack.c.l.bf16 %v1775
        %v1780 = vunpack.c.l.bf16 %v1776
        %v1781 = vunpack.c.l.bf16 %v1777
        %v1782 = vunpack.c.l.bf16 %v1778
        %v1783 = vunpack.c.h.bf16 %v1775
        %v1784 = vunpack.c.h.bf16 %v1776
        %v1785 = vunpack.c.h.bf16 %v1777
        %v1786 = vunpack.c.h.bf16 %v1778
        %1787 = vmatprep.subr.bf16.mxu0 %v1219
        %1788 = vmatpush1.bf16.msra.mxu0 %v1218
        %1789 = vmatprep.subr.bf16.mxu0 %v1223
        %1790 = vmatpush1.bf16.msra.mxu0 %v1222
        %1791 = vmatprep.subr.bf16.mxu0 %v1227
        %1792 = vmatpush1.bf16.msra.mxu0 %v1226
        %1793 = vmatprep.subr.bf16.mxu0 %v1231
        %1794 = vmatpush1.bf16.msra.mxu0 %v1230
        %1795 = vmatprep.subr.bf16.mxu0 %v1235
        %1796 = vmatpush1.bf16.msra.mxu0 %v1234
        %1797 = vmatprep.subr.bf16.mxu0 %v1239
        %1798 = vmatpush1.bf16.msra.mxu0 %v1238
        %1799 = vmatprep.subr.bf16.mxu0 %v1243
        %1800 = vmatpush1.bf16.msra.mxu0 %v1242
        %1801 = vmatprep.subr.bf16.mxu0 %v1247
        %1802 = vmatpush1.bf16.msra.mxu0 %v1246
        %1803 = vmatprep.subr.bf16.mxu0 0
        %1804 = vmatpush1.bf16.msra.mxu0 0
        %1805 = vmatprep.subr.bf16.mxu0 0
        %1806 = vmatpush1.bf16.msra.mxu0 0
        %1807 = vmatprep.subr.bf16.mxu0 0
        %1808 = vmatpush1.bf16.msra.mxu0 0
        %1809 = vmatprep.subr.bf16.mxu0 0
        %1810 = vmatpush1.bf16.msra.mxu0 0
        %1811 = vmatprep.subr.bf16.mxu0 0
        %1812 = vmatpush1.bf16.msra.mxu0 0
        %1813 = vmatprep.subr.bf16.mxu0 0
        %1814 = vmatpush1.bf16.msra.mxu0 0
        %1815 = vmatprep.subr.bf16.mxu0 0
        %1816 = vmatpush1.bf16.msra.mxu0 0
        %1817 = vmatprep.subr.bf16.mxu0 0
        %1818 = vmatpush1.bf16.msra.mxu0 0
        %1819 = vmatprep.mubr.bf16.mxu0 0
        %1820 = vmatmul.mubr.bf16.gmra.mrb[0].mxu0 %v1760
        %v1821 = vpop.f32.mrb[0].mxu0
        %v1822 = vadd.f32 0.0, %v1821
        %v1823 = vpop.f32.mrb[0].mxu0
        %v1824 = vadd.f32 0.0, %v1823
        %v1825 = vpop.f32.mrb[0].mxu0
        %v1826 = vadd.f32 0.0, %v1825
        %v1827 = vpop.f32.mrb[0].mxu0
        %v1828 = vadd.f32 0.0, %v1827
        %1829 = vdwg.mxu0
        %1830 = vmatprep.subr.bf16.mxu0 %v1221
        %1831 = vmatpush1.bf16.msra.mxu0 %v1220
        %1832 = vmatprep.subr.bf16.mxu0 %v1225
        %1833 = vmatpush1.bf16.msra.mxu0 %v1224
        %1834 = vmatprep.subr.bf16.mxu0 %v1229
        %1835 = vmatpush1.bf16.msra.mxu0 %v1228
        %1836 = vmatprep.subr.bf16.mxu0 %v1233
        %1837 = vmatpush1.bf16.msra.mxu0 %v1232
        %1838 = vmatprep.subr.bf16.mxu0 %v1237
        %1839 = vmatpush1.bf16.msra.mxu0 %v1236
        %1840 = vmatprep.subr.bf16.mxu0 %v1241
        %1841 = vmatpush1.bf16.msra.mxu0 %v1240
        %1842 = vmatprep.subr.bf16.mxu0 %v1245
        %1843 = vmatpush1.bf16.msra.mxu0 %v1244
        %1844 = vmatprep.subr.bf16.mxu0 %v1249
        %1845 = vmatpush1.bf16.msra.mxu0 %v1248
        %1846 = vmatprep.subr.bf16.mxu0 0
        %1847 = vmatpush1.bf16.msra.mxu0 0
        %1848 = vmatprep.subr.bf16.mxu0 0
        %1849 = vmatpush1.bf16.msra.mxu0 0
        %1850 = vmatprep.subr.bf16.mxu0 0
        %1851 = vmatpush1.bf16.msra.mxu0 0
        %1852 = vmatprep.subr.bf16.mxu0 0
        %1853 = vmatpush1.bf16.msra.mxu0 0
        %1854 = vmatprep.subr.bf16.mxu0 0
        %1855 = vmatpush1.bf16.msra.mxu0 0
        %1856 = vmatprep.subr.bf16.mxu0 0
        %1857 = vmatpush1.bf16.msra.mxu0 0
        %1858 = vmatprep.subr.bf16.mxu0 0
        %1859 = vmatpush1.bf16.msra.mxu0 0
        %1860 = vmatprep.subr.bf16.mxu0 0
        %1861 = vmatpush1.bf16.msra.mxu0 0
        %1862 = vmatprep.mubr.bf16.mxu0 0
        %1863 = vmatmul.mubr.bf16.gmra.mrb[0].mxu0 %v1760
        %v1864 = vpop.f32.mrb[0].mxu0
        %v1865 = vadd.f32 0.0, %v1864
        %v1866 = vpop.f32.mrb[0].mxu0
        %v1867 = vadd.f32 0.0, %v1866
        %v1868 = vpop.f32.mrb[0].mxu0
        %v1869 = vadd.f32 0.0, %v1868
        %v1870 = vpop.f32.mrb[0].mxu0
        %v1871 = vadd.f32 0.0, %v1870
        %1872 = vdwg.mxu0
        %v1873 = vadd.f32 %v1779, %v1822
        %v1874 = vadd.f32 %v1780, %v1824
        %v1875 = vadd.f32 %v1781, %v1865
        %v1876 = vadd.f32 %v1782, %v1867
        %v1877 = vadd.f32 %v1783, %v1826
        %v1878 = vadd.f32 %v1784, %v1828
        %v1879 = vadd.f32 %v1785, %v1869
        %v1880 = vadd.f32 %v1786, %v1871
        %v1881 = vxor.u32 %v1873, 2147483648
        %v1882 = vxor.u32 %v1877, 2147483648
        %v1883 = vmul.f32 %v1881, 1.442695
        %v1884 = vpow.pop %v1883
        %v1885 = vmul.f32 %v1882, 1.442695
        %v1886 = vpow.pop %v1885
        %v1887 = vadd.f32 %v1884, 1.0
        %v1888 = vadd.f32 %v1886, 1.0
        %v1889 = vrcp.pop %v1887
        %v1890 = vmul.f32 1.0, %v1889
        %v1891 = vrcp.pop %v1888
        %v1892 = vmul.f32 1.0, %v1891
        %v1893 = vxor.u32 %v1874, 2147483648
        %v1894 = vxor.u32 %v1878, 2147483648
        %v1895 = vmul.f32 %v1893, 1.442695
        %v1896 = vpow.pop %v1895
        %v1897 = vmul.f32 %v1894, 1.442695
        %v1898 = vpow.pop %v1897
        %v1899 = vadd.f32 %v1896, 1.0
        %v1900 = vadd.f32 %v1898, 1.0
        %v1901 = vrcp.pop %v1899
        %v1902 = vmul.f32 1.0, %v1901
        %v1903 = vrcp.pop %v1900
        %v1904 = vmul.f32 1.0, %v1903
        %v1905 = vtanh.pop %v1875
        %v1906 = vtanh.pop %v1879
        %v1907 = vxor.u32 %v1876, 2147483648
        %v1908 = vxor.u32 %v1880, 2147483648
        %v1909 = vmul.f32 %v1907, 1.442695
        %v1910 = vpow.pop %v1909
        %v1911 = vmul.f32 %v1908, 1.442695
        %v1912 = vpow.pop %v1911
        %v1913 = vadd.f32 %v1910, 1.0
        %v1914 = vadd.f32 %v1912, 1.0
        %v1915 = vrcp.pop %v1913
        %v1916 = vmul.f32 1.0, %v1915
        %v1917 = vrcp.pop %v1914
        %v1918 = vmul.f32 1.0, %v1917
        %v1919 = vmul.f32 %v1902, %v1754
        %v1920 = vmul.f32 %v1904, %v1755
        %v1921 = vmul.f32 %v1890, %v1905
        %v1922 = vmul.f32 %v1892, %v1906
        %v1923 = vadd.f32 %v1919, %v1921
        %v1924 = vadd.f32 %v1920, %v1922
        %v1925 = vtanh.pop %v1923
        %v1926 = vtanh.pop %v1924
        %v1927 = vmul.f32 %v1916, %v1925
        %v1928 = vmul.f32 %v1918, %v1926
        %v1929 = vpack.c.bf16 %v1928, %v1927
        %s1930 = sadd.s32 0, 3
        %v1932 = vunpack.c.l.b16 %v1929
        %v1933 = vunpack.c.h.b16 %v1929
        %v1934 = vpack.c.b16 %v1932, %v1932
        %v1935 = vpack.c.b16 %v1933, %v1933
        %s1938 = smul.u32 %s1930, 2
        %s1939 = smul.addr %s1938, 4
        %s1940 = scalar_lea.vmem %s475, %s1939
        %1941 = vst [vmem:[%s1940] sm:$0xf] %v1934
        %1942 = vst [vmem:[%s1940 + $0x4] sm:$0xf] %v1935
        %s1943 = scalar_lea.vmem [#allocation2], 128
        %v1944 = vld [vmem:[%s1943] sm:$0xff]
        %v1945 = vld [vmem:[%s1943 + $0x8] sm:$0xff]
        %v1946 = vld [vmem:[%s1943 + $0x10] sm:$0xff]
        %v1947 = vld [vmem:[%s1943 + $0x18] sm:$0xff]
        %v1948 = vunpack.c.l.bf16 %v1944
        %v1949 = vunpack.c.l.bf16 %v1945
        %v1950 = vunpack.c.l.bf16 %v1946
        %v1951 = vunpack.c.l.bf16 %v1947
        %v1952 = vunpack.c.h.bf16 %v1944
        %v1953 = vunpack.c.h.bf16 %v1945
        %v1954 = vunpack.c.h.bf16 %v1946
        %v1955 = vunpack.c.h.bf16 %v1947
        %1956 = vmatprep.subr.bf16.mxu0 %v1219
        %1957 = vmatpush1.bf16.msra.mxu0 %v1218
        %1958 = vmatprep.subr.bf16.mxu0 %v1223
        %1959 = vmatpush1.bf16.msra.mxu0 %v1222
        %1960 = vmatprep.subr.bf16.mxu0 %v1227
        %1961 = vmatpush1.bf16.msra.mxu0 %v1226
        %1962 = vmatprep.subr.bf16.mxu0 %v1231
        %1963 = vmatpush1.bf16.msra.mxu0 %v1230
        %1964 = vmatprep.subr.bf16.mxu0 %v1235
        %1965 = vmatpush1.bf16.msra.mxu0 %v1234
        %1966 = vmatprep.subr.bf16.mxu0 %v1239
        %1967 = vmatpush1.bf16.msra.mxu0 %v1238
        %1968 = vmatprep.subr.bf16.mxu0 %v1243
        %1969 = vmatpush1.bf16.msra.mxu0 %v1242
        %1970 = vmatprep.subr.bf16.mxu0 %v1247
        %1971 = vmatpush1.bf16.msra.mxu0 %v1246
        %1972 = vmatprep.subr.bf16.mxu0 0
        %1973 = vmatpush1.bf16.msra.mxu0 0
        %1974 = vmatprep.subr.bf16.mxu0 0
        %1975 = vmatpush1.bf16.msra.mxu0 0
        %1976 = vmatprep.subr.bf16.mxu0 0
        %1977 = vmatpush1.bf16.msra.mxu0 0
        %1978 = vmatprep.subr.bf16.mxu0 0
        %1979 = vmatpush1.bf16.msra.mxu0 0
        %1980 = vmatprep.subr.bf16.mxu0 0
        %1981 = vmatpush1.bf16.msra.mxu0 0
        %1982 = vmatprep.subr.bf16.mxu0 0
        %1983 = vmatpush1.bf16.msra.mxu0 0
        %1984 = vmatprep.subr.bf16.mxu0 0
        %1985 = vmatpush1.bf16.msra.mxu0 0
        %1986 = vmatprep.subr.bf16.mxu0 0
        %1987 = vmatpush1.bf16.msra.mxu0 0
        %1988 = vmatprep.mubr.bf16.mxu0 0
        %1989 = vmatmul.mubr.bf16.gmra.mrb[0].mxu0 %v1929
        %v1990 = vpop.f32.mrb[0].mxu0
        %v1991 = vadd.f32 0.0, %v1990
        %v1992 = vpop.f32.mrb[0].mxu0
        %v1993 = vadd.f32 0.0, %v1992
        %v1994 = vpop.f32.mrb[0].mxu0
        %v1995 = vadd.f32 0.0, %v1994
        %v1996 = vpop.f32.mrb[0].mxu0
        %v1997 = vadd.f32 0.0, %v1996
        %1998 = vdwg.mxu0
        %1999 = vmatprep.subr.bf16.mxu0 %v1221
        %2000 = vmatpush1.bf16.msra.mxu0 %v1220
        %2001 = vmatprep.subr.bf16.mxu0 %v1225
        %2002 = vmatpush1.bf16.msra.mxu0 %v1224
        %2003 = vmatprep.subr.bf16.mxu0 %v1229
        %2004 = vmatpush1.bf16.msra.mxu0 %v1228
        %2005 = vmatprep.subr.bf16.mxu0 %v1233
        %2006 = vmatpush1.bf16.msra.mxu0 %v1232
        %2007 = vmatprep.subr.bf16.mxu0 %v1237
        %2008 = vmatpush1.bf16.msra.mxu0 %v1236
        %2009 = vmatprep.subr.bf16.mxu0 %v1241
        %2010 = vmatpush1.bf16.msra.mxu0 %v1240
        %2011 = vmatprep.subr.bf16.mxu0 %v1245
        %2012 = vmatpush1.bf16.msra.mxu0 %v1244
        %2013 = vmatprep.subr.bf16.mxu0 %v1249
        %2014 = vmatpush1.bf16.msra.mxu0 %v1248
        %2015 = vmatprep.subr.bf16.mxu0 0
        %2016 = vmatpush1.bf16.msra.mxu0 0
        %2017 = vmatprep.subr.bf16.mxu0 0
        %2018 = vmatpush1.bf16.msra.mxu0 0
        %2019 = vmatprep.subr.bf16.mxu0 0
        %2020 = vmatpush1.bf16.msra.mxu0 0
        %2021 = vmatprep.subr.bf16.mxu0 0
        %2022 = vmatpush1.bf16.msra.mxu0 0
        %2023 = vmatprep.subr.bf16.mxu0 0
        %2024 = vmatpush1.bf16.msra.mxu0 0
        %2025 = vmatprep.subr.bf16.mxu0 0
        %2026 = vmatpush1.bf16.msra.mxu0 0
        %2027 = vmatprep.subr.bf16.mxu0 0
        %2028 = vmatpush1.bf16.msra.mxu0 0
        %2029 = vmatprep.subr.bf16.mxu0 0
        %2030 = vmatpush1.bf16.msra.mxu0 0
        %2031 = vmatprep.mubr.bf16.mxu0 0
        %2032 = vmatmul.mubr.bf16.gmra.mrb[0].mxu0 %v1929
        %v2033 = vpop.f32.mrb[0].mxu0
        %v2034 = vadd.f32 0.0, %v2033
        %v2035 = vpop.f32.mrb[0].mxu0
        %v2036 = vadd.f32 0.0, %v2035
        %v2037 = vpop.f32.mrb[0].mxu0
        %v2038 = vadd.f32 0.0, %v2037
        %v2039 = vpop.f32.mrb[0].mxu0
        %v2040 = vadd.f32 0.0, %v2039
        %2041 = vdwg.mxu0
        %v2042 = vadd.f32 %v1948, %v1991
        %v2043 = vadd.f32 %v1949, %v1993
        %v2044 = vadd.f32 %v1950, %v2034
        %v2045 = vadd.f32 %v1951, %v2036
        %v2046 = vadd.f32 %v1952, %v1995
        %v2047 = vadd.f32 %v1953, %v1997
        %v2048 = vadd.f32 %v1954, %v2038
        %v2049 = vadd.f32 %v1955, %v2040
        %v2050 = vxor.u32 %v2042, 2147483648
        %v2051 = vxor.u32 %v2046, 2147483648
        %v2052 = vmul.f32 %v2050, 1.442695
        %v2053 = vpow.pop %v2052
        %v2054 = vmul.f32 %v2051, 1.442695
        %v2055 = vpow.pop %v2054
        %v2056 = vadd.f32 %v2053, 1.0
        %v2057 = vadd.f32 %v2055, 1.0
        %v2058 = vrcp.pop %v2056
        %v2059 = vmul.f32 1.0, %v2058
        %v2060 = vrcp.pop %v2057
        %v2061 = vmul.f32 1.0, %v2060
        %v2062 = vxor.u32 %v2043, 2147483648
        %v2063 = vxor.u32 %v2047, 2147483648
        %v2064 = vmul.f32 %v2062, 1.442695
        %v2065 = vpow.pop %v2064
        %v2066 = vmul.f32 %v2063, 1.442695
        %v2067 = vpow.pop %v2066
        %v2068 = vadd.f32 %v2065, 1.0
        %v2069 = vadd.f32 %v2067, 1.0
        %v2070 = vrcp.pop %v2068
        %v2071 = vmul.f32 1.0, %v2070
        %v2072 = vrcp.pop %v2069
        %v2073 = vmul.f32 1.0, %v2072
        %v2074 = vtanh.pop %v2044
        %v2075 = vtanh.pop %v2048
        %v2076 = vxor.u32 %v2045, 2147483648
        %v2077 = vxor.u32 %v2049, 2147483648
        %v2078 = vmul.f32 %v2076, 1.442695
        %v2079 = vpow.pop %v2078
        %v2080 = vmul.f32 %v2077, 1.442695
        %v2081 = vpow.pop %v2080
        %v2082 = vadd.f32 %v2079, 1.0
        %v2083 = vadd.f32 %v2081, 1.0
        %v2084 = vrcp.pop %v2082
        %v2085 = vmul.f32 1.0, %v2084
        %v2086 = vrcp.pop %v2083
        %v2087 = vmul.f32 1.0, %v2086
        %v2088 = vmul.f32 %v2071, %v1923
        %v2089 = vmul.f32 %v2073, %v1924
        %v2090 = vmul.f32 %v2059, %v2074
        %v2091 = vmul.f32 %v2061, %v2075
        %v2092 = vadd.f32 %v2088, %v2090
        %v2093 = vadd.f32 %v2089, %v2091
        %v2094 = vtanh.pop %v2092
        %v2095 = vtanh.pop %v2093
        %v2096 = vmul.f32 %v2085, %v2094
        %v2097 = vmul.f32 %v2087, %v2095
        %v2098 = vpack.c.bf16 %v2097, %v2096
        %s2099 = sadd.s32 0, 4
        %v2101 = vunpack.c.l.b16 %v2098
        %v2102 = vunpack.c.h.b16 %v2098
        %v2103 = vpack.c.b16 %v2101, %v2101
        %v2104 = vpack.c.b16 %v2102, %v2102
        %s2107 = smul.u32 %s2099, 2
        %s2108 = smul.addr %s2107, 4
        %s2109 = scalar_lea.vmem %s475, %s2108
        %2110 = vst [vmem:[%s2109] sm:$0xf] %v2103
        %2111 = vst [vmem:[%s2109 + $0x4] sm:$0xf] %v2104
        %s2112 = scalar_lea.vmem [#allocation2], 160
        %v2113 = vld [vmem:[%s2112] sm:$0xff]
        %v2114 = vld [vmem:[%s2112 + $0x8] sm:$0xff]
        %v2115 = vld [vmem:[%s2112 + $0x10] sm:$0xff]
        %v2116 = vld [vmem:[%s2112 + $0x18] sm:$0xff]
        %v2117 = vunpack.c.l.bf16 %v2113
        %v2118 = vunpack.c.l.bf16 %v2114
        %v2119 = vunpack.c.l.bf16 %v2115
        %v2120 = vunpack.c.l.bf16 %v2116
        %v2121 = vunpack.c.h.bf16 %v2113
        %v2122 = vunpack.c.h.bf16 %v2114
        %v2123 = vunpack.c.h.bf16 %v2115
        %v2124 = vunpack.c.h.bf16 %v2116
        %2125 = vmatprep.subr.bf16.mxu0 %v1219
        %2126 = vmatpush1.bf16.msra.mxu0 %v1218
        %2127 = vmatprep.subr.bf16.mxu0 %v1223
        %2128 = vmatpush1.bf16.msra.mxu0 %v1222
        %2129 = vmatprep.subr.bf16.mxu0 %v1227
        %2130 = vmatpush1.bf16.msra.mxu0 %v1226
        %2131 = vmatprep.subr.bf16.mxu0 %v1231
        %2132 = vmatpush1.bf16.msra.mxu0 %v1230
        %2133 = vmatprep.subr.bf16.mxu0 %v1235
        %2134 = vmatpush1.bf16.msra.mxu0 %v1234
        %2135 = vmatprep.subr.bf16.mxu0 %v1239
        %2136 = vmatpush1.bf16.msra.mxu0 %v1238
        %2137 = vmatprep.subr.bf16.mxu0 %v1243
        %2138 = vmatpush1.bf16.msra.mxu0 %v1242
        %2139 = vmatprep.subr.bf16.mxu0 %v1247
        %2140 = vmatpush1.bf16.msra.mxu0 %v1246
        %2141 = vmatprep.subr.bf16.mxu0 0
        %2142 = vmatpush1.bf16.msra.mxu0 0
        %2143 = vmatprep.subr.bf16.mxu0 0
        %2144 = vmatpush1.bf16.msra.mxu0 0
        %2145 = vmatprep.subr.bf16.mxu0 0
        %2146 = vmatpush1.bf16.msra.mxu0 0
        %2147 = vmatprep.subr.bf16.mxu0 0
        %2148 = vmatpush1.bf16.msra.mxu0 0
        %2149 = vmatprep.subr.bf16.mxu0 0
        %2150 = vmatpush1.bf16.msra.mxu0 0
        %2151 = vmatprep.subr.bf16.mxu0 0
        %2152 = vmatpush1.bf16.msra.mxu0 0
        %2153 = vmatprep.subr.bf16.mxu0 0
        %2154 = vmatpush1.bf16.msra.mxu0 0
        %2155 = vmatprep.subr.bf16.mxu0 0
        %2156 = vmatpush1.bf16.msra.mxu0 0
        %2157 = vmatprep.mubr.bf16.mxu0 0
        %2158 = vmatmul.mubr.bf16.gmra.mrb[0].mxu0 %v2098
        %v2159 = vpop.f32.mrb[0].mxu0
        %v2160 = vadd.f32 0.0, %v2159
        %v2161 = vpop.f32.mrb[0].mxu0
        %v2162 = vadd.f32 0.0, %v2161
        %v2163 = vpop.f32.mrb[0].mxu0
        %v2164 = vadd.f32 0.0, %v2163
        %v2165 = vpop.f32.mrb[0].mxu0
        %v2166 = vadd.f32 0.0, %v2165
        %2167 = vdwg.mxu0
        %2168 = vmatprep.subr.bf16.mxu0 %v1221
        %2169 = vmatpush1.bf16.msra.mxu0 %v1220
        %2170 = vmatprep.subr.bf16.mxu0 %v1225
        %2171 = vmatpush1.bf16.msra.mxu0 %v1224
        %2172 = vmatprep.subr.bf16.mxu0 %v1229
        %2173 = vmatpush1.bf16.msra.mxu0 %v1228
        %2174 = vmatprep.subr.bf16.mxu0 %v1233
        %2175 = vmatpush1.bf16.msra.mxu0 %v1232
        %2176 = vmatprep.subr.bf16.mxu0 %v1237
        %2177 = vmatpush1.bf16.msra.mxu0 %v1236
        %2178 = vmatprep.subr.bf16.mxu0 %v1241
        %2179 = vmatpush1.bf16.msra.mxu0 %v1240
        %2180 = vmatprep.subr.bf16.mxu0 %v1245
        %2181 = vmatpush1.bf16.msra.mxu0 %v1244
        %2182 = vmatprep.subr.bf16.mxu0 %v1249
        %2183 = vmatpush1.bf16.msra.mxu0 %v1248
        %2184 = vmatprep.subr.bf16.mxu0 0
        %2185 = vmatpush1.bf16.msra.mxu0 0
        %2186 = vmatprep.subr.bf16.mxu0 0
        %2187 = vmatpush1.bf16.msra.mxu0 0
        %2188 = vmatprep.subr.bf16.mxu0 0
        %2189 = vmatpush1.bf16.msra.mxu0 0
        %2190 = vmatprep.subr.bf16.mxu0 0
        %2191 = vmatpush1.bf16.msra.mxu0 0
        %2192 = vmatprep.subr.bf16.mxu0 0
        %2193 = vmatpush1.bf16.msra.mxu0 0
        %2194 = vmatprep.subr.bf16.mxu0 0
        %2195 = vmatpush1.bf16.msra.mxu0 0
        %2196 = vmatprep.subr.bf16.mxu0 0
        %2197 = vmatpush1.bf16.msra.mxu0 0
        %2198 = vmatprep.subr.bf16.mxu0 0
        %2199 = vmatpush1.bf16.msra.mxu0 0
        %2200 = vmatprep.mubr.bf16.mxu0 0
        %2201 = vmatmul.mubr.bf16.gmra.mrb[0].mxu0 %v2098
        %v2202 = vpop.f32.mrb[0].mxu0
        %v2203 = vadd.f32 0.0, %v2202
        %v2204 = vpop.f32.mrb[0].mxu0
        %v2205 = vadd.f32 0.0, %v2204
        %v2206 = vpop.f32.mrb[0].mxu0
        %v2207 = vadd.f32 0.0, %v2206
        %v2208 = vpop.f32.mrb[0].mxu0
        %v2209 = vadd.f32 0.0, %v2208
        %2210 = vdwg.mxu0
        %v2211 = vadd.f32 %v2117, %v2160
        %v2212 = vadd.f32 %v2118, %v2162
        %v2213 = vadd.f32 %v2119, %v2203
        %v2214 = vadd.f32 %v2120, %v2205
        %v2215 = vadd.f32 %v2121, %v2164
        %v2216 = vadd.f32 %v2122, %v2166
        %v2217 = vadd.f32 %v2123, %v2207
        %v2218 = vadd.f32 %v2124, %v2209
        %v2219 = vxor.u32 %v2211, 2147483648
        %v2220 = vxor.u32 %v2215, 2147483648
        %v2221 = vmul.f32 %v2219, 1.442695
        %v2222 = vpow.pop %v2221
        %v2223 = vmul.f32 %v2220, 1.442695
        %v2224 = vpow.pop %v2223
        %v2225 = vadd.f32 %v2222, 1.0
        %v2226 = vadd.f32 %v2224, 1.0
        %v2227 = vrcp.pop %v2225
        %v2228 = vmul.f32 1.0, %v2227
        %v2229 = vrcp.pop %v2226
        %v2230 = vmul.f32 1.0, %v2229
        %v2231 = vxor.u32 %v2212, 2147483648
        %v2232 = vxor.u32 %v2216, 2147483648
        %v2233 = vmul.f32 %v2231, 1.442695
        %v2234 = vpow.pop %v2233
        %v2235 = vmul.f32 %v2232, 1.442695
        %v2236 = vpow.pop %v2235
        %v2237 = vadd.f32 %v2234, 1.0
        %v2238 = vadd.f32 %v2236, 1.0
        %v2239 = vrcp.pop %v2237
        %v2240 = vmul.f32 1.0, %v2239
        %v2241 = vrcp.pop %v2238
        %v2242 = vmul.f32 1.0, %v2241
        %v2243 = vtanh.pop %v2213
        %v2244 = vtanh.pop %v2217
        %v2245 = vxor.u32 %v2214, 2147483648
        %v2246 = vxor.u32 %v2218, 2147483648
        %v2247 = vmul.f32 %v2245, 1.442695
        %v2248 = vpow.pop %v2247
        %v2249 = vmul.f32 %v2246, 1.442695
        %v2250 = vpow.pop %v2249
        %v2251 = vadd.f32 %v2248, 1.0
        %v2252 = vadd.f32 %v2250, 1.0
        %v2253 = vrcp.pop %v2251
        %v2254 = vmul.f32 1.0, %v2253
        %v2255 = vrcp.pop %v2252
        %v2256 = vmul.f32 1.0, %v2255
        %v2257 = vmul.f32 %v2240, %v2092
        %v2258 = vmul.f32 %v2242, %v2093
        %v2259 = vmul.f32 %v2228, %v2243
        %v2260 = vmul.f32 %v2230, %v2244
        %v2261 = vadd.f32 %v2257, %v2259
        %v2262 = vadd.f32 %v2258, %v2260
        %v2263 = vtanh.pop %v2261
        %v2264 = vtanh.pop %v2262
        %v2265 = vmul.f32 %v2254, %v2263
        %v2266 = vmul.f32 %v2256, %v2264
        %v2267 = vpack.c.bf16 %v2266, %v2265
        %s2268 = sadd.s32 0, 5
        %v2270 = vunpack.c.l.b16 %v2267
        %v2271 = vunpack.c.h.b16 %v2267
        %v2272 = vpack.c.b16 %v2270, %v2270
        %v2273 = vpack.c.b16 %v2271, %v2271
        %s2276 = smul.u32 %s2268, 2
        %s2277 = smul.addr %s2276, 4
        %s2278 = scalar_lea.vmem %s475, %s2277
        %2279 = vst [vmem:[%s2278] sm:$0xf] %v2272
        %2280 = vst [vmem:[%s2278 + $0x4] sm:$0xf] %v2273
        %s2281 = scalar_lea.vmem [#allocation2], 192
        %v2282 = vld [vmem:[%s2281] sm:$0xff]
        %v2283 = vld [vmem:[%s2281 + $0x8] sm:$0xff]
        %v2284 = vld [vmem:[%s2281 + $0x10] sm:$0xff]
        %v2285 = vld [vmem:[%s2281 + $0x18] sm:$0xff]
        %v2286 = vunpack.c.l.bf16 %v2282
        %v2287 = vunpack.c.l.bf16 %v2283
        %v2288 = vunpack.c.l.bf16 %v2284
        %v2289 = vunpack.c.l.bf16 %v2285
        %v2290 = vunpack.c.h.bf16 %v2282
        %v2291 = vunpack.c.h.bf16 %v2283
        %v2292 = vunpack.c.h.bf16 %v2284
        %v2293 = vunpack.c.h.bf16 %v2285
        %2294 = vmatprep.subr.bf16.mxu0 %v1219
        %2295 = vmatpush1.bf16.msra.mxu0 %v1218
        %2296 = vmatprep.subr.bf16.mxu0 %v1223
        %2297 = vmatpush1.bf16.msra.mxu0 %v1222
        %2298 = vmatprep.subr.bf16.mxu0 %v1227
        %2299 = vmatpush1.bf16.msra.mxu0 %v1226
        %2300 = vmatprep.subr.bf16.mxu0 %v1231
        %2301 = vmatpush1.bf16.msra.mxu0 %v1230
        %2302 = vmatprep.subr.bf16.mxu0 %v1235
        %2303 = vmatpush1.bf16.msra.mxu0 %v1234
        %2304 = vmatprep.subr.bf16.mxu0 %v1239
        %2305 = vmatpush1.bf16.msra.mxu0 %v1238
        %2306 = vmatprep.subr.bf16.mxu0 %v1243
        %2307 = vmatpush1.bf16.msra.mxu0 %v1242
        %2308 = vmatprep.subr.bf16.mxu0 %v1247
        %2309 = vmatpush1.bf16.msra.mxu0 %v1246
        %2310 = vmatprep.subr.bf16.mxu0 0
        %2311 = vmatpush1.bf16.msra.mxu0 0
        %2312 = vmatprep.subr.bf16.mxu0 0
        %2313 = vmatpush1.bf16.msra.mxu0 0
        %2314 = vmatprep.subr.bf16.mxu0 0
        %2315 = vmatpush1.bf16.msra.mxu0 0
        %2316 = vmatprep.subr.bf16.mxu0 0
        %2317 = vmatpush1.bf16.msra.mxu0 0
        %2318 = vmatprep.subr.bf16.mxu0 0
        %2319 = vmatpush1.bf16.msra.mxu0 0
        %2320 = vmatprep.subr.bf16.mxu0 0
        %2321 = vmatpush1.bf16.msra.mxu0 0
        %2322 = vmatprep.subr.bf16.mxu0 0
        %2323 = vmatpush1.bf16.msra.mxu0 0
        %2324 = vmatprep.subr.bf16.mxu0 0
        %2325 = vmatpush1.bf16.msra.mxu0 0
        %2326 = vmatprep.mubr.bf16.mxu0 0
        %2327 = vmatmul.mubr.bf16.gmra.mrb[0].mxu0 %v2267
        %v2328 = vpop.f32.mrb[0].mxu0
        %v2329 = vadd.f32 0.0, %v2328
        %v2330 = vpop.f32.mrb[0].mxu0
        %v2331 = vadd.f32 0.0, %v2330
        %v2332 = vpop.f32.mrb[0].mxu0
        %v2333 = vadd.f32 0.0, %v2332
        %v2334 = vpop.f32.mrb[0].mxu0
        %v2335 = vadd.f32 0.0, %v2334
        %2336 = vdwg.mxu0
        %2337 = vmatprep.subr.bf16.mxu0 %v1221
        %2338 = vmatpush1.bf16.msra.mxu0 %v1220
        %2339 = vmatprep.subr.bf16.mxu0 %v1225
        %2340 = vmatpush1.bf16.msra.mxu0 %v1224
        %2341 = vmatprep.subr.bf16.mxu0 %v1229
        %2342 = vmatpush1.bf16.msra.mxu0 %v1228
        %2343 = vmatprep.subr.bf16.mxu0 %v1233
        %2344 = vmatpush1.bf16.msra.mxu0 %v1232
        %2345 = vmatprep.subr.bf16.mxu0 %v1237
        %2346 = vmatpush1.bf16.msra.mxu0 %v1236
        %2347 = vmatprep.subr.bf16.mxu0 %v1241
        %2348 = vmatpush1.bf16.msra.mxu0 %v1240
        %2349 = vmatprep.subr.bf16.mxu0 %v1245
        %2350 = vmatpush1.bf16.msra.mxu0 %v1244
        %2351 = vmatprep.subr.bf16.mxu0 %v1249
        %2352 = vmatpush1.bf16.msra.mxu0 %v1248
        %2353 = vmatprep.subr.bf16.mxu0 0
        %2354 = vmatpush1.bf16.msra.mxu0 0
        %2355 = vmatprep.subr.bf16.mxu0 0
        %2356 = vmatpush1.bf16.msra.mxu0 0
        %2357 = vmatprep.subr.bf16.mxu0 0
        %2358 = vmatpush1.bf16.msra.mxu0 0
        %2359 = vmatprep.subr.bf16.mxu0 0
        %2360 = vmatpush1.bf16.msra.mxu0 0
        %2361 = vmatprep.subr.bf16.mxu0 0
        %2362 = vmatpush1.bf16.msra.mxu0 0
        %2363 = vmatprep.subr.bf16.mxu0 0
        %2364 = vmatpush1.bf16.msra.mxu0 0
        %2365 = vmatprep.subr.bf16.mxu0 0
        %2366 = vmatpush1.bf16.msra.mxu0 0
        %2367 = vmatprep.subr.bf16.mxu0 0
        %2368 = vmatpush1.bf16.msra.mxu0 0
        %2369 = vmatprep.mubr.bf16.mxu0 0
        %2370 = vmatmul.mubr.bf16.gmra.mrb[0].mxu0 %v2267
        %v2371 = vpop.f32.mrb[0].mxu0
        %v2372 = vadd.f32 0.0, %v2371
        %v2373 = vpop.f32.mrb[0].mxu0
        %v2374 = vadd.f32 0.0, %v2373
        %v2375 = vpop.f32.mrb[0].mxu0
        %v2376 = vadd.f32 0.0, %v2375
        %v2377 = vpop.f32.mrb[0].mxu0
        %v2378 = vadd.f32 0.0, %v2377
        %2379 = vdwg.mxu0
        %v2380 = vadd.f32 %v2286, %v2329
        %v2381 = vadd.f32 %v2287, %v2331
        %v2382 = vadd.f32 %v2288, %v2372
        %v2383 = vadd.f32 %v2289, %v2374
        %v2384 = vadd.f32 %v2290, %v2333
        %v2385 = vadd.f32 %v2291, %v2335
        %v2386 = vadd.f32 %v2292, %v2376
        %v2387 = vadd.f32 %v2293, %v2378
        %v2388 = vxor.u32 %v2380, 2147483648
        %v2389 = vxor.u32 %v2384, 2147483648
        %v2390 = vmul.f32 %v2388, 1.442695
        %v2391 = vpow.pop %v2390
        %v2392 = vmul.f32 %v2389, 1.442695
        %v2393 = vpow.pop %v2392
        %v2394 = vadd.f32 %v2391, 1.0
        %v2395 = vadd.f32 %v2393, 1.0
        %v2396 = vrcp.pop %v2394
        %v2397 = vmul.f32 1.0, %v2396
        %v2398 = vrcp.pop %v2395
        %v2399 = vmul.f32 1.0, %v2398
        %v2400 = vxor.u32 %v2381, 2147483648
        %v2401 = vxor.u32 %v2385, 2147483648
        %v2402 = vmul.f32 %v2400, 1.442695
        %v2403 = vpow.pop %v2402
        %v2404 = vmul.f32 %v2401, 1.442695
        %v2405 = vpow.pop %v2404
        %v2406 = vadd.f32 %v2403, 1.0
        %v2407 = vadd.f32 %v2405, 1.0
        %v2408 = vrcp.pop %v2406
        %v2409 = vmul.f32 1.0, %v2408
        %v2410 = vrcp.pop %v2407
        %v2411 = vmul.f32 1.0, %v2410
        %v2412 = vtanh.pop %v2382
        %v2413 = vtanh.pop %v2386
        %v2414 = vxor.u32 %v2383, 2147483648
        %v2415 = vxor.u32 %v2387, 2147483648
        %v2416 = vmul.f32 %v2414, 1.442695
        %v2417 = vpow.pop %v2416
        %v2418 = vmul.f32 %v2415, 1.442695
        %v2419 = vpow.pop %v2418
        %v2420 = vadd.f32 %v2417, 1.0
        %v2421 = vadd.f32 %v2419, 1.0
        %v2422 = vrcp.pop %v2420
        %v2423 = vmul.f32 1.0, %v2422
        %v2424 = vrcp.pop %v2421
        %v2425 = vmul.f32 1.0, %v2424
        %v2426 = vmul.f32 %v2409, %v2261
        %v2427 = vmul.f32 %v2411, %v2262
        %v2428 = vmul.f32 %v2397, %v2412
        %v2429 = vmul.f32 %v2399, %v2413
        %v2430 = vadd.f32 %v2426, %v2428
        %v2431 = vadd.f32 %v2427, %v2429
        %v2432 = vtanh.pop %v2430
        %v2433 = vtanh.pop %v2431
        %v2434 = vmul.f32 %v2423, %v2432
        %v2435 = vmul.f32 %v2425, %v2433
        %v2436 = vpack.c.bf16 %v2435, %v2434
        %s2437 = sadd.s32 0, 6
        %v2439 = vunpack.c.l.b16 %v2436
        %v2440 = vunpack.c.h.b16 %v2436
        %v2441 = vpack.c.b16 %v2439, %v2439
        %v2442 = vpack.c.b16 %v2440, %v2440
        %s2445 = smul.u32 %s2437, 2
        %s2446 = smul.addr %s2445, 4
        %s2447 = scalar_lea.vmem %s475, %s2446
        %2448 = vst [vmem:[%s2447] sm:$0xf] %v2441
        %2449 = vst [vmem:[%s2447 + $0x4] sm:$0xf] %v2442
        %s2450 = scalar_lea.vmem [#allocation2], 224
        %v2451 = vld [vmem:[%s2450] sm:$0xff]
        %v2452 = vld [vmem:[%s2450 + $0x8] sm:$0xff]
        %v2453 = vld [vmem:[%s2450 + $0x10] sm:$0xff]
        %v2454 = vld [vmem:[%s2450 + $0x18] sm:$0xff]
        %v2455 = vunpack.c.l.bf16 %v2451
        %v2456 = vunpack.c.l.bf16 %v2452
        %v2457 = vunpack.c.l.bf16 %v2453
        %v2458 = vunpack.c.l.bf16 %v2454
        %v2459 = vunpack.c.h.bf16 %v2451
        %v2460 = vunpack.c.h.bf16 %v2452
        %v2461 = vunpack.c.h.bf16 %v2453
        %v2462 = vunpack.c.h.bf16 %v2454
        %2463 = vmatprep.subr.bf16.mxu0 %v1219
        %2464 = vmatpush1.bf16.msra.mxu0 %v1218
        %2465 = vmatprep.subr.bf16.mxu0 %v1223
        %2466 = vmatpush1.bf16.msra.mxu0 %v1222
        %2467 = vmatprep.subr.bf16.mxu0 %v1227
        %2468 = vmatpush1.bf16.msra.mxu0 %v1226
        %2469 = vmatprep.subr.bf16.mxu0 %v1231
        %2470 = vmatpush1.bf16.msra.mxu0 %v1230
        %2471 = vmatprep.subr.bf16.mxu0 %v1235
        %2472 = vmatpush1.bf16.msra.mxu0 %v1234
        %2473 = vmatprep.subr.bf16.mxu0 %v1239
        %2474 = vmatpush1.bf16.msra.mxu0 %v1238
        %2475 = vmatprep.subr.bf16.mxu0 %v1243
        %2476 = vmatpush1.bf16.msra.mxu0 %v1242
        %2477 = vmatprep.subr.bf16.mxu0 %v1247
        %2478 = vmatpush1.bf16.msra.mxu0 %v1246
        %2479 = vmatprep.subr.bf16.mxu0 0
        %2480 = vmatpush1.bf16.msra.mxu0 0
        %2481 = vmatprep.subr.bf16.mxu0 0
        %2482 = vmatpush1.bf16.msra.mxu0 0
        %2483 = vmatprep.subr.bf16.mxu0 0
        %2484 = vmatpush1.bf16.msra.mxu0 0
        %2485 = vmatprep.subr.bf16.mxu0 0
        %2486 = vmatpush1.bf16.msra.mxu0 0
        %2487 = vmatprep.subr.bf16.mxu0 0
        %2488 = vmatpush1.bf16.msra.mxu0 0
        %2489 = vmatprep.subr.bf16.mxu0 0
        %2490 = vmatpush1.bf16.msra.mxu0 0
        %2491 = vmatprep.subr.bf16.mxu0 0
        %2492 = vmatpush1.bf16.msra.mxu0 0
        %2493 = vmatprep.subr.bf16.mxu0 0
        %2494 = vmatpush1.bf16.msra.mxu0 0
        %2495 = vmatprep.mubr.bf16.mxu0 0
        %2496 = vmatmul.mubr.bf16.gmra.mrb[0].mxu0 %v2436
        %v2497 = vpop.f32.mrb[0].mxu0
        %v2498 = vadd.f32 0.0, %v2497
        %v2499 = vpop.f32.mrb[0].mxu0
        %v2500 = vadd.f32 0.0, %v2499
        %v2501 = vpop.f32.mrb[0].mxu0
        %v2502 = vadd.f32 0.0, %v2501
        %v2503 = vpop.f32.mrb[0].mxu0
        %v2504 = vadd.f32 0.0, %v2503
        %2505 = vdwg.mxu0
        %2506 = vmatprep.subr.bf16.mxu0 %v1221
        %2507 = vmatpush1.bf16.msra.mxu0 %v1220
        %2508 = vmatprep.subr.bf16.mxu0 %v1225
        %2509 = vmatpush1.bf16.msra.mxu0 %v1224
        %2510 = vmatprep.subr.bf16.mxu0 %v1229
        %2511 = vmatpush1.bf16.msra.mxu0 %v1228
        %2512 = vmatprep.subr.bf16.mxu0 %v1233
        %2513 = vmatpush1.bf16.msra.mxu0 %v1232
        %2514 = vmatprep.subr.bf16.mxu0 %v1237
        %2515 = vmatpush1.bf16.msra.mxu0 %v1236
        %2516 = vmatprep.subr.bf16.mxu0 %v1241
        %2517 = vmatpush1.bf16.msra.mxu0 %v1240
        %2518 = vmatprep.subr.bf16.mxu0 %v1245
        %2519 = vmatpush1.bf16.msra.mxu0 %v1244
        %2520 = vmatprep.subr.bf16.mxu0 %v1249
        %2521 = vmatpush1.bf16.msra.mxu0 %v1248
        %2522 = vmatprep.subr.bf16.mxu0 0
        %2523 = vmatpush1.bf16.msra.mxu0 0
        %2524 = vmatprep.subr.bf16.mxu0 0
        %2525 = vmatpush1.bf16.msra.mxu0 0
        %2526 = vmatprep.subr.bf16.mxu0 0
        %2527 = vmatpush1.bf16.msra.mxu0 0
        %2528 = vmatprep.subr.bf16.mxu0 0
        %2529 = vmatpush1.bf16.msra.mxu0 0
        %2530 = vmatprep.subr.bf16.mxu0 0
        %2531 = vmatpush1.bf16.msra.mxu0 0
        %2532 = vmatprep.subr.bf16.mxu0 0
        %2533 = vmatpush1.bf16.msra.mxu0 0
        %2534 = vmatprep.subr.bf16.mxu0 0
        %2535 = vmatpush1.bf16.msra.mxu0 0
        %2536 = vmatprep.subr.bf16.mxu0 0
        %2537 = vmatpush1.bf16.msra.mxu0 0
        %2538 = vmatprep.mubr.bf16.mxu0 0
        %2539 = vmatmul.mubr.bf16.gmra.mrb[0].mxu0 %v2436
        %v2540 = vpop.f32.mrb[0].mxu0
        %v2541 = vadd.f32 0.0, %v2540
        %v2542 = vpop.f32.mrb[0].mxu0
        %v2543 = vadd.f32 0.0, %v2542
        %v2544 = vpop.f32.mrb[0].mxu0
        %v2545 = vadd.f32 0.0, %v2544
        %v2546 = vpop.f32.mrb[0].mxu0
        %v2547 = vadd.f32 0.0, %v2546
        %2548 = vdwg.mxu0
        %v2549 = vadd.f32 %v2455, %v2498
        %v2550 = vadd.f32 %v2456, %v2500
        %v2551 = vadd.f32 %v2457, %v2541
        %v2552 = vadd.f32 %v2458, %v2543
        %v2553 = vadd.f32 %v2459, %v2502
        %v2554 = vadd.f32 %v2460, %v2504
        %v2555 = vadd.f32 %v2461, %v2545
        %v2556 = vadd.f32 %v2462, %v2547
        %v2557 = vxor.u32 %v2549, 2147483648
        %v2558 = vxor.u32 %v2553, 2147483648
        %v2559 = vmul.f32 %v2557, 1.442695
        %v2560 = vpow.pop %v2559
        %v2561 = vmul.f32 %v2558, 1.442695
        %v2562 = vpow.pop %v2561
        %v2563 = vadd.f32 %v2560, 1.0
        %v2564 = vadd.f32 %v2562, 1.0
        %v2565 = vrcp.pop %v2563
        %v2566 = vmul.f32 1.0, %v2565
        %v2567 = vrcp.pop %v2564
        %v2568 = vmul.f32 1.0, %v2567
        %v2569 = vxor.u32 %v2550, 2147483648
        %v2570 = vxor.u32 %v2554, 2147483648
        %v2571 = vmul.f32 %v2569, 1.442695
        %v2572 = vpow.pop %v2571
        %v2573 = vmul.f32 %v2570, 1.442695
        %v2574 = vpow.pop %v2573
        %v2575 = vadd.f32 %v2572, 1.0
        %v2576 = vadd.f32 %v2574, 1.0
        %v2577 = vrcp.pop %v2575
        %v2578 = vmul.f32 1.0, %v2577
        %v2579 = vrcp.pop %v2576
        %v2580 = vmul.f32 1.0, %v2579
        %v2581 = vtanh.pop %v2551
        %v2582 = vtanh.pop %v2555
        %v2583 = vxor.u32 %v2552, 2147483648
        %v2584 = vxor.u32 %v2556, 2147483648
        %v2585 = vmul.f32 %v2583, 1.442695
        %v2586 = vpow.pop %v2585
        %v2587 = vmul.f32 %v2584, 1.442695
        %v2588 = vpow.pop %v2587
        %v2589 = vadd.f32 %v2586, 1.0
        %v2590 = vadd.f32 %v2588, 1.0
        %v2591 = vrcp.pop %v2589
        %v2592 = vmul.f32 1.0, %v2591
        %v2593 = vrcp.pop %v2590
        %v2594 = vmul.f32 1.0, %v2593
        %v2595 = vmul.f32 %v2578, %v2430
        %v2596 = vmul.f32 %v2580, %v2431
        %v2597 = vmul.f32 %v2566, %v2581
        %v2598 = vmul.f32 %v2568, %v2582
        %v2599 = vadd.f32 %v2595, %v2597
        %v2600 = vadd.f32 %v2596, %v2598
        %v2601 = vtanh.pop %v2599
        %v2602 = vtanh.pop %v2600
        %v2603 = vmul.f32 %v2592, %v2601
        %v2604 = vmul.f32 %v2594, %v2602
        %v2605 = vpack.c.bf16 %v2604, %v2603
        %s2606 = sadd.s32 0, 7
        %v2608 = vunpack.c.l.b16 %v2605
        %v2609 = vunpack.c.h.b16 %v2605
        %v2610 = vpack.c.b16 %v2608, %v2608
        %v2611 = vpack.c.b16 %v2609, %v2609
        %s2614 = smul.u32 %s2606, 2
        %s2615 = smul.addr %s2614, 4
        %s2616 = scalar_lea.vmem %s475, %s2615
        %2617 = vst [vmem:[%s2616] sm:$0xf] %v2610
        %2618 = vst [vmem:[%s2616 + $0x4] sm:$0xf] %v2611
        %2619 = vst [vmem:[%s485] sm:$0xff] %v2603
        %2620 = vst [vmem:[%s485 + $0x8] sm:$0xff] %v2604
        %2621 = vst [vmem:[%s495] sm:$0xff] %v2599
        %2622 = vst [vmem:[%s495 + $0x8] sm:$0xff] %v2600
      $region48: #{mamba_model_forward.2} parent=43 // pred_fallthru
        _
      %p2623 = scmp.gt.s32.totalorder %s25, 0
      // Predicated region
      $region49: #{mamba_model_forward.2} parent=43 // pred_check
        %p2624 = pneg %p2623
      $region50: #{mamba_model_forward.2} parent=43 // pred_check_branch
        %2626 = sbr.rel (%p2624) target = $region52
      $region51: #{mamba_model_forward.2} parent=43 // pred_region
        %v2627 = vld [vmem:[%s461] sm:$0xff]
        %v2628 = vld [vmem:[%s461 + $0x8] sm:$0xff]
        %v2629 = vld [vmem:[%s461 + $0x10] sm:$0xff]
        %v2630 = vld [vmem:[%s461 + $0x18] sm:$0xff]
        %v2631 = vld [vmem:[%s461 + $0x20] sm:$0xff]
        %v2632 = vld [vmem:[%s461 + $0x28] sm:$0xff]
        %v2633 = vld [vmem:[%s461 + $0x30] sm:$0xff]
        %v2634 = vld [vmem:[%s461 + $0x38] sm:$0xff]
        %v2635 = vld [vmem:[%s461 + $0x40] sm:$0xff]
        %v2636 = vld [vmem:[%s461 + $0x48] sm:$0xff]
        %v2637 = vld [vmem:[%s461 + $0x50] sm:$0xff]
        %v2638 = vld [vmem:[%s461 + $0x58] sm:$0xff]
        %v2639 = vld [vmem:[%s461 + $0x60] sm:$0xff]
        %v2640 = vld [vmem:[%s461 + $0x68] sm:$0xff]
        %v2641 = vld [vmem:[%s461 + $0x70] sm:$0xff]
        %v2642 = vld [vmem:[%s461 + $0x78] sm:$0xff]
        %v2643 = vld [vmem:[%s461 + $0x80] sm:$0xff]
        %v2644 = vld [vmem:[%s461 + $0x88] sm:$0xff]
        %v2645 = vld [vmem:[%s461 + $0x90] sm:$0xff]
        %v2646 = vld [vmem:[%s461 + $0x98] sm:$0xff]
        %v2647 = vld [vmem:[%s461 + $0xa0] sm:$0xff]
        %v2648 = vld [vmem:[%s461 + $0xa8] sm:$0xff]
        %v2649 = vld [vmem:[%s461 + $0xb0] sm:$0xff]
        %v2650 = vld [vmem:[%s461 + $0xb8] sm:$0xff]
        %v2651 = vld [vmem:[%s461 + $0xc0] sm:$0xff]
        %v2652 = vld [vmem:[%s461 + $0xc8] sm:$0xff]
        %v2653 = vld [vmem:[%s461 + $0xd0] sm:$0xff]
        %v2654 = vld [vmem:[%s461 + $0xd8] sm:$0xff]
        %v2655 = vld [vmem:[%s461 + $0xe0] sm:$0xff]
        %v2656 = vld [vmem:[%s461 + $0xe8] sm:$0xff]
        %v2657 = vld [vmem:[%s461 + $0xf0] sm:$0xff]
        %v2658 = vld [vmem:[%s461 + $0xf8] sm:$0xff]
        %v2659 = vld [vmem:[%s445] sm:$0xff]
        %v2660 = vld [vmem:[%s445 + $0x8] sm:$0xff]
        %v2661 = vld [vmem:[%s455] sm:$0xff]
        %v2662 = vld [vmem:[%s455 + $0x8] sm:$0xff]
        %s2663 = smul.u32 0, 2
        %s2664 = smul.addr %s2663, 4
        %s2665 = scalar_lea.vmem %s475, %s2664
        %v2666 = vld [vmem:[%s2665] sm:$0xf]
        %v2667 = vld [vmem:[%s2665 + $0x4] sm:$0xf]
        %v2668 = vld [vmem:[%s2665 + $0x8] sm:$0xf]
        %v2669 = vld [vmem:[%s2665 + $0xc] sm:$0xf]
        %v2670 = vld [vmem:[%s2665 + $0x10] sm:$0xf]
        %v2671 = vld [vmem:[%s2665 + $0x14] sm:$0xf]
        %v2672 = vld [vmem:[%s2665 + $0x18] sm:$0xf]
        %v2673 = vld [vmem:[%s2665 + $0x1c] sm:$0xf]
        %v2674 = vld [vmem:[%s2665 + $0x20] sm:$0xf]
        %v2675 = vld [vmem:[%s2665 + $0x24] sm:$0xf]
        %v2676 = vld [vmem:[%s2665 + $0x28] sm:$0xf]
        %v2677 = vld [vmem:[%s2665 + $0x2c] sm:$0xf]
        %v2678 = vld [vmem:[%s2665 + $0x30] sm:$0xf]
        %v2679 = vld [vmem:[%s2665 + $0x34] sm:$0xf]
        %v2680 = vld [vmem:[%s2665 + $0x38] sm:$0xf]
        %v2681 = vld [vmem:[%s2665 + $0x3c] sm:$0xf]
        %v2683 = vlaneseq
        %v2684 = vshrl.u32 %v2683, 7
        %v2685 = vsub.s32 0, %v2684
        %v2686 = vrot.slane %v530, %v2685
        %v2687 = vlaneseq
        %v2688 = vshrl.u32 %v2687, 7
        %v2689 = vsub.s32 1, %v2688
        %v2690 = vrot.slane %v530, %v2689
        %v2691 = vlaneseq
        %v2692 = vshrl.u32 %v2691, 7
        %v2693 = vsub.s32 2, %v2692
        %v2694 = vrot.slane %v530, %v2693
        %v2695 = vlaneseq
        %v2696 = vshrl.u32 %v2695, 7
        %v2697 = vsub.s32 3, %v2696
        %v2698 = vrot.slane %v530, %v2697
        %v2719 = vunpack.c.l.b16 %v2666
        %v2720 = vunpack.c.l.b16 %v2667
        %v2721 = vunpack.c.l.b16 %v2668
        %v2722 = vunpack.c.l.b16 %v2669
        %v2723 = vunpack.c.l.b16 %v2670
        %v2724 = vunpack.c.l.b16 %v2671
        %v2725 = vunpack.c.l.b16 %v2672
        %v2726 = vunpack.c.l.b16 %v2673
        %v2727 = vunpack.c.l.b16 %v2674
        %v2728 = vunpack.c.l.b16 %v2675
        %v2729 = vunpack.c.l.b16 %v2676
        %v2730 = vunpack.c.l.b16 %v2677
        %v2731 = vunpack.c.l.b16 %v2678
        %v2732 = vunpack.c.l.b16 %v2679
        %v2733 = vunpack.c.l.b16 %v2680
        %v2734 = vunpack.c.l.b16 %v2681
        %v2735 = vpack.c.b16 %v2720, %v2719
        %v2736 = vpack.c.b16 %v2722, %v2721
        %v2737 = vpack.c.b16 %v2724, %v2723
        %v2738 = vpack.c.b16 %v2726, %v2725
        %v2739 = vpack.c.b16 %v2728, %v2727
        %v2740 = vpack.c.b16 %v2730, %v2729
        %v2741 = vpack.c.b16 %v2732, %v2731
        %v2742 = vpack.c.b16 %v2734, %v2733
        %v2783 = vunpack.c.l.b16 %v2627
        %v2784 = vunpack.c.h.b16 %v2627
        %v2785 = vunpack.c.l.b16 %v2628
        %v2786 = vunpack.c.h.b16 %v2628
        %v2787 = vunpack.c.l.b16 %v2629
        %v2788 = vunpack.c.h.b16 %v2629
        %v2789 = vunpack.c.l.b16 %v2630
        %v2790 = vunpack.c.h.b16 %v2630
        %v2791 = vunpack.c.l.b16 %v2631
        %v2792 = vunpack.c.h.b16 %v2631
        %v2793 = vunpack.c.l.b16 %v2632
        %v2794 = vunpack.c.h.b16 %v2632
        %v2795 = vunpack.c.l.b16 %v2633
        %v2796 = vunpack.c.h.b16 %v2633
        %v2797 = vunpack.c.l.b16 %v2634
        %v2798 = vunpack.c.h.b16 %v2634
        %v2799 = vunpack.c.l.b16 %v2635
        %v2800 = vunpack.c.h.b16 %v2635
        %v2801 = vunpack.c.l.b16 %v2636
        %v2802 = vunpack.c.h.b16 %v2636
        %v2803 = vunpack.c.l.b16 %v2637
        %v2804 = vunpack.c.h.b16 %v2637
        %v2805 = vunpack.c.l.b16 %v2638
        %v2806 = vunpack.c.h.b16 %v2638
        %v2807 = vunpack.c.l.b16 %v2639
        %v2808 = vunpack.c.h.b16 %v2639
        %v2809 = vunpack.c.l.b16 %v2640
        %v2810 = vunpack.c.h.b16 %v2640
        %v2811 = vunpack.c.l.b16 %v2641
        %v2812 = vunpack.c.h.b16 %v2641
        %v2813 = vunpack.c.l.b16 %v2642
        %v2814 = vunpack.c.h.b16 %v2642
        %v2815 = vunpack.c.l.b16 %v2643
        %v2816 = vunpack.c.h.b16 %v2643
        %v2817 = vunpack.c.l.b16 %v2644
        %v2818 = vunpack.c.h.b16 %v2644
        %v2819 = vunpack.c.l.b16 %v2645
        %v2820 = vunpack.c.h.b16 %v2645
        %v2821 = vunpack.c.l.b16 %v2646
        %v2822 = vunpack.c.h.b16 %v2646
        %v2823 = vunpack.c.l.b16 %v2647
        %v2824 = vunpack.c.h.b16 %v2647
        %v2825 = vunpack.c.l.b16 %v2648
        %v2826 = vunpack.c.h.b16 %v2648
        %v2827 = vunpack.c.l.b16 %v2649
        %v2828 = vunpack.c.h.b16 %v2649
        %v2829 = vunpack.c.l.b16 %v2650
        %v2830 = vunpack.c.h.b16 %v2650
        %v2831 = vunpack.c.l.b16 %v2651
        %v2832 = vunpack.c.h.b16 %v2651
        %v2833 = vunpack.c.l.b16 %v2652
        %v2834 = vunpack.c.h.b16 %v2652
        %v2835 = vunpack.c.l.b16 %v2653
        %v2836 = vunpack.c.h.b16 %v2653
        %v2837 = vunpack.c.l.b16 %v2654
        %v2838 = vunpack.c.h.b16 %v2654
        %v2839 = vunpack.c.l.b16 %v2655
        %v2840 = vunpack.c.h.b16 %v2655
        %v2841 = vunpack.c.l.b16 %v2656
        %v2842 = vunpack.c.h.b16 %v2656
        %v2843 = vunpack.c.l.b16 %v2657
        %v2844 = vunpack.c.h.b16 %v2657
        %v2845 = vunpack.c.l.b16 %v2658
        %v2846 = vunpack.c.h.b16 %v2658
        %v2847 = vpack.c.b16 %v2787, %v2783
        %v2848 = vpack.c.b16 %v2788, %v2784
        %v2849 = vpack.c.b16 %v2789, %v2785
        %v2850 = vpack.c.b16 %v2790, %v2786
        %v2851 = vpack.c.b16 %v2795, %v2791
        %v2852 = vpack.c.b16 %v2796, %v2792
        %v2853 = vpack.c.b16 %v2797, %v2793
        %v2854 = vpack.c.b16 %v2798, %v2794
        %v2855 = vpack.c.b16 %v2803, %v2799
        %v2856 = vpack.c.b16 %v2804, %v2800
        %v2857 = vpack.c.b16 %v2805, %v2801
        %v2858 = vpack.c.b16 %v2806, %v2802
        %v2859 = vpack.c.b16 %v2811, %v2807
        %v2860 = vpack.c.b16 %v2812, %v2808
        %v2861 = vpack.c.b16 %v2813, %v2809
        %v2862 = vpack.c.b16 %v2814, %v2810
        %v2863 = vpack.c.b16 %v2819, %v2815
        %v2864 = vpack.c.b16 %v2820, %v2816
        %v2865 = vpack.c.b16 %v2821, %v2817
        %v2866 = vpack.c.b16 %v2822, %v2818
        %v2867 = vpack.c.b16 %v2827, %v2823
        %v2868 = vpack.c.b16 %v2828, %v2824
        %v2869 = vpack.c.b16 %v2829, %v2825
        %v2870 = vpack.c.b16 %v2830, %v2826
        %v2871 = vpack.c.b16 %v2835, %v2831
        %v2872 = vpack.c.b16 %v2836, %v2832
        %v2873 = vpack.c.b16 %v2837, %v2833
        %v2874 = vpack.c.b16 %v2838, %v2834
        %v2875 = vpack.c.b16 %v2843, %v2839
        %v2876 = vpack.c.b16 %v2844, %v2840
        %v2877 = vpack.c.b16 %v2845, %v2841
        %v2878 = vpack.c.b16 %v2846, %v2842
        %2911 = vmatprep.subr.bf16.mxu0 %v2848
        %2912 = vmatpush1.bf16.msra.mxu0 %v2847
        %2913 = vmatprep.subr.bf16.mxu0 %v2852
        %2914 = vmatpush1.bf16.msra.mxu0 %v2851
        %2915 = vmatprep.subr.bf16.mxu0 %v2856
        %2916 = vmatpush1.bf16.msra.mxu0 %v2855
        %2917 = vmatprep.subr.bf16.mxu0 %v2860
        %2918 = vmatpush1.bf16.msra.mxu0 %v2859
        %2919 = vmatprep.subr.bf16.mxu0 %v2864
        %2920 = vmatpush1.bf16.msra.mxu0 %v2863
        %2921 = vmatprep.subr.bf16.mxu0 %v2868
        %2922 = vmatpush1.bf16.msra.mxu0 %v2867
        %2923 = vmatprep.subr.bf16.mxu0 %v2872
        %2924 = vmatpush1.bf16.msra.mxu0 %v2871
        %2925 = vmatprep.subr.bf16.mxu0 %v2876
        %2926 = vmatpush1.bf16.msra.mxu0 %v2875
        %2927 = vmatprep.subr.bf16.mxu0 0
        %2928 = vmatpush1.bf16.msra.mxu0 0
        %2929 = vmatprep.subr.bf16.mxu0 0
        %2930 = vmatpush1.bf16.msra.mxu0 0
        %2931 = vmatprep.subr.bf16.mxu0 0
        %2932 = vmatpush1.bf16.msra.mxu0 0
        %2933 = vmatprep.subr.bf16.mxu0 0
        %2934 = vmatpush1.bf16.msra.mxu0 0
        %2935 = vmatprep.subr.bf16.mxu0 0
        %2936 = vmatpush1.bf16.msra.mxu0 0
        %2937 = vmatprep.subr.bf16.mxu0 0
        %2938 = vmatpush1.bf16.msra.mxu0 0
        %2939 = vmatprep.subr.bf16.mxu0 0
        %2940 = vmatpush1.bf16.msra.mxu0 0
        %2941 = vmatprep.subr.bf16.mxu0 0
        %2942 = vmatpush1.bf16.msra.mxu0 0
        %2943 = vmatprep.mubr.bf16.mxu0 0
        %2944 = vmatmul.mubr.bf16.gmra.mrb[0].mxu0 %v2735
        %v2945 = vpop.f32.mrb[0].mxu0
        %v2946 = vadd.f32 %v2686, %v2945
        %v2947 = vpop.f32.mrb[0].mxu0
        %v2948 = vadd.f32 %v2690, %v2947
        %v2949 = vpop.f32.mrb[0].mxu0
        %v2950 = vadd.f32 %v2686, %v2949
        %v2951 = vpop.f32.mrb[0].mxu0
        %v2952 = vadd.f32 %v2690, %v2951
        %2953 = vmatprep.mubr.bf16.mxu0 0
        %2954 = vmatmul.mubr.bf16.gmra.mrb[0].mxu0 %v2736
        %v2955 = vpop.f32.mrb[0].mxu0
        %v2956 = vadd.f32 %v2686, %v2955
        %v2957 = vpop.f32.mrb[0].mxu0
        %v2958 = vadd.f32 %v2690, %v2957
        %v2959 = vpop.f32.mrb[0].mxu0
        %v2960 = vadd.f32 %v2686, %v2959
        %v2961 = vpop.f32.mrb[0].mxu0
        %v2962 = vadd.f32 %v2690, %v2961
        %2963 = vmatprep.mubr.bf16.mxu0 0
        %2964 = vmatmul.mubr.bf16.gmra.mrb[0].mxu0 %v2737
        %v2965 = vpop.f32.mrb[0].mxu0
        %v2966 = vadd.f32 %v2686, %v2965
        %v2967 = vpop.f32.mrb[0].mxu0
        %v2968 = vadd.f32 %v2690, %v2967
        %v2969 = vpop.f32.mrb[0].mxu0
        %v2970 = vadd.f32 %v2686, %v2969
        %v2971 = vpop.f32.mrb[0].mxu0
        %v2972 = vadd.f32 %v2690, %v2971
        %2973 = vmatprep.mubr.bf16.mxu0 0
        %2974 = vmatmul.mubr.bf16.gmra.mrb[0].mxu0 %v2738
        %v2975 = vpop.f32.mrb[0].mxu0
        %v2976 = vadd.f32 %v2686, %v2975
        %v2977 = vpop.f32.mrb[0].mxu0
        %v2978 = vadd.f32 %v2690, %v2977
        %v2979 = vpop.f32.mrb[0].mxu0
        %v2980 = vadd.f32 %v2686, %v2979
        %v2981 = vpop.f32.mrb[0].mxu0
        %v2982 = vadd.f32 %v2690, %v2981
        %2983 = vmatprep.mubr.bf16.mxu0 0
        %2984 = vmatmul.mubr.bf16.gmra.mrb[0].mxu0 %v2739
        %v2985 = vpop.f32.mrb[0].mxu0
        %v2986 = vadd.f32 %v2686, %v2985
        %v2987 = vpop.f32.mrb[0].mxu0
        %v2988 = vadd.f32 %v2690, %v2987
        %v2989 = vpop.f32.mrb[0].mxu0
        %v2990 = vadd.f32 %v2686, %v2989
        %v2991 = vpop.f32.mrb[0].mxu0
        %v2992 = vadd.f32 %v2690, %v2991
        %2993 = vmatprep.mubr.bf16.mxu0 0
        %2994 = vmatmul.mubr.bf16.gmra.mrb[0].mxu0 %v2740
        %v2995 = vpop.f32.mrb[0].mxu0
        %v2996 = vadd.f32 %v2686, %v2995
        %v2997 = vpop.f32.mrb[0].mxu0
        %v2998 = vadd.f32 %v2690, %v2997
        %v2999 = vpop.f32.mrb[0].mxu0
        %v3000 = vadd.f32 %v2686, %v2999
        %v3001 = vpop.f32.mrb[0].mxu0
        %v3002 = vadd.f32 %v2690, %v3001
        %3003 = vmatprep.mubr.bf16.mxu0 0
        %3004 = vmatmul.mubr.bf16.gmra.mrb[0].mxu0 %v2741
        %v3005 = vpop.f32.mrb[0].mxu0
        %v3006 = vadd.f32 %v2686, %v3005
        %v3007 = vpop.f32.mrb[0].mxu0
        %v3008 = vadd.f32 %v2690, %v3007
        %v3009 = vpop.f32.mrb[0].mxu0
        %v3010 = vadd.f32 %v2686, %v3009
        %v3011 = vpop.f32.mrb[0].mxu0
        %v3012 = vadd.f32 %v2690, %v3011
        %3013 = vmatprep.mubr.bf16.mxu0 0
        %3014 = vmatmul.mubr.bf16.gmra.mrb[0].mxu0 %v2742
        %v3015 = vpop.f32.mrb[0].mxu0
        %v3016 = vadd.f32 %v2686, %v3015
        %v3017 = vpop.f32.mrb[0].mxu0
        %v3018 = vadd.f32 %v2690, %v3017
        %v3019 = vpop.f32.mrb[0].mxu0
        %v3020 = vadd.f32 %v2686, %v3019
        %v3021 = vpop.f32.mrb[0].mxu0
        %v3022 = vadd.f32 %v2690, %v3021
        %3023 = vdwg.mxu0
        %3024 = vmatprep.subr.bf16.mxu0 %v2850
        %3025 = vmatpush1.bf16.msra.mxu0 %v2849
        %3026 = vmatprep.subr.bf16.mxu0 %v2854
        %3027 = vmatpush1.bf16.msra.mxu0 %v2853
        %3028 = vmatprep.subr.bf16.mxu0 %v2858
        %3029 = vmatpush1.bf16.msra.mxu0 %v2857
        %3030 = vmatprep.subr.bf16.mxu0 %v2862
        %3031 = vmatpush1.bf16.msra.mxu0 %v2861
        %3032 = vmatprep.subr.bf16.mxu0 %v2866
        %3033 = vmatpush1.bf16.msra.mxu0 %v2865
        %3034 = vmatprep.subr.bf16.mxu0 %v2870
        %3035 = vmatpush1.bf16.msra.mxu0 %v2869
        %3036 = vmatprep.subr.bf16.mxu0 %v2874
        %3037 = vmatpush1.bf16.msra.mxu0 %v2873
        %3038 = vmatprep.subr.bf16.mxu0 %v2878
        %3039 = vmatpush1.bf16.msra.mxu0 %v2877
        %3040 = vmatprep.subr.bf16.mxu0 0
        %3041 = vmatpush1.bf16.msra.mxu0 0
        %3042 = vmatprep.subr.bf16.mxu0 0
        %3043 = vmatpush1.bf16.msra.mxu0 0
        %3044 = vmatprep.subr.bf16.mxu0 0
        %3045 = vmatpush1.bf16.msra.mxu0 0
        %3046 = vmatprep.subr.bf16.mxu0 0
        %3047 = vmatpush1.bf16.msra.mxu0 0
        %3048 = vmatprep.subr.bf16.mxu0 0
        %3049 = vmatpush1.bf16.msra.mxu0 0
        %3050 = vmatprep.subr.bf16.mxu0 0
        %3051 = vmatpush1.bf16.msra.mxu0 0
        %3052 = vmatprep.subr.bf16.mxu0 0
        %3053 = vmatpush1.bf16.msra.mxu0 0
        %3054 = vmatprep.subr.bf16.mxu0 0
        %3055 = vmatpush1.bf16.msra.mxu0 0
        %3056 = vmatprep.mubr.bf16.mxu0 0
        %3057 = vmatmul.mubr.bf16.gmra.mrb[0].mxu0 %v2735
        %v3058 = vpop.f32.mrb[0].mxu0
        %v3059 = vadd.f32 %v2694, %v3058
        %v3060 = vpop.f32.mrb[0].mxu0
        %v3061 = vadd.f32 %v2698, %v3060
        %v3062 = vpop.f32.mrb[0].mxu0
        %v3063 = vadd.f32 %v2694, %v3062
        %v3064 = vpop.f32.mrb[0].mxu0
        %v3065 = vadd.f32 %v2698, %v3064
        %3066 = vmatprep.mubr.bf16.mxu0 0
        %3067 = vmatmul.mubr.bf16.gmra.mrb[0].mxu0 %v2736
        %v3068 = vpop.f32.mrb[0].mxu0
        %v3069 = vadd.f32 %v2694, %v3068
        %v3070 = vpop.f32.mrb[0].mxu0
        %v3071 = vadd.f32 %v2698, %v3070
        %v3072 = vpop.f32.mrb[0].mxu0
        %v3073 = vadd.f32 %v2694, %v3072
        %v3074 = vpop.f32.mrb[0].mxu0
        %v3075 = vadd.f32 %v2698, %v3074
        %3076 = vmatprep.mubr.bf16.mxu0 0
        %3077 = vmatmul.mubr.bf16.gmra.mrb[0].mxu0 %v2737
        %v3078 = vpop.f32.mrb[0].mxu0
        %v3079 = vadd.f32 %v2694, %v3078
        %v3080 = vpop.f32.mrb[0].mxu0
        %v3081 = vadd.f32 %v2698, %v3080
        %v3082 = vpop.f32.mrb[0].mxu0
        %v3083 = vadd.f32 %v2694, %v3082
        %v3084 = vpop.f32.mrb[0].mxu0
        %v3085 = vadd.f32 %v2698, %v3084
        %3086 = vmatprep.mubr.bf16.mxu0 0
        %3087 = vmatmul.mubr.bf16.gmra.mrb[0].mxu0 %v2738
        %v3088 = vpop.f32.mrb[0].mxu0
        %v3089 = vadd.f32 %v2694, %v3088
        %v3090 = vpop.f32.mrb[0].mxu0
        %v3091 = vadd.f32 %v2698, %v3090
        %v3092 = vpop.f32.mrb[0].mxu0
        %v3093 = vadd.f32 %v2694, %v3092
        %v3094 = vpop.f32.mrb[0].mxu0
        %v3095 = vadd.f32 %v2698, %v3094
        %3096 = vmatprep.mubr.bf16.mxu0 0
        %3097 = vmatmul.mubr.bf16.gmra.mrb[0].mxu0 %v2739
        %v3098 = vpop.f32.mrb[0].mxu0
        %v3099 = vadd.f32 %v2694, %v3098
        %v3100 = vpop.f32.mrb[0].mxu0
        %v3101 = vadd.f32 %v2698, %v3100
        %v3102 = vpop.f32.mrb[0].mxu0
        %v3103 = vadd.f32 %v2694, %v3102
        %v3104 = vpop.f32.mrb[0].mxu0
        %v3105 = vadd.f32 %v2698, %v3104
        %3106 = vmatprep.mubr.bf16.mxu0 0
        %3107 = vmatmul.mubr.bf16.gmra.mrb[0].mxu0 %v2740
        %v3108 = vpop.f32.mrb[0].mxu0
        %v3109 = vadd.f32 %v2694, %v3108
        %v3110 = vpop.f32.mrb[0].mxu0
        %v3111 = vadd.f32 %v2698, %v3110
        %v3112 = vpop.f32.mrb[0].mxu0
        %v3113 = vadd.f32 %v2694, %v3112
        %v3114 = vpop.f32.mrb[0].mxu0
        %v3115 = vadd.f32 %v2698, %v3114
        %3116 = vmatprep.mubr.bf16.mxu0 0
        %3117 = vmatmul.mubr.bf16.gmra.mrb[0].mxu0 %v2741
        %v3118 = vpop.f32.mrb[0].mxu0
        %v3119 = vadd.f32 %v2694, %v3118
        %v3120 = vpop.f32.mrb[0].mxu0
        %v3121 = vadd.f32 %v2698, %v3120
        %v3122 = vpop.f32.mrb[0].mxu0
        %v3123 = vadd.f32 %v2694, %v3122
        %v3124 = vpop.f32.mrb[0].mxu0
        %v3125 = vadd.f32 %v2698, %v3124
        %3126 = vmatprep.mubr.bf16.mxu0 0
        %3127 = vmatmul.mubr.bf16.gmra.mrb[0].mxu0 %v2742
        %v3128 = vpop.f32.mrb[0].mxu0
        %v3129 = vadd.f32 %v2694, %v3128
        %v3130 = vpop.f32.mrb[0].mxu0
        %v3131 = vadd.f32 %v2698, %v3130
        %v3132 = vpop.f32.mrb[0].mxu0
        %v3133 = vadd.f32 %v2694, %v3132
        %v3134 = vpop.f32.mrb[0].mxu0
        %v3135 = vadd.f32 %v2698, %v3134
        %3136 = vdwg.mxu0
        %v3137 = vpack.c.bf16 %v2950, %v2946
        %v3138 = vpack.c.bf16 %v2952, %v2948
        %v3139 = vpack.c.bf16 %v3063, %v3059
        %v3140 = vpack.c.bf16 %v3065, %v3061
        %v3141 = vpack.c.bf16 %v2960, %v2956
        %v3142 = vpack.c.bf16 %v2962, %v2958
        %v3143 = vpack.c.bf16 %v3073, %v3069
        %v3144 = vpack.c.bf16 %v3075, %v3071
        %v3145 = vpack.c.bf16 %v2970, %v2966
        %v3146 = vpack.c.bf16 %v2972, %v2968
        %v3147 = vpack.c.bf16 %v3083, %v3079
        %v3148 = vpack.c.bf16 %v3085, %v3081
        %v3149 = vpack.c.bf16 %v2980, %v2976
        %v3150 = vpack.c.bf16 %v2982, %v2978
        %v3151 = vpack.c.bf16 %v3093, %v3089
        %v3152 = vpack.c.bf16 %v3095, %v3091
        %v3153 = vpack.c.bf16 %v2990, %v2986
        %v3154 = vpack.c.bf16 %v2992, %v2988
        %v3155 = vpack.c.bf16 %v3103, %v3099
        %v3156 = vpack.c.bf16 %v3105, %v3101
        %v3157 = vpack.c.bf16 %v3000, %v2996
        %v3158 = vpack.c.bf16 %v3002, %v2998
        %v3159 = vpack.c.bf16 %v3113, %v3109
        %v3160 = vpack.c.bf16 %v3115, %v3111
        %v3161 = vpack.c.bf16 %v3010, %v3006
        %v3162 = vpack.c.bf16 %v3012, %v3008
        %v3163 = vpack.c.bf16 %v3123, %v3119
        %v3164 = vpack.c.bf16 %v3125, %v3121
        %v3165 = vpack.c.bf16 %v3020, %v3016
        %v3166 = vpack.c.bf16 %v3022, %v3018
        %v3167 = vpack.c.bf16 %v3133, %v3129
        %v3168 = vpack.c.bf16 %v3135, %v3131
        %3169 = vst [vmem:[#allocation2] sm:$0xff] %v3137
        %3170 = vst [vmem:[#allocation2 + $0x8] sm:$0xff] %v3138
        %3171 = vst [vmem:[#allocation2 + $0x10] sm:$0xff] %v3139
        %3172 = vst [vmem:[#allocation2 + $0x18] sm:$0xff] %v3140
        %3173 = vst [vmem:[#allocation2 + $0x20] sm:$0xff] %v3141
        %3174 = vst [vmem:[#allocation2 + $0x28] sm:$0xff] %v3142
        %3175 = vst [vmem:[#allocation2 + $0x30] sm:$0xff] %v3143
        %3176 = vst [vmem:[#allocation2 + $0x38] sm:$0xff] %v3144
        %3177 = vst [vmem:[#allocation2 + $0x40] sm:$0xff] %v3145
        %3178 = vst [vmem:[#allocation2 + $0x48] sm:$0xff] %v3146
        %3179 = vst [vmem:[#allocation2 + $0x50] sm:$0xff] %v3147
        %3180 = vst [vmem:[#allocation2 + $0x58] sm:$0xff] %v3148
        %3181 = vst [vmem:[#allocation2 + $0x60] sm:$0xff] %v3149
        %3182 = vst [vmem:[#allocation2 + $0x68] sm:$0xff] %v3150
        %3183 = vst [vmem:[#allocation2 + $0x70] sm:$0xff] %v3151
        %3184 = vst [vmem:[#allocation2 + $0x78] sm:$0xff] %v3152
        %3185 = vst [vmem:[#allocation2 + $0x80] sm:$0xff] %v3153
        %3186 = vst [vmem:[#allocation2 + $0x88] sm:$0xff] %v3154
        %3187 = vst [vmem:[#allocation2 + $0x90] sm:$0xff] %v3155
        %3188 = vst [vmem:[#allocation2 + $0x98] sm:$0xff] %v3156
        %3189 = vst [vmem:[#allocation2 + $0xa0] sm:$0xff] %v3157
        %3190 = vst [vmem:[#allocation2 + $0xa8] sm:$0xff] %v3158
        %3191 = vst [vmem:[#allocation2 + $0xb0] sm:$0xff] %v3159
        %3192 = vst [vmem:[#allocation2 + $0xb8] sm:$0xff] %v3160
        %3193 = vst [vmem:[#allocation2 + $0xc0] sm:$0xff] %v3161
        %3194 = vst [vmem:[#allocation2 + $0xc8] sm:$0xff] %v3162
        %3195 = vst [vmem:[#allocation2 + $0xd0] sm:$0xff] %v3163
        %3196 = vst [vmem:[#allocation2 + $0xd8] sm:$0xff] %v3164
        %3197 = vst [vmem:[#allocation2 + $0xe0] sm:$0xff] %v3165
        %3198 = vst [vmem:[#allocation2 + $0xe8] sm:$0xff] %v3166
        %3199 = vst [vmem:[#allocation2 + $0xf0] sm:$0xff] %v3167
        %3200 = vst [vmem:[#allocation2 + $0xf8] sm:$0xff] %v3168
        %v3201 = vld [vmem:[#allocation2] sm:$0xff]
        %v3202 = vld [vmem:[#allocation2 + $0x8] sm:$0xff]
        %v3203 = vld [vmem:[#allocation2 + $0x10] sm:$0xff]
        %v3204 = vld [vmem:[#allocation2 + $0x18] sm:$0xff]
        %v3205 = vunpack.c.l.bf16 %v3201
        %v3206 = vunpack.c.l.bf16 %v3202
        %v3207 = vunpack.c.l.bf16 %v3203
        %v3208 = vunpack.c.l.bf16 %v3204
        %v3209 = vunpack.c.h.bf16 %v3201
        %v3210 = vunpack.c.h.bf16 %v3202
        %v3211 = vunpack.c.h.bf16 %v3203
        %v3212 = vunpack.c.h.bf16 %v3204
        %v3213 = vpack.c.bf16 %v2660, %v2659
        %v3246 = vunpack.c.l.b16 %v498
        %v3247 = vunpack.c.h.b16 %v498
        %v3248 = vunpack.c.l.b16 %v499
        %v3249 = vunpack.c.h.b16 %v499
        %v3250 = vunpack.c.l.b16 %v500
        %v3251 = vunpack.c.h.b16 %v500
        %v3252 = vunpack.c.l.b16 %v501
        %v3253 = vunpack.c.h.b16 %v501
        %v3254 = vunpack.c.l.b16 %v502
        %v3255 = vunpack.c.h.b16 %v502
        %v3256 = vunpack.c.l.b16 %v503
        %v3257 = vunpack.c.h.b16 %v503
        %v3258 = vunpack.c.l.b16 %v504
        %v3259 = vunpack.c.h.b16 %v504
        %v3260 = vunpack.c.l.b16 %v505
        %v3261 = vunpack.c.h.b16 %v505
        %v3262 = vunpack.c.l.b16 %v506
        %v3263 = vunpack.c.h.b16 %v506
        %v3264 = vunpack.c.l.b16 %v507
        %v3265 = vunpack.c.h.b16 %v507
        %v3266 = vunpack.c.l.b16 %v508
        %v3267 = vunpack.c.h.b16 %v508
        %v3268 = vunpack.c.l.b16 %v509
        %v3269 = vunpack.c.h.b16 %v509
        %v3270 = vunpack.c.l.b16 %v510
        %v3271 = vunpack.c.h.b16 %v510
        %v3272 = vunpack.c.l.b16 %v511
        %v3273 = vunpack.c.h.b16 %v511
        %v3274 = vunpack.c.l.b16 %v512
        %v3275 = vunpack.c.h.b16 %v512
        %v3276 = vunpack.c.l.b16 %v513
        %v3277 = vunpack.c.h.b16 %v513
        %v3278 = vunpack.c.l.b16 %v514
        %v3279 = vunpack.c.h.b16 %v514
        %v3280 = vunpack.c.l.b16 %v515
        %v3281 = vunpack.c.h.b16 %v515
        %v3282 = vunpack.c.l.b16 %v516
        %v3283 = vunpack.c.h.b16 %v516
        %v3284 = vunpack.c.l.b16 %v517
        %v3285 = vunpack.c.h.b16 %v517
        %v3286 = vunpack.c.l.b16 %v518
        %v3287 = vunpack.c.h.b16 %v518
        %v3288 = vunpack.c.l.b16 %v519
        %v3289 = vunpack.c.h.b16 %v519
        %v3290 = vunpack.c.l.b16 %v520
        %v3291 = vunpack.c.h.b16 %v520
        %v3292 = vunpack.c.l.b16 %v521
        %v3293 = vunpack.c.h.b16 %v521
        %v3294 = vunpack.c.l.b16 %v522
        %v3295 = vunpack.c.h.b16 %v522
        %v3296 = vunpack.c.l.b16 %v523
        %v3297 = vunpack.c.h.b16 %v523
        %v3298 = vunpack.c.l.b16 %v524
        %v3299 = vunpack.c.h.b16 %v524
        %v3300 = vunpack.c.l.b16 %v525
        %v3301 = vunpack.c.h.b16 %v525
        %v3302 = vunpack.c.l.b16 %v526
        %v3303 = vunpack.c.h.b16 %v526
        %v3304 = vunpack.c.l.b16 %v527
        %v3305 = vunpack.c.h.b16 %v527
        %v3306 = vunpack.c.l.b16 %v528
        %v3307 = vunpack.c.h.b16 %v528
        %v3308 = vunpack.c.l.b16 %v529
        %v3309 = vunpack.c.h.b16 %v529
        %v3310 = vpack.c.b16 %v3250, %v3246
        %v3311 = vpack.c.b16 %v3251, %v3247
        %v3312 = vpack.c.b16 %v3252, %v3248
        %v3313 = vpack.c.b16 %v3253, %v3249
        %v3314 = vpack.c.b16 %v3258, %v3254
        %v3315 = vpack.c.b16 %v3259, %v3255
        %v3316 = vpack.c.b16 %v3260, %v3256
        %v3317 = vpack.c.b16 %v3261, %v3257
        %v3318 = vpack.c.b16 %v3266, %v3262
        %v3319 = vpack.c.b16 %v3267, %v3263
        %v3320 = vpack.c.b16 %v3268, %v3264
        %v3321 = vpack.c.b16 %v3269, %v3265
        %v3322 = vpack.c.b16 %v3274, %v3270
        %v3323 = vpack.c.b16 %v3275, %v3271
        %v3324 = vpack.c.b16 %v3276, %v3272
        %v3325 = vpack.c.b16 %v3277, %v3273
        %v3326 = vpack.c.b16 %v3282, %v3278
        %v3327 = vpack.c.b16 %v3283, %v3279
        %v3328 = vpack.c.b16 %v3284, %v3280
        %v3329 = vpack.c.b16 %v3285, %v3281
        %v3330 = vpack.c.b16 %v3290, %v3286
        %v3331 = vpack.c.b16 %v3291, %v3287
        %v3332 = vpack.c.b16 %v3292, %v3288
        %v3333 = vpack.c.b16 %v3293, %v3289
        %v3334 = vpack.c.b16 %v3298, %v3294
        %v3335 = vpack.c.b16 %v3299, %v3295
        %v3336 = vpack.c.b16 %v3300, %v3296
        %v3337 = vpack.c.b16 %v3301, %v3297
        %v3338 = vpack.c.b16 %v3306, %v3302
        %v3339 = vpack.c.b16 %v3307, %v3303
        %v3340 = vpack.c.b16 %v3308, %v3304
        %v3341 = vpack.c.b16 %v3309, %v3305
        %3374 = vmatprep.subr.bf16.mxu0 %v3311
        %3375 = vmatpush1.bf16.msra.mxu0 %v3310
        %3376 = vmatprep.subr.bf16.mxu0 %v3315
        %3377 = vmatpush1.bf16.msra.mxu0 %v3314
        %3378 = vmatprep.subr.bf16.mxu0 %v3319
        %3379 = vmatpush1.bf16.msra.mxu0 %v3318
        %3380 = vmatprep.subr.bf16.mxu0 %v3323
        %3381 = vmatpush1.bf16.msra.mxu0 %v3322
        %3382 = vmatprep.subr.bf16.mxu0 %v3327
        %3383 = vmatpush1.bf16.msra.mxu0 %v3326
        %3384 = vmatprep.subr.bf16.mxu0 %v3331
        %3385 = vmatpush1.bf16.msra.mxu0 %v3330
        %3386 = vmatprep.subr.bf16.mxu0 %v3335
        %3387 = vmatpush1.bf16.msra.mxu0 %v3334
        %3388 = vmatprep.subr.bf16.mxu0 %v3339
        %3389 = vmatpush1.bf16.msra.mxu0 %v3338
        %3390 = vmatprep.subr.bf16.mxu0 0
        %3391 = vmatpush1.bf16.msra.mxu0 0
        %3392 = vmatprep.subr.bf16.mxu0 0
        %3393 = vmatpush1.bf16.msra.mxu0 0
        %3394 = vmatprep.subr.bf16.mxu0 0
        %3395 = vmatpush1.bf16.msra.mxu0 0
        %3396 = vmatprep.subr.bf16.mxu0 0
        %3397 = vmatpush1.bf16.msra.mxu0 0
        %3398 = vmatprep.subr.bf16.mxu0 0
        %3399 = vmatpush1.bf16.msra.mxu0 0
        %3400 = vmatprep.subr.bf16.mxu0 0
        %3401 = vmatpush1.bf16.msra.mxu0 0
        %3402 = vmatprep.subr.bf16.mxu0 0
        %3403 = vmatpush1.bf16.msra.mxu0 0
        %3404 = vmatprep.subr.bf16.mxu0 0
        %3405 = vmatpush1.bf16.msra.mxu0 0
        %3406 = vmatprep.mubr.bf16.mxu0 0
        %3407 = vmatmul.mubr.bf16.gmra.mrb[0].mxu0 %v3213
        %v3408 = vpop.f32.mrb[0].mxu0
        %v3409 = vadd.f32 0.0, %v3408
        %v3410 = vpop.f32.mrb[0].mxu0
        %v3411 = vadd.f32 0.0, %v3410
        %v3412 = vpop.f32.mrb[0].mxu0
        %v3413 = vadd.f32 0.0, %v3412
        %v3414 = vpop.f32.mrb[0].mxu0
        %v3415 = vadd.f32 0.0, %v3414
        %3416 = vdwg.mxu0
        %3417 = vmatprep.subr.bf16.mxu0 %v3313
        %3418 = vmatpush1.bf16.msra.mxu0 %v3312
        %3419 = vmatprep.subr.bf16.mxu0 %v3317
        %3420 = vmatpush1.bf16.msra.mxu0 %v3316
        %3421 = vmatprep.subr.bf16.mxu0 %v3321
        %3422 = vmatpush1.bf16.msra.mxu0 %v3320
        %3423 = vmatprep.subr.bf16.mxu0 %v3325
        %3424 = vmatpush1.bf16.msra.mxu0 %v3324
        %3425 = vmatprep.subr.bf16.mxu0 %v3329
        %3426 = vmatpush1.bf16.msra.mxu0 %v3328
        %3427 = vmatprep.subr.bf16.mxu0 %v3333
        %3428 = vmatpush1.bf16.msra.mxu0 %v3332
        %3429 = vmatprep.subr.bf16.mxu0 %v3337
        %3430 = vmatpush1.bf16.msra.mxu0 %v3336
        %3431 = vmatprep.subr.bf16.mxu0 %v3341
        %3432 = vmatpush1.bf16.msra.mxu0 %v3340
        %3433 = vmatprep.subr.bf16.mxu0 0
        %3434 = vmatpush1.bf16.msra.mxu0 0
        %3435 = vmatprep.subr.bf16.mxu0 0
        %3436 = vmatpush1.bf16.msra.mxu0 0
        %3437 = vmatprep.subr.bf16.mxu0 0
        %3438 = vmatpush1.bf16.msra.mxu0 0
        %3439 = vmatprep.subr.bf16.mxu0 0
        %3440 = vmatpush1.bf16.msra.mxu0 0
        %3441 = vmatprep.subr.bf16.mxu0 0
        %3442 = vmatpush1.bf16.msra.mxu0 0
        %3443 = vmatprep.subr.bf16.mxu0 0
        %3444 = vmatpush1.bf16.msra.mxu0 0
        %3445 = vmatprep.subr.bf16.mxu0 0
        %3446 = vmatpush1.bf16.msra.mxu0 0
        %3447 = vmatprep.subr.bf16.mxu0 0
        %3448 = vmatpush1.bf16.msra.mxu0 0
        %3449 = vmatprep.mubr.bf16.mxu0 0
        %3450 = vmatmul.mubr.bf16.gmra.mrb[0].mxu0 %v3213
        %v3451 = vpop.f32.mrb[0].mxu0
        %v3452 = vadd.f32 0.0, %v3451
        %v3453 = vpop.f32.mrb[0].mxu0
        %v3454 = vadd.f32 0.0, %v3453
        %v3455 = vpop.f32.mrb[0].mxu0
        %v3456 = vadd.f32 0.0, %v3455
        %v3457 = vpop.f32.mrb[0].mxu0
        %v3458 = vadd.f32 0.0, %v3457
        %3459 = vdwg.mxu0
        %v3460 = vadd.f32 %v3205, %v3409
        %v3461 = vadd.f32 %v3206, %v3411
        %v3462 = vadd.f32 %v3207, %v3452
        %v3463 = vadd.f32 %v3208, %v3454
        %v3464 = vadd.f32 %v3209, %v3413
        %v3465 = vadd.f32 %v3210, %v3415
        %v3466 = vadd.f32 %v3211, %v3456
        %v3467 = vadd.f32 %v3212, %v3458
        %v3468 = vxor.u32 %v3460, 2147483648
        %v3469 = vxor.u32 %v3464, 2147483648
        %v3470 = vmul.f32 %v3468, 1.442695
        %v3471 = vpow.pop %v3470
        %v3472 = vmul.f32 %v3469, 1.442695
        %v3473 = vpow.pop %v3472
        %v3474 = vadd.f32 %v3471, 1.0
        %v3475 = vadd.f32 %v3473, 1.0
        %v3476 = vrcp.pop %v3474
        %v3477 = vmul.f32 1.0, %v3476
        %v3478 = vrcp.pop %v3475
        %v3479 = vmul.f32 1.0, %v3478
        %v3480 = vxor.u32 %v3461, 2147483648
        %v3481 = vxor.u32 %v3465, 2147483648
        %v3482 = vmul.f32 %v3480, 1.442695
        %v3483 = vpow.pop %v3482
        %v3484 = vmul.f32 %v3481, 1.442695
        %v3485 = vpow.pop %v3484
        %v3486 = vadd.f32 %v3483, 1.0
        %v3487 = vadd.f32 %v3485, 1.0
        %v3488 = vrcp.pop %v3486
        %v3489 = vmul.f32 1.0, %v3488
        %v3490 = vrcp.pop %v3487
        %v3491 = vmul.f32 1.0, %v3490
        %v3492 = vtanh.pop %v3462
        %v3493 = vtanh.pop %v3466
        %v3494 = vxor.u32 %v3463, 2147483648
        %v3495 = vxor.u32 %v3467, 2147483648
        %v3496 = vmul.f32 %v3494, 1.442695
        %v3497 = vpow.pop %v3496
        %v3498 = vmul.f32 %v3495, 1.442695
        %v3499 = vpow.pop %v3498
        %v3500 = vadd.f32 %v3497, 1.0
        %v3501 = vadd.f32 %v3499, 1.0
        %v3502 = vrcp.pop %v3500
        %v3503 = vmul.f32 1.0, %v3502
        %v3504 = vrcp.pop %v3501
        %v3505 = vmul.f32 1.0, %v3504
        %v3506 = vmul.f32 %v3489, %v2661
        %v3507 = vmul.f32 %v3491, %v2662
        %v3508 = vmul.f32 %v3477, %v3492
        %v3509 = vmul.f32 %v3479, %v3493
        %v3510 = vadd.f32 %v3506, %v3508
        %v3511 = vadd.f32 %v3507, %v3509
        %v3512 = vtanh.pop %v3510
        %v3513 = vtanh.pop %v3511
        %v3514 = vmul.f32 %v3503, %v3512
        %v3515 = vmul.f32 %v3505, %v3513
        %v3516 = vpack.c.bf16 %v3515, %v3514
        %v3518 = vunpack.c.l.b16 %v3516
        %v3519 = vunpack.c.h.b16 %v3516
        %v3520 = vpack.c.b16 %v3518, %v3518
        %v3521 = vpack.c.b16 %v3519, %v3519
        %3524 = vst [vmem:[%s2665] sm:$0xf] %v3520
        %3525 = vst [vmem:[%s2665 + $0x4] sm:$0xf] %v3521
        %s3526 = scalar_lea.vmem [#allocation2], 32
        %v3527 = vld [vmem:[%s3526] sm:$0xff]
        %v3528 = vld [vmem:[%s3526 + $0x8] sm:$0xff]
        %v3529 = vld [vmem:[%s3526 + $0x10] sm:$0xff]
        %v3530 = vld [vmem:[%s3526 + $0x18] sm:$0xff]
        %v3531 = vunpack.c.l.bf16 %v3527
        %v3532 = vunpack.c.l.bf16 %v3528
        %v3533 = vunpack.c.l.bf16 %v3529
        %v3534 = vunpack.c.l.bf16 %v3530
        %v3535 = vunpack.c.h.bf16 %v3527
        %v3536 = vunpack.c.h.bf16 %v3528
        %v3537 = vunpack.c.h.bf16 %v3529
        %v3538 = vunpack.c.h.bf16 %v3530
        %3539 = vmatprep.subr.bf16.mxu0 %v3311
        %3540 = vmatpush1.bf16.msra.mxu0 %v3310
        %3541 = vmatprep.subr.bf16.mxu0 %v3315
        %3542 = vmatpush1.bf16.msra.mxu0 %v3314
        %3543 = vmatprep.subr.bf16.mxu0 %v3319
        %3544 = vmatpush1.bf16.msra.mxu0 %v3318
        %3545 = vmatprep.subr.bf16.mxu0 %v3323
        %3546 = vmatpush1.bf16.msra.mxu0 %v3322
        %3547 = vmatprep.subr.bf16.mxu0 %v3327
        %3548 = vmatpush1.bf16.msra.mxu0 %v3326
        %3549 = vmatprep.subr.bf16.mxu0 %v3331
        %3550 = vmatpush1.bf16.msra.mxu0 %v3330
        %3551 = vmatprep.subr.bf16.mxu0 %v3335
        %3552 = vmatpush1.bf16.msra.mxu0 %v3334
        %3553 = vmatprep.subr.bf16.mxu0 %v3339
        %3554 = vmatpush1.bf16.msra.mxu0 %v3338
        %3555 = vmatprep.subr.bf16.mxu0 0
        %3556 = vmatpush1.bf16.msra.mxu0 0
        %3557 = vmatprep.subr.bf16.mxu0 0
        %3558 = vmatpush1.bf16.msra.mxu0 0
        %3559 = vmatprep.subr.bf16.mxu0 0
        %3560 = vmatpush1.bf16.msra.mxu0 0
        %3561 = vmatprep.subr.bf16.mxu0 0
        %3562 = vmatpush1.bf16.msra.mxu0 0
        %3563 = vmatprep.subr.bf16.mxu0 0
        %3564 = vmatpush1.bf16.msra.mxu0 0
        %3565 = vmatprep.subr.bf16.mxu0 0
        %3566 = vmatpush1.bf16.msra.mxu0 0
        %3567 = vmatprep.subr.bf16.mxu0 0
        %3568 = vmatpush1.bf16.msra.mxu0 0
        %3569 = vmatprep.subr.bf16.mxu0 0
        %3570 = vmatpush1.bf16.msra.mxu0 0
        %3571 = vmatprep.mubr.bf16.mxu0 0
        %3572 = vmatmul.mubr.bf16.gmra.mrb[0].mxu0 %v3516
        %v3573 = vpop.f32.mrb[0].mxu0
        %v3574 = vadd.f32 0.0, %v3573
        %v3575 = vpop.f32.mrb[0].mxu0
        %v3576 = vadd.f32 0.0, %v3575
        %v3577 = vpop.f32.mrb[0].mxu0
        %v3578 = vadd.f32 0.0, %v3577
        %v3579 = vpop.f32.mrb[0].mxu0
        %v3580 = vadd.f32 0.0, %v3579
        %3581 = vdwg.mxu0
        %3582 = vmatprep.subr.bf16.mxu0 %v3313
        %3583 = vmatpush1.bf16.msra.mxu0 %v3312
        %3584 = vmatprep.subr.bf16.mxu0 %v3317
        %3585 = vmatpush1.bf16.msra.mxu0 %v3316
        %3586 = vmatprep.subr.bf16.mxu0 %v3321
        %3587 = vmatpush1.bf16.msra.mxu0 %v3320
        %3588 = vmatprep.subr.bf16.mxu0 %v3325
        %3589 = vmatpush1.bf16.msra.mxu0 %v3324
        %3590 = vmatprep.subr.bf16.mxu0 %v3329
        %3591 = vmatpush1.bf16.msra.mxu0 %v3328
        %3592 = vmatprep.subr.bf16.mxu0 %v3333
        %3593 = vmatpush1.bf16.msra.mxu0 %v3332
        %3594 = vmatprep.subr.bf16.mxu0 %v3337
        %3595 = vmatpush1.bf16.msra.mxu0 %v3336
        %3596 = vmatprep.subr.bf16.mxu0 %v3341
        %3597 = vmatpush1.bf16.msra.mxu0 %v3340
        %3598 = vmatprep.subr.bf16.mxu0 0
        %3599 = vmatpush1.bf16.msra.mxu0 0
        %3600 = vmatprep.subr.bf16.mxu0 0
        %3601 = vmatpush1.bf16.msra.mxu0 0
        %3602 = vmatprep.subr.bf16.mxu0 0
        %3603 = vmatpush1.bf16.msra.mxu0 0
        %3604 = vmatprep.subr.bf16.mxu0 0
        %3605 = vmatpush1.bf16.msra.mxu0 0
        %3606 = vmatprep.subr.bf16.mxu0 0
        %3607 = vmatpush1.bf16.msra.mxu0 0
        %3608 = vmatprep.subr.bf16.mxu0 0
        %3609 = vmatpush1.bf16.msra.mxu0 0
        %3610 = vmatprep.subr.bf16.mxu0 0
        %3611 = vmatpush1.bf16.msra.mxu0 0
        %3612 = vmatprep.subr.bf16.mxu0 0
        %3613 = vmatpush1.bf16.msra.mxu0 0
        %3614 = vmatprep.mubr.bf16.mxu0 0
        %3615 = vmatmul.mubr.bf16.gmra.mrb[0].mxu0 %v3516
        %v3616 = vpop.f32.mrb[0].mxu0
        %v3617 = vadd.f32 0.0, %v3616
        %v3618 = vpop.f32.mrb[0].mxu0
        %v3619 = vadd.f32 0.0, %v3618
        %v3620 = vpop.f32.mrb[0].mxu0
        %v3621 = vadd.f32 0.0, %v3620
        %v3622 = vpop.f32.mrb[0].mxu0
        %v3623 = vadd.f32 0.0, %v3622
        %3624 = vdwg.mxu0
        %v3625 = vadd.f32 %v3531, %v3574
        %v3626 = vadd.f32 %v3532, %v3576
        %v3627 = vadd.f32 %v3533, %v3617
        %v3628 = vadd.f32 %v3534, %v3619
        %v3629 = vadd.f32 %v3535, %v3578
        %v3630 = vadd.f32 %v3536, %v3580
        %v3631 = vadd.f32 %v3537, %v3621
        %v3632 = vadd.f32 %v3538, %v3623
        %v3633 = vxor.u32 %v3625, 2147483648
        %v3634 = vxor.u32 %v3629, 2147483648
        %v3635 = vmul.f32 %v3633, 1.442695
        %v3636 = vpow.pop %v3635
        %v3637 = vmul.f32 %v3634, 1.442695
        %v3638 = vpow.pop %v3637
        %v3639 = vadd.f32 %v3636, 1.0
        %v3640 = vadd.f32 %v3638, 1.0
        %v3641 = vrcp.pop %v3639
        %v3642 = vmul.f32 1.0, %v3641
        %v3643 = vrcp.pop %v3640
        %v3644 = vmul.f32 1.0, %v3643
        %v3645 = vxor.u32 %v3626, 2147483648
        %v3646 = vxor.u32 %v3630, 2147483648
        %v3647 = vmul.f32 %v3645, 1.442695
        %v3648 = vpow.pop %v3647
        %v3649 = vmul.f32 %v3646, 1.442695
        %v3650 = vpow.pop %v3649
        %v3651 = vadd.f32 %v3648, 1.0
        %v3652 = vadd.f32 %v3650, 1.0
        %v3653 = vrcp.pop %v3651
        %v3654 = vmul.f32 1.0, %v3653
        %v3655 = vrcp.pop %v3652
        %v3656 = vmul.f32 1.0, %v3655
        %v3657 = vtanh.pop %v3627
        %v3658 = vtanh.pop %v3631
        %v3659 = vxor.u32 %v3628, 2147483648
        %v3660 = vxor.u32 %v3632, 2147483648
        %v3661 = vmul.f32 %v3659, 1.442695
        %v3662 = vpow.pop %v3661
        %v3663 = vmul.f32 %v3660, 1.442695
        %v3664 = vpow.pop %v3663
        %v3665 = vadd.f32 %v3662, 1.0
        %v3666 = vadd.f32 %v3664, 1.0
        %v3667 = vrcp.pop %v3665
        %v3668 = vmul.f32 1.0, %v3667
        %v3669 = vrcp.pop %v3666
        %v3670 = vmul.f32 1.0, %v3669
        %v3671 = vmul.f32 %v3654, %v3510
        %v3672 = vmul.f32 %v3656, %v3511
        %v3673 = vmul.f32 %v3642, %v3657
        %v3674 = vmul.f32 %v3644, %v3658
        %v3675 = vadd.f32 %v3671, %v3673
        %v3676 = vadd.f32 %v3672, %v3674
        %v3677 = vtanh.pop %v3675
        %v3678 = vtanh.pop %v3676
        %v3679 = vmul.f32 %v3668, %v3677
        %v3680 = vmul.f32 %v3670, %v3678
        %v3681 = vpack.c.bf16 %v3680, %v3679
        %s3682 = sadd.s32 0, 1
        %v3684 = vunpack.c.l.b16 %v3681
        %v3685 = vunpack.c.h.b16 %v3681
        %v3686 = vpack.c.b16 %v3684, %v3684
        %v3687 = vpack.c.b16 %v3685, %v3685
        %s3690 = smul.u32 %s3682, 2
        %s3691 = smul.addr %s3690, 4
        %s3692 = scalar_lea.vmem %s475, %s3691
        %3693 = vst [vmem:[%s3692] sm:$0xf] %v3686
        %3694 = vst [vmem:[%s3692 + $0x4] sm:$0xf] %v3687
        %s3695 = scalar_lea.vmem [#allocation2], 64
        %v3696 = vld [vmem:[%s3695] sm:$0xff]
        %v3697 = vld [vmem:[%s3695 + $0x8] sm:$0xff]
        %v3698 = vld [vmem:[%s3695 + $0x10] sm:$0xff]
        %v3699 = vld [vmem:[%s3695 + $0x18] sm:$0xff]
        %v3700 = vunpack.c.l.bf16 %v3696
        %v3701 = vunpack.c.l.bf16 %v3697
        %v3702 = vunpack.c.l.bf16 %v3698
        %v3703 = vunpack.c.l.bf16 %v3699
        %v3704 = vunpack.c.h.bf16 %v3696
        %v3705 = vunpack.c.h.bf16 %v3697
        %v3706 = vunpack.c.h.bf16 %v3698
        %v3707 = vunpack.c.h.bf16 %v3699
        %3708 = vmatprep.subr.bf16.mxu0 %v3311
        %3709 = vmatpush1.bf16.msra.mxu0 %v3310
        %3710 = vmatprep.subr.bf16.mxu0 %v3315
        %3711 = vmatpush1.bf16.msra.mxu0 %v3314
        %3712 = vmatprep.subr.bf16.mxu0 %v3319
        %3713 = vmatpush1.bf16.msra.mxu0 %v3318
        %3714 = vmatprep.subr.bf16.mxu0 %v3323
        %3715 = vmatpush1.bf16.msra.mxu0 %v3322
        %3716 = vmatprep.subr.bf16.mxu0 %v3327
        %3717 = vmatpush1.bf16.msra.mxu0 %v3326
        %3718 = vmatprep.subr.bf16.mxu0 %v3331
        %3719 = vmatpush1.bf16.msra.mxu0 %v3330
        %3720 = vmatprep.subr.bf16.mxu0 %v3335
        %3721 = vmatpush1.bf16.msra.mxu0 %v3334
        %3722 = vmatprep.subr.bf16.mxu0 %v3339
        %3723 = vmatpush1.bf16.msra.mxu0 %v3338
        %3724 = vmatprep.subr.bf16.mxu0 0
        %3725 = vmatpush1.bf16.msra.mxu0 0
        %3726 = vmatprep.subr.bf16.mxu0 0
        %3727 = vmatpush1.bf16.msra.mxu0 0
        %3728 = vmatprep.subr.bf16.mxu0 0
        %3729 = vmatpush1.bf16.msra.mxu0 0
        %3730 = vmatprep.subr.bf16.mxu0 0
        %3731 = vmatpush1.bf16.msra.mxu0 0
        %3732 = vmatprep.subr.bf16.mxu0 0
        %3733 = vmatpush1.bf16.msra.mxu0 0
        %3734 = vmatprep.subr.bf16.mxu0 0
        %3735 = vmatpush1.bf16.msra.mxu0 0
        %3736 = vmatprep.subr.bf16.mxu0 0
        %3737 = vmatpush1.bf16.msra.mxu0 0
        %3738 = vmatprep.subr.bf16.mxu0 0
        %3739 = vmatpush1.bf16.msra.mxu0 0
        %3740 = vmatprep.mubr.bf16.mxu0 0
        %3741 = vmatmul.mubr.bf16.gmra.mrb[0].mxu0 %v3681
        %v3742 = vpop.f32.mrb[0].mxu0
        %v3743 = vadd.f32 0.0, %v3742
        %v3744 = vpop.f32.mrb[0].mxu0
        %v3745 = vadd.f32 0.0, %v3744
        %v3746 = vpop.f32.mrb[0].mxu0
        %v3747 = vadd.f32 0.0, %v3746
        %v3748 = vpop.f32.mrb[0].mxu0
        %v3749 = vadd.f32 0.0, %v3748
        %3750 = vdwg.mxu0
        %3751 = vmatprep.subr.bf16.mxu0 %v3313
        %3752 = vmatpush1.bf16.msra.mxu0 %v3312
        %3753 = vmatprep.subr.bf16.mxu0 %v3317
        %3754 = vmatpush1.bf16.msra.mxu0 %v3316
        %3755 = vmatprep.subr.bf16.mxu0 %v3321
        %3756 = vmatpush1.bf16.msra.mxu0 %v3320
        %3757 = vmatprep.subr.bf16.mxu0 %v3325
        %3758 = vmatpush1.bf16.msra.mxu0 %v3324
        %3759 = vmatprep.subr.bf16.mxu0 %v3329
        %3760 = vmatpush1.bf16.msra.mxu0 %v3328
        %3761 = vmatprep.subr.bf16.mxu0 %v3333
        %3762 = vmatpush1.bf16.msra.mxu0 %v3332
        %3763 = vmatprep.subr.bf16.mxu0 %v3337
        %3764 = vmatpush1.bf16.msra.mxu0 %v3336
        %3765 = vmatprep.subr.bf16.mxu0 %v3341
        %3766 = vmatpush1.bf16.msra.mxu0 %v3340
        %3767 = vmatprep.subr.bf16.mxu0 0
        %3768 = vmatpush1.bf16.msra.mxu0 0
        %3769 = vmatprep.subr.bf16.mxu0 0
        %3770 = vmatpush1.bf16.msra.mxu0 0
        %3771 = vmatprep.subr.bf16.mxu0 0
        %3772 = vmatpush1.bf16.msra.mxu0 0
        %3773 = vmatprep.subr.bf16.mxu0 0
        %3774 = vmatpush1.bf16.msra.mxu0 0
        %3775 = vmatprep.subr.bf16.mxu0 0
        %3776 = vmatpush1.bf16.msra.mxu0 0
        %3777 = vmatprep.subr.bf16.mxu0 0
        %3778 = vmatpush1.bf16.msra.mxu0 0
        %3779 = vmatprep.subr.bf16.mxu0 0
        %3780 = vmatpush1.bf16.msra.mxu0 0
        %3781 = vmatprep.subr.bf16.mxu0 0
        %3782 = vmatpush1.bf16.msra.mxu0 0
        %3783 = vmatprep.mubr.bf16.mxu0 0
        %3784 = vmatmul.mubr.bf16.gmra.mrb[0].mxu0 %v3681
        %v3785 = vpop.f32.mrb[0].mxu0
        %v3786 = vadd.f32 0.0, %v3785
        %v3787 = vpop.f32.mrb[0].mxu0
        %v3788 = vadd.f32 0.0, %v3787
        %v3789 = vpop.f32.mrb[0].mxu0
        %v3790 = vadd.f32 0.0, %v3789
        %v3791 = vpop.f32.mrb[0].mxu0
        %v3792 = vadd.f32 0.0, %v3791
        %3793 = vdwg.mxu0
        %v3794 = vadd.f32 %v3700, %v3743
        %v3795 = vadd.f32 %v3701, %v3745
        %v3796 = vadd.f32 %v3702, %v3786
        %v3797 = vadd.f32 %v3703, %v3788
        %v3798 = vadd.f32 %v3704, %v3747
        %v3799 = vadd.f32 %v3705, %v3749
        %v3800 = vadd.f32 %v3706, %v3790
        %v3801 = vadd.f32 %v3707, %v3792
        %v3802 = vxor.u32 %v3794, 2147483648
        %v3803 = vxor.u32 %v3798, 2147483648
        %v3804 = vmul.f32 %v3802, 1.442695
        %v3805 = vpow.pop %v3804
        %v3806 = vmul.f32 %v3803, 1.442695
        %v3807 = vpow.pop %v3806
        %v3808 = vadd.f32 %v3805, 1.0
        %v3809 = vadd.f32 %v3807, 1.0
        %v3810 = vrcp.pop %v3808
        %v3811 = vmul.f32 1.0, %v3810
        %v3812 = vrcp.pop %v3809
        %v3813 = vmul.f32 1.0, %v3812
        %v3814 = vxor.u32 %v3795, 2147483648
        %v3815 = vxor.u32 %v3799, 2147483648
        %v3816 = vmul.f32 %v3814, 1.442695
        %v3817 = vpow.pop %v3816
        %v3818 = vmul.f32 %v3815, 1.442695
        %v3819 = vpow.pop %v3818
        %v3820 = vadd.f32 %v3817, 1.0
        %v3821 = vadd.f32 %v3819, 1.0
        %v3822 = vrcp.pop %v3820
        %v3823 = vmul.f32 1.0, %v3822
        %v3824 = vrcp.pop %v3821
        %v3825 = vmul.f32 1.0, %v3824
        %v3826 = vtanh.pop %v3796
        %v3827 = vtanh.pop %v3800
        %v3828 = vxor.u32 %v3797, 2147483648
        %v3829 = vxor.u32 %v3801, 2147483648
        %v3830 = vmul.f32 %v3828, 1.442695
        %v3831 = vpow.pop %v3830
        %v3832 = vmul.f32 %v3829, 1.442695
        %v3833 = vpow.pop %v3832
        %v3834 = vadd.f32 %v3831, 1.0
        %v3835 = vadd.f32 %v3833, 1.0
        %v3836 = vrcp.pop %v3834
        %v3837 = vmul.f32 1.0, %v3836
        %v3838 = vrcp.pop %v3835
        %v3839 = vmul.f32 1.0, %v3838
        %v3840 = vmul.f32 %v3823, %v3675
        %v3841 = vmul.f32 %v3825, %v3676
        %v3842 = vmul.f32 %v3811, %v3826
        %v3843 = vmul.f32 %v3813, %v3827
        %v3844 = vadd.f32 %v3840, %v3842
        %v3845 = vadd.f32 %v3841, %v3843
        %v3846 = vtanh.pop %v3844
        %v3847 = vtanh.pop %v3845
        %v3848 = vmul.f32 %v3837, %v3846
        %v3849 = vmul.f32 %v3839, %v3847
        %v3850 = vpack.c.bf16 %v3849, %v3848
        %s3851 = sadd.s32 0, 2
        %v3853 = vunpack.c.l.b16 %v3850
        %v3854 = vunpack.c.h.b16 %v3850
        %v3855 = vpack.c.b16 %v3853, %v3853
        %v3856 = vpack.c.b16 %v3854, %v3854
        %s3859 = smul.u32 %s3851, 2
        %s3860 = smul.addr %s3859, 4
        %s3861 = scalar_lea.vmem %s475, %s3860
        %3862 = vst [vmem:[%s3861] sm:$0xf] %v3855
        %3863 = vst [vmem:[%s3861 + $0x4] sm:$0xf] %v3856
        %s3864 = scalar_lea.vmem [#allocation2], 96
        %v3865 = vld [vmem:[%s3864] sm:$0xff]
        %v3866 = vld [vmem:[%s3864 + $0x8] sm:$0xff]
        %v3867 = vld [vmem:[%s3864 + $0x10] sm:$0xff]
        %v3868 = vld [vmem:[%s3864 + $0x18] sm:$0xff]
        %v3869 = vunpack.c.l.bf16 %v3865
        %v3870 = vunpack.c.l.bf16 %v3866
        %v3871 = vunpack.c.l.bf16 %v3867
        %v3872 = vunpack.c.l.bf16 %v3868
        %v3873 = vunpack.c.h.bf16 %v3865
        %v3874 = vunpack.c.h.bf16 %v3866
        %v3875 = vunpack.c.h.bf16 %v3867
        %v3876 = vunpack.c.h.bf16 %v3868
        %3877 = vmatprep.subr.bf16.mxu0 %v3311
        %3878 = vmatpush1.bf16.msra.mxu0 %v3310
        %3879 = vmatprep.subr.bf16.mxu0 %v3315
        %3880 = vmatpush1.bf16.msra.mxu0 %v3314
        %3881 = vmatprep.subr.bf16.mxu0 %v3319
        %3882 = vmatpush1.bf16.msra.mxu0 %v3318
        %3883 = vmatprep.subr.bf16.mxu0 %v3323
        %3884 = vmatpush1.bf16.msra.mxu0 %v3322
        %3885 = vmatprep.subr.bf16.mxu0 %v3327
        %3886 = vmatpush1.bf16.msra.mxu0 %v3326
        %3887 = vmatprep.subr.bf16.mxu0 %v3331
        %3888 = vmatpush1.bf16.msra.mxu0 %v3330
        %3889 = vmatprep.subr.bf16.mxu0 %v3335
        %3890 = vmatpush1.bf16.msra.mxu0 %v3334
        %3891 = vmatprep.subr.bf16.mxu0 %v3339
        %3892 = vmatpush1.bf16.msra.mxu0 %v3338
        %3893 = vmatprep.subr.bf16.mxu0 0
        %3894 = vmatpush1.bf16.msra.mxu0 0
        %3895 = vmatprep.subr.bf16.mxu0 0
        %3896 = vmatpush1.bf16.msra.mxu0 0
        %3897 = vmatprep.subr.bf16.mxu0 0
        %3898 = vmatpush1.bf16.msra.mxu0 0
        %3899 = vmatprep.subr.bf16.mxu0 0
        %3900 = vmatpush1.bf16.msra.mxu0 0
        %3901 = vmatprep.subr.bf16.mxu0 0
        %3902 = vmatpush1.bf16.msra.mxu0 0
        %3903 = vmatprep.subr.bf16.mxu0 0
        %3904 = vmatpush1.bf16.msra.mxu0 0
        %3905 = vmatprep.subr.bf16.mxu0 0
        %3906 = vmatpush1.bf16.msra.mxu0 0
        %3907 = vmatprep.subr.bf16.mxu0 0
        %3908 = vmatpush1.bf16.msra.mxu0 0
        %3909 = vmatprep.mubr.bf16.mxu0 0
        %3910 = vmatmul.mubr.bf16.gmra.mrb[0].mxu0 %v3850
        %v3911 = vpop.f32.mrb[0].mxu0
        %v3912 = vadd.f32 0.0, %v3911
        %v3913 = vpop.f32.mrb[0].mxu0
        %v3914 = vadd.f32 0.0, %v3913
        %v3915 = vpop.f32.mrb[0].mxu0
        %v3916 = vadd.f32 0.0, %v3915
        %v3917 = vpop.f32.mrb[0].mxu0
        %v3918 = vadd.f32 0.0, %v3917
        %3919 = vdwg.mxu0
        %3920 = vmatprep.subr.bf16.mxu0 %v3313
        %3921 = vmatpush1.bf16.msra.mxu0 %v3312
        %3922 = vmatprep.subr.bf16.mxu0 %v3317
        %3923 = vmatpush1.bf16.msra.mxu0 %v3316
        %3924 = vmatprep.subr.bf16.mxu0 %v3321
        %3925 = vmatpush1.bf16.msra.mxu0 %v3320
        %3926 = vmatprep.subr.bf16.mxu0 %v3325
        %3927 = vmatpush1.bf16.msra.mxu0 %v3324
        %3928 = vmatprep.subr.bf16.mxu0 %v3329
        %3929 = vmatpush1.bf16.msra.mxu0 %v3328
        %3930 = vmatprep.subr.bf16.mxu0 %v3333
        %3931 = vmatpush1.bf16.msra.mxu0 %v3332
        %3932 = vmatprep.subr.bf16.mxu0 %v3337
        %3933 = vmatpush1.bf16.msra.mxu0 %v3336
        %3934 = vmatprep.subr.bf16.mxu0 %v3341
        %3935 = vmatpush1.bf16.msra.mxu0 %v3340
        %3936 = vmatprep.subr.bf16.mxu0 0
        %3937 = vmatpush1.bf16.msra.mxu0 0
        %3938 = vmatprep.subr.bf16.mxu0 0
        %3939 = vmatpush1.bf16.msra.mxu0 0
        %3940 = vmatprep.subr.bf16.mxu0 0
        %3941 = vmatpush1.bf16.msra.mxu0 0
        %3942 = vmatprep.subr.bf16.mxu0 0
        %3943 = vmatpush1.bf16.msra.mxu0 0
        %3944 = vmatprep.subr.bf16.mxu0 0
        %3945 = vmatpush1.bf16.msra.mxu0 0
        %3946 = vmatprep.subr.bf16.mxu0 0
        %3947 = vmatpush1.bf16.msra.mxu0 0
        %3948 = vmatprep.subr.bf16.mxu0 0
        %3949 = vmatpush1.bf16.msra.mxu0 0
        %3950 = vmatprep.subr.bf16.mxu0 0
        %3951 = vmatpush1.bf16.msra.mxu0 0
        %3952 = vmatprep.mubr.bf16.mxu0 0
        %3953 = vmatmul.mubr.bf16.gmra.mrb[0].mxu0 %v3850
        %v3954 = vpop.f32.mrb[0].mxu0
        %v3955 = vadd.f32 0.0, %v3954
        %v3956 = vpop.f32.mrb[0].mxu0
        %v3957 = vadd.f32 0.0, %v3956
        %v3958 = vpop.f32.mrb[0].mxu0
        %v3959 = vadd.f32 0.0, %v3958
        %v3960 = vpop.f32.mrb[0].mxu0
        %v3961 = vadd.f32 0.0, %v3960
        %3962 = vdwg.mxu0
        %v3963 = vadd.f32 %v3869, %v3912
        %v3964 = vadd.f32 %v3870, %v3914
        %v3965 = vadd.f32 %v3871, %v3955
        %v3966 = vadd.f32 %v3872, %v3957
        %v3967 = vadd.f32 %v3873, %v3916
        %v3968 = vadd.f32 %v3874, %v3918
        %v3969 = vadd.f32 %v3875, %v3959
        %v3970 = vadd.f32 %v3876, %v3961
        %v3971 = vxor.u32 %v3963, 2147483648
        %v3972 = vxor.u32 %v3967, 2147483648
        %v3973 = vmul.f32 %v3971, 1.442695
        %v3974 = vpow.pop %v3973
        %v3975 = vmul.f32 %v3972, 1.442695
        %v3976 = vpow.pop %v3975
        %v3977 = vadd.f32 %v3974, 1.0
        %v3978 = vadd.f32 %v3976, 1.0
        %v3979 = vrcp.pop %v3977
        %v3980 = vmul.f32 1.0, %v3979
        %v3981 = vrcp.pop %v3978
        %v3982 = vmul.f32 1.0, %v3981
        %v3983 = vxor.u32 %v3964, 2147483648
        %v3984 = vxor.u32 %v3968, 2147483648
        %v3985 = vmul.f32 %v3983, 1.442695
        %v3986 = vpow.pop %v3985
        %v3987 = vmul.f32 %v3984, 1.442695
        %v3988 = vpow.pop %v3987
        %v3989 = vadd.f32 %v3986, 1.0
        %v3990 = vadd.f32 %v3988, 1.0
        %v3991 = vrcp.pop %v3989
        %v3992 = vmul.f32 1.0, %v3991
        %v3993 = vrcp.pop %v3990
        %v3994 = vmul.f32 1.0, %v3993
        %v3995 = vtanh.pop %v3965
        %v3996 = vtanh.pop %v3969
        %v3997 = vxor.u32 %v3966, 2147483648
        %v3998 = vxor.u32 %v3970, 2147483648
        %v3999 = vmul.f32 %v3997, 1.442695
        %v4000 = vpow.pop %v3999
        %v4001 = vmul.f32 %v3998, 1.442695
        %v4002 = vpow.pop %v4001
        %v4003 = vadd.f32 %v4000, 1.0
        %v4004 = vadd.f32 %v4002, 1.0
        %v4005 = vrcp.pop %v4003
        %v4006 = vmul.f32 1.0, %v4005
        %v4007 = vrcp.pop %v4004
        %v4008 = vmul.f32 1.0, %v4007
        %v4009 = vmul.f32 %v3992, %v3844
        %v4010 = vmul.f32 %v3994, %v3845
        %v4011 = vmul.f32 %v3980, %v3995
        %v4012 = vmul.f32 %v3982, %v3996
        %v4013 = vadd.f32 %v4009, %v4011
        %v4014 = vadd.f32 %v4010, %v4012
        %v4015 = vtanh.pop %v4013
        %v4016 = vtanh.pop %v4014
        %v4017 = vmul.f32 %v4006, %v4015
        %v4018 = vmul.f32 %v4008, %v4016
        %v4019 = vpack.c.bf16 %v4018, %v4017
        %s4020 = sadd.s32 0, 3
        %v4022 = vunpack.c.l.b16 %v4019
        %v4023 = vunpack.c.h.b16 %v4019
        %v4024 = vpack.c.b16 %v4022, %v4022
        %v4025 = vpack.c.b16 %v4023, %v4023
        %s4028 = smul.u32 %s4020, 2
        %s4029 = smul.addr %s4028, 4
        %s4030 = scalar_lea.vmem %s475, %s4029
        %4031 = vst [vmem:[%s4030] sm:$0xf] %v4024
        %4032 = vst [vmem:[%s4030 + $0x4] sm:$0xf] %v4025
        %s4033 = scalar_lea.vmem [#allocation2], 128
        %v4034 = vld [vmem:[%s4033] sm:$0xff]
        %v4035 = vld [vmem:[%s4033 + $0x8] sm:$0xff]
        %v4036 = vld [vmem:[%s4033 + $0x10] sm:$0xff]
        %v4037 = vld [vmem:[%s4033 + $0x18] sm:$0xff]
        %v4038 = vunpack.c.l.bf16 %v4034
        %v4039 = vunpack.c.l.bf16 %v4035
        %v4040 = vunpack.c.l.bf16 %v4036
        %v4041 = vunpack.c.l.bf16 %v4037
        %v4042 = vunpack.c.h.bf16 %v4034
        %v4043 = vunpack.c.h.bf16 %v4035
        %v4044 = vunpack.c.h.bf16 %v4036
        %v4045 = vunpack.c.h.bf16 %v4037
        %4046 = vmatprep.subr.bf16.mxu0 %v3311
        %4047 = vmatpush1.bf16.msra.mxu0 %v3310
        %4048 = vmatprep.subr.bf16.mxu0 %v3315
        %4049 = vmatpush1.bf16.msra.mxu0 %v3314
        %4050 = vmatprep.subr.bf16.mxu0 %v3319
        %4051 = vmatpush1.bf16.msra.mxu0 %v3318
        %4052 = vmatprep.subr.bf16.mxu0 %v3323
        %4053 = vmatpush1.bf16.msra.mxu0 %v3322
        %4054 = vmatprep.subr.bf16.mxu0 %v3327
        %4055 = vmatpush1.bf16.msra.mxu0 %v3326
        %4056 = vmatprep.subr.bf16.mxu0 %v3331
        %4057 = vmatpush1.bf16.msra.mxu0 %v3330
        %4058 = vmatprep.subr.bf16.mxu0 %v3335
        %4059 = vmatpush1.bf16.msra.mxu0 %v3334
        %4060 = vmatprep.subr.bf16.mxu0 %v3339
        %4061 = vmatpush1.bf16.msra.mxu0 %v3338
        %4062 = vmatprep.subr.bf16.mxu0 0
        %4063 = vmatpush1.bf16.msra.mxu0 0
        %4064 = vmatprep.subr.bf16.mxu0 0
        %4065 = vmatpush1.bf16.msra.mxu0 0
        %4066 = vmatprep.subr.bf16.mxu0 0
        %4067 = vmatpush1.bf16.msra.mxu0 0
        %4068 = vmatprep.subr.bf16.mxu0 0
        %4069 = vmatpush1.bf16.msra.mxu0 0
        %4070 = vmatprep.subr.bf16.mxu0 0
        %4071 = vmatpush1.bf16.msra.mxu0 0
        %4072 = vmatprep.subr.bf16.mxu0 0
        %4073 = vmatpush1.bf16.msra.mxu0 0
        %4074 = vmatprep.subr.bf16.mxu0 0
        %4075 = vmatpush1.bf16.msra.mxu0 0
        %4076 = vmatprep.subr.bf16.mxu0 0
        %4077 = vmatpush1.bf16.msra.mxu0 0
        %4078 = vmatprep.mubr.bf16.mxu0 0
        %4079 = vmatmul.mubr.bf16.gmra.mrb[0].mxu0 %v4019
        %v4080 = vpop.f32.mrb[0].mxu0
        %v4081 = vadd.f32 0.0, %v4080
        %v4082 = vpop.f32.mrb[0].mxu0
        %v4083 = vadd.f32 0.0, %v4082
        %v4084 = vpop.f32.mrb[0].mxu0
        %v4085 = vadd.f32 0.0, %v4084
        %v4086 = vpop.f32.mrb[0].mxu0
        %v4087 = vadd.f32 0.0, %v4086
        %4088 = vdwg.mxu0
        %4089 = vmatprep.subr.bf16.mxu0 %v3313
        %4090 = vmatpush1.bf16.msra.mxu0 %v3312
        %4091 = vmatprep.subr.bf16.mxu0 %v3317
        %4092 = vmatpush1.bf16.msra.mxu0 %v3316
        %4093 = vmatprep.subr.bf16.mxu0 %v3321
        %4094 = vmatpush1.bf16.msra.mxu0 %v3320
        %4095 = vmatprep.subr.bf16.mxu0 %v3325
        %4096 = vmatpush1.bf16.msra.mxu0 %v3324
        %4097 = vmatprep.subr.bf16.mxu0 %v3329
        %4098 = vmatpush1.bf16.msra.mxu0 %v3328
        %4099 = vmatprep.subr.bf16.mxu0 %v3333
        %4100 = vmatpush1.bf16.msra.mxu0 %v3332
        %4101 = vmatprep.subr.bf16.mxu0 %v3337
        %4102 = vmatpush1.bf16.msra.mxu0 %v3336
        %4103 = vmatprep.subr.bf16.mxu0 %v3341
        %4104 = vmatpush1.bf16.msra.mxu0 %v3340
        %4105 = vmatprep.subr.bf16.mxu0 0
        %4106 = vmatpush1.bf16.msra.mxu0 0
        %4107 = vmatprep.subr.bf16.mxu0 0
        %4108 = vmatpush1.bf16.msra.mxu0 0
        %4109 = vmatprep.subr.bf16.mxu0 0
        %4110 = vmatpush1.bf16.msra.mxu0 0
        %4111 = vmatprep.subr.bf16.mxu0 0
        %4112 = vmatpush1.bf16.msra.mxu0 0
        %4113 = vmatprep.subr.bf16.mxu0 0
        %4114 = vmatpush1.bf16.msra.mxu0 0
        %4115 = vmatprep.subr.bf16.mxu0 0
        %4116 = vmatpush1.bf16.msra.mxu0 0
        %4117 = vmatprep.subr.bf16.mxu0 0
        %4118 = vmatpush1.bf16.msra.mxu0 0
        %4119 = vmatprep.subr.bf16.mxu0 0
        %4120 = vmatpush1.bf16.msra.mxu0 0
        %4121 = vmatprep.mubr.bf16.mxu0 0
        %4122 = vmatmul.mubr.bf16.gmra.mrb[0].mxu0 %v4019
        %v4123 = vpop.f32.mrb[0].mxu0
        %v4124 = vadd.f32 0.0, %v4123
        %v4125 = vpop.f32.mrb[0].mxu0
        %v4126 = vadd.f32 0.0, %v4125
        %v4127 = vpop.f32.mrb[0].mxu0
        %v4128 = vadd.f32 0.0, %v4127
        %v4129 = vpop.f32.mrb[0].mxu0
        %v4130 = vadd.f32 0.0, %v4129
        %4131 = vdwg.mxu0
        %v4132 = vadd.f32 %v4038, %v4081
        %v4133 = vadd.f32 %v4039, %v4083
        %v4134 = vadd.f32 %v4040, %v4124
        %v4135 = vadd.f32 %v4041, %v4126
        %v4136 = vadd.f32 %v4042, %v4085
        %v4137 = vadd.f32 %v4043, %v4087
        %v4138 = vadd.f32 %v4044, %v4128
        %v4139 = vadd.f32 %v4045, %v4130
        %v4140 = vxor.u32 %v4132, 2147483648
        %v4141 = vxor.u32 %v4136, 2147483648
        %v4142 = vmul.f32 %v4140, 1.442695
        %v4143 = vpow.pop %v4142
        %v4144 = vmul.f32 %v4141, 1.442695
        %v4145 = vpow.pop %v4144
        %v4146 = vadd.f32 %v4143, 1.0
        %v4147 = vadd.f32 %v4145, 1.0
        %v4148 = vrcp.pop %v4146
        %v4149 = vmul.f32 1.0, %v4148
        %v4150 = vrcp.pop %v4147
        %v4151 = vmul.f32 1.0, %v4150
        %v4152 = vxor.u32 %v4133, 2147483648
        %v4153 = vxor.u32 %v4137, 2147483648
        %v4154 = vmul.f32 %v4152, 1.442695
        %v4155 = vpow.pop %v4154
        %v4156 = vmul.f32 %v4153, 1.442695
        %v4157 = vpow.pop %v4156
        %v4158 = vadd.f32 %v4155, 1.0
        %v4159 = vadd.f32 %v4157, 1.0
        %v4160 = vrcp.pop %v4158
        %v4161 = vmul.f32 1.0, %v4160
        %v4162 = vrcp.pop %v4159
        %v4163 = vmul.f32 1.0, %v4162
        %v4164 = vtanh.pop %v4134
        %v4165 = vtanh.pop %v4138
        %v4166 = vxor.u32 %v4135, 2147483648
        %v4167 = vxor.u32 %v4139, 2147483648
        %v4168 = vmul.f32 %v4166, 1.442695
        %v4169 = vpow.pop %v4168
        %v4170 = vmul.f32 %v4167, 1.442695
        %v4171 = vpow.pop %v4170
        %v4172 = vadd.f32 %v4169, 1.0
        %v4173 = vadd.f32 %v4171, 1.0
        %v4174 = vrcp.pop %v4172
        %v4175 = vmul.f32 1.0, %v4174
        %v4176 = vrcp.pop %v4173
        %v4177 = vmul.f32 1.0, %v4176
        %v4178 = vmul.f32 %v4161, %v4013
        %v4179 = vmul.f32 %v4163, %v4014
        %v4180 = vmul.f32 %v4149, %v4164
        %v4181 = vmul.f32 %v4151, %v4165
        %v4182 = vadd.f32 %v4178, %v4180
        %v4183 = vadd.f32 %v4179, %v4181
        %v4184 = vtanh.pop %v4182
        %v4185 = vtanh.pop %v4183
        %v4186 = vmul.f32 %v4175, %v4184
        %v4187 = vmul.f32 %v4177, %v4185
        %v4188 = vpack.c.bf16 %v4187, %v4186
        %s4189 = sadd.s32 0, 4
        %v4191 = vunpack.c.l.b16 %v4188
        %v4192 = vunpack.c.h.b16 %v4188
        %v4193 = vpack.c.b16 %v4191, %v4191
        %v4194 = vpack.c.b16 %v4192, %v4192
        %s4197 = smul.u32 %s4189, 2
        %s4198 = smul.addr %s4197, 4
        %s4199 = scalar_lea.vmem %s475, %s4198
        %4200 = vst [vmem:[%s4199] sm:$0xf] %v4193
        %4201 = vst [vmem:[%s4199 + $0x4] sm:$0xf] %v4194
        %s4202 = scalar_lea.vmem [#allocation2], 160
        %v4203 = vld [vmem:[%s4202] sm:$0xff]
        %v4204 = vld [vmem:[%s4202 + $0x8] sm:$0xff]
        %v4205 = vld [vmem:[%s4202 + $0x10] sm:$0xff]
        %v4206 = vld [vmem:[%s4202 + $0x18] sm:$0xff]
        %v4207 = vunpack.c.l.bf16 %v4203
        %v4208 = vunpack.c.l.bf16 %v4204
        %v4209 = vunpack.c.l.bf16 %v4205
        %v4210 = vunpack.c.l.bf16 %v4206
        %v4211 = vunpack.c.h.bf16 %v4203
        %v4212 = vunpack.c.h.bf16 %v4204
        %v4213 = vunpack.c.h.bf16 %v4205
        %v4214 = vunpack.c.h.bf16 %v4206
        %4215 = vmatprep.subr.bf16.mxu0 %v3311
        %4216 = vmatpush1.bf16.msra.mxu0 %v3310
        %4217 = vmatprep.subr.bf16.mxu0 %v3315
        %4218 = vmatpush1.bf16.msra.mxu0 %v3314
        %4219 = vmatprep.subr.bf16.mxu0 %v3319
        %4220 = vmatpush1.bf16.msra.mxu0 %v3318
        %4221 = vmatprep.subr.bf16.mxu0 %v3323
        %4222 = vmatpush1.bf16.msra.mxu0 %v3322
        %4223 = vmatprep.subr.bf16.mxu0 %v3327
        %4224 = vmatpush1.bf16.msra.mxu0 %v3326
        %4225 = vmatprep.subr.bf16.mxu0 %v3331
        %4226 = vmatpush1.bf16.msra.mxu0 %v3330
        %4227 = vmatprep.subr.bf16.mxu0 %v3335
        %4228 = vmatpush1.bf16.msra.mxu0 %v3334
        %4229 = vmatprep.subr.bf16.mxu0 %v3339
        %4230 = vmatpush1.bf16.msra.mxu0 %v3338
        %4231 = vmatprep.subr.bf16.mxu0 0
        %4232 = vmatpush1.bf16.msra.mxu0 0
        %4233 = vmatprep.subr.bf16.mxu0 0
        %4234 = vmatpush1.bf16.msra.mxu0 0
        %4235 = vmatprep.subr.bf16.mxu0 0
        %4236 = vmatpush1.bf16.msra.mxu0 0
        %4237 = vmatprep.subr.bf16.mxu0 0
        %4238 = vmatpush1.bf16.msra.mxu0 0
        %4239 = vmatprep.subr.bf16.mxu0 0
        %4240 = vmatpush1.bf16.msra.mxu0 0
        %4241 = vmatprep.subr.bf16.mxu0 0
        %4242 = vmatpush1.bf16.msra.mxu0 0
        %4243 = vmatprep.subr.bf16.mxu0 0
        %4244 = vmatpush1.bf16.msra.mxu0 0
        %4245 = vmatprep.subr.bf16.mxu0 0
        %4246 = vmatpush1.bf16.msra.mxu0 0
        %4247 = vmatprep.mubr.bf16.mxu0 0
        %4248 = vmatmul.mubr.bf16.gmra.mrb[0].mxu0 %v4188
        %v4249 = vpop.f32.mrb[0].mxu0
        %v4250 = vadd.f32 0.0, %v4249
        %v4251 = vpop.f32.mrb[0].mxu0
        %v4252 = vadd.f32 0.0, %v4251
        %v4253 = vpop.f32.mrb[0].mxu0
        %v4254 = vadd.f32 0.0, %v4253
        %v4255 = vpop.f32.mrb[0].mxu0
        %v4256 = vadd.f32 0.0, %v4255
        %4257 = vdwg.mxu0
        %4258 = vmatprep.subr.bf16.mxu0 %v3313
        %4259 = vmatpush1.bf16.msra.mxu0 %v3312
        %4260 = vmatprep.subr.bf16.mxu0 %v3317
        %4261 = vmatpush1.bf16.msra.mxu0 %v3316
        %4262 = vmatprep.subr.bf16.mxu0 %v3321
        %4263 = vmatpush1.bf16.msra.mxu0 %v3320
        %4264 = vmatprep.subr.bf16.mxu0 %v3325
        %4265 = vmatpush1.bf16.msra.mxu0 %v3324
        %4266 = vmatprep.subr.bf16.mxu0 %v3329
        %4267 = vmatpush1.bf16.msra.mxu0 %v3328
        %4268 = vmatprep.subr.bf16.mxu0 %v3333
        %4269 = vmatpush1.bf16.msra.mxu0 %v3332
        %4270 = vmatprep.subr.bf16.mxu0 %v3337
        %4271 = vmatpush1.bf16.msra.mxu0 %v3336
        %4272 = vmatprep.subr.bf16.mxu0 %v3341
        %4273 = vmatpush1.bf16.msra.mxu0 %v3340
        %4274 = vmatprep.subr.bf16.mxu0 0
        %4275 = vmatpush1.bf16.msra.mxu0 0
        %4276 = vmatprep.subr.bf16.mxu0 0
        %4277 = vmatpush1.bf16.msra.mxu0 0
        %4278 = vmatprep.subr.bf16.mxu0 0
        %4279 = vmatpush1.bf16.msra.mxu0 0
        %4280 = vmatprep.subr.bf16.mxu0 0
        %4281 = vmatpush1.bf16.msra.mxu0 0
        %4282 = vmatprep.subr.bf16.mxu0 0
        %4283 = vmatpush1.bf16.msra.mxu0 0
        %4284 = vmatprep.subr.bf16.mxu0 0
        %4285 = vmatpush1.bf16.msra.mxu0 0
        %4286 = vmatprep.subr.bf16.mxu0 0
        %4287 = vmatpush1.bf16.msra.mxu0 0
        %4288 = vmatprep.subr.bf16.mxu0 0
        %4289 = vmatpush1.bf16.msra.mxu0 0
        %4290 = vmatprep.mubr.bf16.mxu0 0
        %4291 = vmatmul.mubr.bf16.gmra.mrb[0].mxu0 %v4188
        %v4292 = vpop.f32.mrb[0].mxu0
        %v4293 = vadd.f32 0.0, %v4292
        %v4294 = vpop.f32.mrb[0].mxu0
        %v4295 = vadd.f32 0.0, %v4294
        %v4296 = vpop.f32.mrb[0].mxu0
        %v4297 = vadd.f32 0.0, %v4296
        %v4298 = vpop.f32.mrb[0].mxu0
        %v4299 = vadd.f32 0.0, %v4298
        %4300 = vdwg.mxu0
        %v4301 = vadd.f32 %v4207, %v4250
        %v4302 = vadd.f32 %v4208, %v4252
        %v4303 = vadd.f32 %v4209, %v4293
        %v4304 = vadd.f32 %v4210, %v4295
        %v4305 = vadd.f32 %v4211, %v4254
        %v4306 = vadd.f32 %v4212, %v4256
        %v4307 = vadd.f32 %v4213, %v4297
        %v4308 = vadd.f32 %v4214, %v4299
        %v4309 = vxor.u32 %v4301, 2147483648
        %v4310 = vxor.u32 %v4305, 2147483648
        %v4311 = vmul.f32 %v4309, 1.442695
        %v4312 = vpow.pop %v4311
        %v4313 = vmul.f32 %v4310, 1.442695
        %v4314 = vpow.pop %v4313
        %v4315 = vadd.f32 %v4312, 1.0
        %v4316 = vadd.f32 %v4314, 1.0
        %v4317 = vrcp.pop %v4315
        %v4318 = vmul.f32 1.0, %v4317
        %v4319 = vrcp.pop %v4316
        %v4320 = vmul.f32 1.0, %v4319
        %v4321 = vxor.u32 %v4302, 2147483648
        %v4322 = vxor.u32 %v4306, 2147483648
        %v4323 = vmul.f32 %v4321, 1.442695
        %v4324 = vpow.pop %v4323
        %v4325 = vmul.f32 %v4322, 1.442695
        %v4326 = vpow.pop %v4325
        %v4327 = vadd.f32 %v4324, 1.0
        %v4328 = vadd.f32 %v4326, 1.0
        %v4329 = vrcp.pop %v4327
        %v4330 = vmul.f32 1.0, %v4329
        %v4331 = vrcp.pop %v4328
        %v4332 = vmul.f32 1.0, %v4331
        %v4333 = vtanh.pop %v4303
        %v4334 = vtanh.pop %v4307
        %v4335 = vxor.u32 %v4304, 2147483648
        %v4336 = vxor.u32 %v4308, 2147483648
        %v4337 = vmul.f32 %v4335, 1.442695
        %v4338 = vpow.pop %v4337
        %v4339 = vmul.f32 %v4336, 1.442695
        %v4340 = vpow.pop %v4339
        %v4341 = vadd.f32 %v4338, 1.0
        %v4342 = vadd.f32 %v4340, 1.0
        %v4343 = vrcp.pop %v4341
        %v4344 = vmul.f32 1.0, %v4343
        %v4345 = vrcp.pop %v4342
        %v4346 = vmul.f32 1.0, %v4345
        %v4347 = vmul.f32 %v4330, %v4182
        %v4348 = vmul.f32 %v4332, %v4183
        %v4349 = vmul.f32 %v4318, %v4333
        %v4350 = vmul.f32 %v4320, %v4334
        %v4351 = vadd.f32 %v4347, %v4349
        %v4352 = vadd.f32 %v4348, %v4350
        %v4353 = vtanh.pop %v4351
        %v4354 = vtanh.pop %v4352
        %v4355 = vmul.f32 %v4344, %v4353
        %v4356 = vmul.f32 %v4346, %v4354
        %v4357 = vpack.c.bf16 %v4356, %v4355
        %s4358 = sadd.s32 0, 5
        %v4360 = vunpack.c.l.b16 %v4357
        %v4361 = vunpack.c.h.b16 %v4357
        %v4362 = vpack.c.b16 %v4360, %v4360
        %v4363 = vpack.c.b16 %v4361, %v4361
        %s4366 = smul.u32 %s4358, 2
        %s4367 = smul.addr %s4366, 4
        %s4368 = scalar_lea.vmem %s475, %s4367
        %4369 = vst [vmem:[%s4368] sm:$0xf] %v4362
        %4370 = vst [vmem:[%s4368 + $0x4] sm:$0xf] %v4363
        %s4371 = scalar_lea.vmem [#allocation2], 192
        %v4372 = vld [vmem:[%s4371] sm:$0xff]
        %v4373 = vld [vmem:[%s4371 + $0x8] sm:$0xff]
        %v4374 = vld [vmem:[%s4371 + $0x10] sm:$0xff]
        %v4375 = vld [vmem:[%s4371 + $0x18] sm:$0xff]
        %v4376 = vunpack.c.l.bf16 %v4372
        %v4377 = vunpack.c.l.bf16 %v4373
        %v4378 = vunpack.c.l.bf16 %v4374
        %v4379 = vunpack.c.l.bf16 %v4375
        %v4380 = vunpack.c.h.bf16 %v4372
        %v4381 = vunpack.c.h.bf16 %v4373
        %v4382 = vunpack.c.h.bf16 %v4374
        %v4383 = vunpack.c.h.bf16 %v4375
        %4384 = vmatprep.subr.bf16.mxu0 %v3311
        %4385 = vmatpush1.bf16.msra.mxu0 %v3310
        %4386 = vmatprep.subr.bf16.mxu0 %v3315
        %4387 = vmatpush1.bf16.msra.mxu0 %v3314
        %4388 = vmatprep.subr.bf16.mxu0 %v3319
        %4389 = vmatpush1.bf16.msra.mxu0 %v3318
        %4390 = vmatprep.subr.bf16.mxu0 %v3323
        %4391 = vmatpush1.bf16.msra.mxu0 %v3322
        %4392 = vmatprep.subr.bf16.mxu0 %v3327
        %4393 = vmatpush1.bf16.msra.mxu0 %v3326
        %4394 = vmatprep.subr.bf16.mxu0 %v3331
        %4395 = vmatpush1.bf16.msra.mxu0 %v3330
        %4396 = vmatprep.subr.bf16.mxu0 %v3335
        %4397 = vmatpush1.bf16.msra.mxu0 %v3334
        %4398 = vmatprep.subr.bf16.mxu0 %v3339
        %4399 = vmatpush1.bf16.msra.mxu0 %v3338
        %4400 = vmatprep.subr.bf16.mxu0 0
        %4401 = vmatpush1.bf16.msra.mxu0 0
        %4402 = vmatprep.subr.bf16.mxu0 0
        %4403 = vmatpush1.bf16.msra.mxu0 0
        %4404 = vmatprep.subr.bf16.mxu0 0
        %4405 = vmatpush1.bf16.msra.mxu0 0
        %4406 = vmatprep.subr.bf16.mxu0 0
        %4407 = vmatpush1.bf16.msra.mxu0 0
        %4408 = vmatprep.subr.bf16.mxu0 0
        %4409 = vmatpush1.bf16.msra.mxu0 0
        %4410 = vmatprep.subr.bf16.mxu0 0
        %4411 = vmatpush1.bf16.msra.mxu0 0
        %4412 = vmatprep.subr.bf16.mxu0 0
        %4413 = vmatpush1.bf16.msra.mxu0 0
        %4414 = vmatprep.subr.bf16.mxu0 0
        %4415 = vmatpush1.bf16.msra.mxu0 0
        %4416 = vmatprep.mubr.bf16.mxu0 0
        %4417 = vmatmul.mubr.bf16.gmra.mrb[0].mxu0 %v4357
        %v4418 = vpop.f32.mrb[0].mxu0
        %v4419 = vadd.f32 0.0, %v4418
        %v4420 = vpop.f32.mrb[0].mxu0
        %v4421 = vadd.f32 0.0, %v4420
        %v4422 = vpop.f32.mrb[0].mxu0
        %v4423 = vadd.f32 0.0, %v4422
        %v4424 = vpop.f32.mrb[0].mxu0
        %v4425 = vadd.f32 0.0, %v4424
        %4426 = vdwg.mxu0
        %4427 = vmatprep.subr.bf16.mxu0 %v3313
        %4428 = vmatpush1.bf16.msra.mxu0 %v3312
        %4429 = vmatprep.subr.bf16.mxu0 %v3317
        %4430 = vmatpush1.bf16.msra.mxu0 %v3316
        %4431 = vmatprep.subr.bf16.mxu0 %v3321
        %4432 = vmatpush1.bf16.msra.mxu0 %v3320
        %4433 = vmatprep.subr.bf16.mxu0 %v3325
        %4434 = vmatpush1.bf16.msra.mxu0 %v3324
        %4435 = vmatprep.subr.bf16.mxu0 %v3329
        %4436 = vmatpush1.bf16.msra.mxu0 %v3328
        %4437 = vmatprep.subr.bf16.mxu0 %v3333
        %4438 = vmatpush1.bf16.msra.mxu0 %v3332
        %4439 = vmatprep.subr.bf16.mxu0 %v3337
        %4440 = vmatpush1.bf16.msra.mxu0 %v3336
        %4441 = vmatprep.subr.bf16.mxu0 %v3341
        %4442 = vmatpush1.bf16.msra.mxu0 %v3340
        %4443 = vmatprep.subr.bf16.mxu0 0
        %4444 = vmatpush1.bf16.msra.mxu0 0
        %4445 = vmatprep.subr.bf16.mxu0 0
        %4446 = vmatpush1.bf16.msra.mxu0 0
        %4447 = vmatprep.subr.bf16.mxu0 0
        %4448 = vmatpush1.bf16.msra.mxu0 0
        %4449 = vmatprep.subr.bf16.mxu0 0
        %4450 = vmatpush1.bf16.msra.mxu0 0
        %4451 = vmatprep.subr.bf16.mxu0 0
        %4452 = vmatpush1.bf16.msra.mxu0 0
        %4453 = vmatprep.subr.bf16.mxu0 0
        %4454 = vmatpush1.bf16.msra.mxu0 0
        %4455 = vmatprep.subr.bf16.mxu0 0
        %4456 = vmatpush1.bf16.msra.mxu0 0
        %4457 = vmatprep.subr.bf16.mxu0 0
        %4458 = vmatpush1.bf16.msra.mxu0 0
        %4459 = vmatprep.mubr.bf16.mxu0 0
        %4460 = vmatmul.mubr.bf16.gmra.mrb[0].mxu0 %v4357
        %v4461 = vpop.f32.mrb[0].mxu0
        %v4462 = vadd.f32 0.0, %v4461
        %v4463 = vpop.f32.mrb[0].mxu0
        %v4464 = vadd.f32 0.0, %v4463
        %v4465 = vpop.f32.mrb[0].mxu0
        %v4466 = vadd.f32 0.0, %v4465
        %v4467 = vpop.f32.mrb[0].mxu0
        %v4468 = vadd.f32 0.0, %v4467
        %4469 = vdwg.mxu0
        %v4470 = vadd.f32 %v4376, %v4419
        %v4471 = vadd.f32 %v4377, %v4421
        %v4472 = vadd.f32 %v4378, %v4462
        %v4473 = vadd.f32 %v4379, %v4464
        %v4474 = vadd.f32 %v4380, %v4423
        %v4475 = vadd.f32 %v4381, %v4425
        %v4476 = vadd.f32 %v4382, %v4466
        %v4477 = vadd.f32 %v4383, %v4468
        %v4478 = vxor.u32 %v4470, 2147483648
        %v4479 = vxor.u32 %v4474, 2147483648
        %v4480 = vmul.f32 %v4478, 1.442695
        %v4481 = vpow.pop %v4480
        %v4482 = vmul.f32 %v4479, 1.442695
        %v4483 = vpow.pop %v4482
        %v4484 = vadd.f32 %v4481, 1.0
        %v4485 = vadd.f32 %v4483, 1.0
        %v4486 = vrcp.pop %v4484
        %v4487 = vmul.f32 1.0, %v4486
        %v4488 = vrcp.pop %v4485
        %v4489 = vmul.f32 1.0, %v4488
        %v4490 = vxor.u32 %v4471, 2147483648
        %v4491 = vxor.u32 %v4475, 2147483648
        %v4492 = vmul.f32 %v4490, 1.442695
        %v4493 = vpow.pop %v4492
        %v4494 = vmul.f32 %v4491, 1.442695
        %v4495 = vpow.pop %v4494
        %v4496 = vadd.f32 %v4493, 1.0
        %v4497 = vadd.f32 %v4495, 1.0
        %v4498 = vrcp.pop %v4496
        %v4499 = vmul.f32 1.0, %v4498
        %v4500 = vrcp.pop %v4497
        %v4501 = vmul.f32 1.0, %v4500
        %v4502 = vtanh.pop %v4472
        %v4503 = vtanh.pop %v4476
        %v4504 = vxor.u32 %v4473, 2147483648
        %v4505 = vxor.u32 %v4477, 2147483648
        %v4506 = vmul.f32 %v4504, 1.442695
        %v4507 = vpow.pop %v4506
        %v4508 = vmul.f32 %v4505, 1.442695
        %v4509 = vpow.pop %v4508
        %v4510 = vadd.f32 %v4507, 1.0
        %v4511 = vadd.f32 %v4509, 1.0
        %v4512 = vrcp.pop %v4510
        %v4513 = vmul.f32 1.0, %v4512
        %v4514 = vrcp.pop %v4511
        %v4515 = vmul.f32 1.0, %v4514
        %v4516 = vmul.f32 %v4499, %v4351
        %v4517 = vmul.f32 %v4501, %v4352
        %v4518 = vmul.f32 %v4487, %v4502
        %v4519 = vmul.f32 %v4489, %v4503
        %v4520 = vadd.f32 %v4516, %v4518
        %v4521 = vadd.f32 %v4517, %v4519
        %v4522 = vtanh.pop %v4520
        %v4523 = vtanh.pop %v4521
        %v4524 = vmul.f32 %v4513, %v4522
        %v4525 = vmul.f32 %v4515, %v4523
        %v4526 = vpack.c.bf16 %v4525, %v4524
        %s4527 = sadd.s32 0, 6
        %v4529 = vunpack.c.l.b16 %v4526
        %v4530 = vunpack.c.h.b16 %v4526
        %v4531 = vpack.c.b16 %v4529, %v4529
        %v4532 = vpack.c.b16 %v4530, %v4530
        %s4535 = smul.u32 %s4527, 2
        %s4536 = smul.addr %s4535, 4
        %s4537 = scalar_lea.vmem %s475, %s4536
        %4538 = vst [vmem:[%s4537] sm:$0xf] %v4531
        %4539 = vst [vmem:[%s4537 + $0x4] sm:$0xf] %v4532
        %s4540 = scalar_lea.vmem [#allocation2], 224
        %v4541 = vld [vmem:[%s4540] sm:$0xff]
        %v4542 = vld [vmem:[%s4540 + $0x8] sm:$0xff]
        %v4543 = vld [vmem:[%s4540 + $0x10] sm:$0xff]
        %v4544 = vld [vmem:[%s4540 + $0x18] sm:$0xff]
        %v4545 = vunpack.c.l.bf16 %v4541
        %v4546 = vunpack.c.l.bf16 %v4542
        %v4547 = vunpack.c.l.bf16 %v4543
        %v4548 = vunpack.c.l.bf16 %v4544
        %v4549 = vunpack.c.h.bf16 %v4541
        %v4550 = vunpack.c.h.bf16 %v4542
        %v4551 = vunpack.c.h.bf16 %v4543
        %v4552 = vunpack.c.h.bf16 %v4544
        %4553 = vmatprep.subr.bf16.mxu0 %v3311
        %4554 = vmatpush1.bf16.msra.mxu0 %v3310
        %4555 = vmatprep.subr.bf16.mxu0 %v3315
        %4556 = vmatpush1.bf16.msra.mxu0 %v3314
        %4557 = vmatprep.subr.bf16.mxu0 %v3319
        %4558 = vmatpush1.bf16.msra.mxu0 %v3318
        %4559 = vmatprep.subr.bf16.mxu0 %v3323
        %4560 = vmatpush1.bf16.msra.mxu0 %v3322
        %4561 = vmatprep.subr.bf16.mxu0 %v3327
        %4562 = vmatpush1.bf16.msra.mxu0 %v3326
        %4563 = vmatprep.subr.bf16.mxu0 %v3331
        %4564 = vmatpush1.bf16.msra.mxu0 %v3330
        %4565 = vmatprep.subr.bf16.mxu0 %v3335
        %4566 = vmatpush1.bf16.msra.mxu0 %v3334
        %4567 = vmatprep.subr.bf16.mxu0 %v3339
        %4568 = vmatpush1.bf16.msra.mxu0 %v3338
        %4569 = vmatprep.subr.bf16.mxu0 0
        %4570 = vmatpush1.bf16.msra.mxu0 0
        %4571 = vmatprep.subr.bf16.mxu0 0
        %4572 = vmatpush1.bf16.msra.mxu0 0
        %4573 = vmatprep.subr.bf16.mxu0 0
        %4574 = vmatpush1.bf16.msra.mxu0 0
        %4575 = vmatprep.subr.bf16.mxu0 0
        %4576 = vmatpush1.bf16.msra.mxu0 0
        %4577 = vmatprep.subr.bf16.mxu0 0
        %4578 = vmatpush1.bf16.msra.mxu0 0
        %4579 = vmatprep.subr.bf16.mxu0 0
        %4580 = vmatpush1.bf16.msra.mxu0 0
        %4581 = vmatprep.subr.bf16.mxu0 0
        %4582 = vmatpush1.bf16.msra.mxu0 0
        %4583 = vmatprep.subr.bf16.mxu0 0
        %4584 = vmatpush1.bf16.msra.mxu0 0
        %4585 = vmatprep.mubr.bf16.mxu0 0
        %4586 = vmatmul.mubr.bf16.gmra.mrb[0].mxu0 %v4526
        %v4587 = vpop.f32.mrb[0].mxu0
        %v4588 = vadd.f32 0.0, %v4587
        %v4589 = vpop.f32.mrb[0].mxu0
        %v4590 = vadd.f32 0.0, %v4589
        %v4591 = vpop.f32.mrb[0].mxu0
        %v4592 = vadd.f32 0.0, %v4591
        %v4593 = vpop.f32.mrb[0].mxu0
        %v4594 = vadd.f32 0.0, %v4593
        %4595 = vdwg.mxu0
        %4596 = vmatprep.subr.bf16.mxu0 %v3313
        %4597 = vmatpush1.bf16.msra.mxu0 %v3312
        %4598 = vmatprep.subr.bf16.mxu0 %v3317
        %4599 = vmatpush1.bf16.msra.mxu0 %v3316
        %4600 = vmatprep.subr.bf16.mxu0 %v3321
        %4601 = vmatpush1.bf16.msra.mxu0 %v3320
        %4602 = vmatprep.subr.bf16.mxu0 %v3325
        %4603 = vmatpush1.bf16.msra.mxu0 %v3324
        %4604 = vmatprep.subr.bf16.mxu0 %v3329
        %4605 = vmatpush1.bf16.msra.mxu0 %v3328
        %4606 = vmatprep.subr.bf16.mxu0 %v3333
        %4607 = vmatpush1.bf16.msra.mxu0 %v3332
        %4608 = vmatprep.subr.bf16.mxu0 %v3337
        %4609 = vmatpush1.bf16.msra.mxu0 %v3336
        %4610 = vmatprep.subr.bf16.mxu0 %v3341
        %4611 = vmatpush1.bf16.msra.mxu0 %v3340
        %4612 = vmatprep.subr.bf16.mxu0 0
        %4613 = vmatpush1.bf16.msra.mxu0 0
        %4614 = vmatprep.subr.bf16.mxu0 0
        %4615 = vmatpush1.bf16.msra.mxu0 0
        %4616 = vmatprep.subr.bf16.mxu0 0
        %4617 = vmatpush1.bf16.msra.mxu0 0
        %4618 = vmatprep.subr.bf16.mxu0 0
        %4619 = vmatpush1.bf16.msra.mxu0 0
        %4620 = vmatprep.subr.bf16.mxu0 0
        %4621 = vmatpush1.bf16.msra.mxu0 0
        %4622 = vmatprep.subr.bf16.mxu0 0
        %4623 = vmatpush1.bf16.msra.mxu0 0
        %4624 = vmatprep.subr.bf16.mxu0 0
        %4625 = vmatpush1.bf16.msra.mxu0 0
        %4626 = vmatprep.subr.bf16.mxu0 0
        %4627 = vmatpush1.bf16.msra.mxu0 0
        %4628 = vmatprep.mubr.bf16.mxu0 0
        %4629 = vmatmul.mubr.bf16.gmra.mrb[0].mxu0 %v4526
        %v4630 = vpop.f32.mrb[0].mxu0
        %v4631 = vadd.f32 0.0, %v4630
        %v4632 = vpop.f32.mrb[0].mxu0
        %v4633 = vadd.f32 0.0, %v4632
        %v4634 = vpop.f32.mrb[0].mxu0
        %v4635 = vadd.f32 0.0, %v4634
        %v4636 = vpop.f32.mrb[0].mxu0
        %v4637 = vadd.f32 0.0, %v4636
        %4638 = vdwg.mxu0
        %v4639 = vadd.f32 %v4545, %v4588
        %v4640 = vadd.f32 %v4546, %v4590
        %v4641 = vadd.f32 %v4547, %v4631
        %v4642 = vadd.f32 %v4548, %v4633
        %v4643 = vadd.f32 %v4549, %v4592
        %v4644 = vadd.f32 %v4550, %v4594
        %v4645 = vadd.f32 %v4551, %v4635
        %v4646 = vadd.f32 %v4552, %v4637
        %v4647 = vxor.u32 %v4639, 2147483648
        %v4648 = vxor.u32 %v4643, 2147483648
        %v4649 = vmul.f32 %v4647, 1.442695
        %v4650 = vpow.pop %v4649
        %v4651 = vmul.f32 %v4648, 1.442695
        %v4652 = vpow.pop %v4651
        %v4653 = vadd.f32 %v4650, 1.0
        %v4654 = vadd.f32 %v4652, 1.0
        %v4655 = vrcp.pop %v4653
        %v4656 = vmul.f32 1.0, %v4655
        %v4657 = vrcp.pop %v4654
        %v4658 = vmul.f32 1.0, %v4657
        %v4659 = vxor.u32 %v4640, 2147483648
        %v4660 = vxor.u32 %v4644, 2147483648
        %v4661 = vmul.f32 %v4659, 1.442695
        %v4662 = vpow.pop %v4661
        %v4663 = vmul.f32 %v4660, 1.442695
        %v4664 = vpow.pop %v4663
        %v4665 = vadd.f32 %v4662, 1.0
        %v4666 = vadd.f32 %v4664, 1.0
        %v4667 = vrcp.pop %v4665
        %v4668 = vmul.f32 1.0, %v4667
        %v4669 = vrcp.pop %v4666
        %v4670 = vmul.f32 1.0, %v4669
        %v4671 = vtanh.pop %v4641
        %v4672 = vtanh.pop %v4645
        %v4673 = vxor.u32 %v4642, 2147483648
        %v4674 = vxor.u32 %v4646, 2147483648
        %v4675 = vmul.f32 %v4673, 1.442695
        %v4676 = vpow.pop %v4675
        %v4677 = vmul.f32 %v4674, 1.442695
        %v4678 = vpow.pop %v4677
        %v4679 = vadd.f32 %v4676, 1.0
        %v4680 = vadd.f32 %v4678, 1.0
        %v4681 = vrcp.pop %v4679
        %v4682 = vmul.f32 1.0, %v4681
        %v4683 = vrcp.pop %v4680
        %v4684 = vmul.f32 1.0, %v4683
        %v4685 = vmul.f32 %v4668, %v4520
        %v4686 = vmul.f32 %v4670, %v4521
        %v4687 = vmul.f32 %v4656, %v4671
        %v4688 = vmul.f32 %v4658, %v4672
        %v4689 = vadd.f32 %v4685, %v4687
        %v4690 = vadd.f32 %v4686, %v4688
        %v4691 = vtanh.pop %v4689
        %v4692 = vtanh.pop %v4690
        %v4693 = vmul.f32 %v4682, %v4691
        %v4694 = vmul.f32 %v4684, %v4692
        %v4695 = vpack.c.bf16 %v4694, %v4693
        %s4696 = sadd.s32 0, 7
        %v4698 = vunpack.c.l.b16 %v4695
        %v4699 = vunpack.c.h.b16 %v4695
        %v4700 = vpack.c.b16 %v4698, %v4698
        %v4701 = vpack.c.b16 %v4699, %v4699
        %s4704 = smul.u32 %s4696, 2
        %s4705 = smul.addr %s4704, 4
        %s4706 = scalar_lea.vmem %s475, %s4705
        %4707 = vst [vmem:[%s4706] sm:$0xf] %v4700
        %4708 = vst [vmem:[%s4706 + $0x4] sm:$0xf] %v4701
        %4709 = vst [vmem:[%s485] sm:$0xff] %v4693
        %4710 = vst [vmem:[%s485 + $0x8] sm:$0xff] %v4694
        %4711 = vst [vmem:[%s495] sm:$0xff] %v4689
        %4712 = vst [vmem:[%s495 + $0x8] sm:$0xff] %v4690
      $region52: #{mamba_model_forward.2} parent=43 // pred_fallthru
        _
      %s4713 = smul.u32 2, %s24
      %p4714 = scmp.lt.s32.totalorder %s4713, 1
      %s4715 = scalar_select %p4714, %s4713, 1
      %s4716 = smul.addr %s4715, 4
      %s4717 = scalar_lea.vmem %s6, %s4716
      %s4718 = smul.u32 2, %s24
      %p4719 = scmp.lt.s32.totalorder %s25, 1
      %s4720 = scalar_select %p4719, %s25, 1
      %p4721 = scmp.lt.s32.totalorder %s4718, 1
      %s4722 = scalar_select %p4721, %s4718, 1
      %s4723 = smul.addr %s4720, 2
      %s4724 = sadd.s32 %s4722, %s4723
      %s4725 = smul.addr %s4724, 8
      %s4726 = scalar_lea.vmem %s7, %s4725
      %s4727 = smul.u32 2, %s24
      %p4728 = scmp.lt.s32.totalorder %s25, 1
      %s4729 = scalar_select %p4728, %s25, 1
      %p4730 = scmp.lt.s32.totalorder %s4727, 1
      %s4731 = scalar_select %p4730, %s4727, 1
      %s4732 = smul.addr %s4729, 2
      %s4733 = sadd.s32 %s4731, %s4732
      %s4734 = smul.addr %s4733, 8
      %s4735 = scalar_lea.vmem %s8, %s4734
      // Predicated region
      $region53: #{mamba_model_forward.2} parent=43 // pred_check
        %p4736 = pneg %p210
      $region54: #{mamba_model_forward.2} parent=43 // pred_check_branch
        %4738 = sbr.rel (%p4736) target = $region56
      $region55: #{mamba_model_forward.2} parent=43 // pred_region
        %s4739 = smul.u32 2, %s24
      $region56: #{mamba_model_forward.2} parent=43 // pred_fallthru
        _
      // Predicated region
      $region57: #{mamba_model_forward.2} parent=43 // pred_check
        %p4740 = pneg %p238
      $region58: #{mamba_model_forward.2} parent=43 // pred_check_branch
        %4742 = sbr.rel (%p4740) target = $region60
      $region59: #{mamba_model_forward.2} parent=43 // pred_region
        %s4743 = smul.u32 2, %s24
      $region60: #{mamba_model_forward.2} parent=43 // pred_fallthru
        _
      // Predicated region
      $region61: #{mamba_model_forward.2} parent=43 // pred_check
        %p4744 = pneg %p266
      $region62: #{mamba_model_forward.2} parent=43 // pred_check_branch
        %4746 = sbr.rel (%p4744) target = $region64
      $region63: #{mamba_model_forward.2} parent=43 // pred_region
        %s4747 = smul.u32 2, %s24
      $region64: #{mamba_model_forward.2} parent=43 // pred_fallthru
        _
      // Predicated region
      $region65: #{mamba_model_forward.2} parent=43 // pred_check
        %p4748 = pneg %p210
      $region66: #{mamba_model_forward.2} parent=43 // pred_check_branch
        %4750 = sbr.rel (%p4748) target = $region68
      $region67: #{mamba_model_forward.2} parent=43 // pred_region
        %s4751 = smul.u32 2, %s24
        %p4752 = scmp.lt.s32.totalorder %s4751, 1
        %s4753 = scalar_select %p4752, %s4751, 1
        %s4754 = smul.addr %s4753, 4
        %s4755 = scalar_lea.vmem %s6, %s4754
      $region68: #{mamba_model_forward.2} parent=43 // pred_fallthru
        _
    $region44: #{mamba_model_forward.2} parent=5 // pred_fallthru
      _
    %p4756 = scmp.le.s32.totalorder 2, %s15
    // Predicated region
    $region69: #{mamba_model_forward.2} parent=5 // pred_check
      %p4757 = pneg %p4756
    $region70: #{mamba_model_forward.2} parent=5 // pred_check_branch
      %4759 = sbr.rel (%p4757) target = $region72
    $region71: #{mamba_model_forward.2} parent=5 // pred_region
      %s4760 = ssub.s32 %s15, 2
      // Predicated region
      $region73: #{mamba_model_forward.2} parent=71 // pred_check
        %p4761 = pneg %p244
      $region74: #{mamba_model_forward.2} parent=71 // pred_check_branch
        %4763 = sbr.rel (%p4761) target = $region76
      $region75: #{mamba_model_forward.2} parent=71 // pred_region
        %s4764 = smul.u32 2, %s26
        %p4765 = scmp.lt.s32.totalorder %s27, 1
        %s4766 = scalar_select %p4765, %s27, 1
        %p4767 = scmp.lt.s32.totalorder %s4764, 1
        %s4768 = scalar_select %p4767, %s4764, 1
        %s4769 = smul.addr %s4766, 2
        %s4770 = sadd.s32 %s4768, %s4769
        %s4771 = smul.addr %s4770, 8
        %s4772 = scalar_lea.vmem %s7, %s4771
      $region76: #{mamba_model_forward.2} parent=71 // pred_fallthru
        _
      // Predicated region
      $region77: #{mamba_model_forward.2} parent=71 // pred_check
        %p4773 = pneg %p272
      $region78: #{mamba_model_forward.2} parent=71 // pred_check_branch
        %4775 = sbr.rel (%p4773) target = $region80
      $region79: #{mamba_model_forward.2} parent=71 // pred_region
        %s4776 = smul.u32 2, %s26
        %p4777 = scmp.lt.s32.totalorder %s27, 1
        %s4778 = scalar_select %p4777, %s27, 1
        %p4779 = scmp.lt.s32.totalorder %s4776, 1
        %s4780 = scalar_select %p4779, %s4776, 1
        %s4781 = smul.addr %s4778, 2
        %s4782 = sadd.s32 %s4780, %s4781
        %s4783 = smul.addr %s4782, 8
        %s4784 = scalar_lea.vmem %s8, %s4783
      $region80: #{mamba_model_forward.2} parent=71 // pred_fallthru
        _
    $region72: #{mamba_model_forward.2} parent=5 // pred_fallthru
      _
  $region6: #{mamba_model_forward.2} parent=0 // loop_footer
    %s19 = sadd.s32 1, %s15
  $region7: #{mamba_model_forward.2} parent=0 // loop_footer_branch
    %14 = sbr.rel target = $region3
  $region8: #{mamba_model_forward.2} parent=0 // loop_exit
    _

</llo_original>
